<compile_context>
chip_gen: v5e
topology: v5e:2x2
jax: 0.10.0
libtpu: 0.0.40
codegen_flags: <defaults>
</compile_context>

<pallas_src>
import functools

import jax
import jax.numpy as jnp
from jax.experimental import pallas as pl
from jax.experimental.pallas import tpu as pltpu


_SUB = 16  # row-tile granularity: bf16 sublane packing (also satisfies the 8-row rule)


def _round_up(x, m):
    return (x + m - 1) // m * m


def _pick_tm(m, bytes_per_row, *, budget=6 << 20, cap=1024):
    """Row-tile size: multiple of 16, VMEM-budgeted, and >= 2 grid steps when
    there is enough work (keeps both v7x TensorCores busy)."""
    m16 = _round_up(max(m, _SUB), _SUB)
    tm_budget = max(_SUB, (budget // max(bytes_per_row, 1)) // _SUB * _SUB)
    tm = min(m16, cap, tm_budget)
    if tm >= m16 and m16 >= 2 * _SUB:
        tm = _round_up(m16 // 2, _SUB)      # split even a fitting tile in two
    mp = _round_up(m16, tm)
    return tm, mp


def _vmem_limit(block_bytes):
    """Scoped-VMEM limit from actual block bytes (double-buffered) + headroom,
    clipped so it stays within every generation's physical VMEM."""
    return int(min(max(4 * block_bytes + (4 << 20), 32 << 20), 48 << 20))


# ----------------------------- Pallas kernels ------------------------------

def _conv_pool_kernel(cols_ref, w_ref, b_ref, o_ref):
    """Fused conv (single big matmul over the 4 pool-window shifts) + bias +
    relu + 2x2 maxpool.

    cols: (4, TM, K) bf16  -- axis 0 = position inside the 2x2 pool window
    w:    (K, N)  bf16,  b: (1, N) f32  ->  o: (TM, N) bf16
    """
    d, tm, k = cols_ref.shape
    n = w_ref.shape[1]
    cols = cols_ref[...].reshape(d * tm, k)          # layout-free: tm % 16 == 0
    r = jnp.dot(cols, w_ref[...], preferred_element_type=jnp.float32)
    r = r.reshape(d, tm, n)                          # layout-free split
    m = jnp.maximum(jnp.maximum(r[0], r[1]), jnp.maximum(r[2], r[3]))
    o_ref[...] = jnp.maximum(m + b_ref[...], 0.0).astype(o_ref.dtype)


def _mlp_head_kernel(x_ref, w1_ref, b1_ref, w2_ref, b2_ref, o_ref, *, valid_n):
    """Fused fc1 + relu + fc2 + bias + log_softmax (masked to valid_n cols).

    Matmul operands bf16, accumulation / bias / softmax in f32.
    """
    h = jnp.dot(x_ref[...], w1_ref[...], preferred_element_type=jnp.float32)
    h = jnp.maximum(h + b1_ref[...], 0.0)
    logits = jnp.dot(h.astype(w2_ref.dtype), w2_ref[...],
                     preferred_element_type=jnp.float32)
    logits = logits + b2_ref[...]
    col = jax.lax.broadcasted_iota(jnp.int32, logits.shape, 1)
    masked = jnp.where(col < valid_n, logits, jnp.float32(-1e30))
    m = jnp.max(masked, axis=-1, keepdims=True)
    s = masked - m
    lse = jnp.log(jnp.sum(jnp.exp(s), axis=-1, keepdims=True))
    o_ref[...] = s - lse


# ------------------------------- wrappers -----------------------------------

def _im2col_pooled(x_nhwc, kh, kw):
    """Valid stride-1 im2col with rows grouped by 2x2 pool window.

    Returns cols of shape (4, B*PH*PW, kh*kw*C) (column order kh, kw, cin),
    axis 0 indexing the position inside the 2x2 max-pool window.
    """
    B, H, W, C = x_nhwc.shape
    OH, OW = H - kh + 1, W - kw + 1
    PH, PW = OH // 2, OW // 2
    K = kh * kw * C
    patches = jnp.stack(
        [x_nhwc[:, i:i + OH, j:j + OW, :] for i in range(kh) for j in range(kw)],
        axis=3,
    )                                               # (B, OH, OW, kh*kw, C)
    patches = patches.reshape(B, PH, 2, PW, 2, K)   # split pool windows
    patches = jnp.transpose(patches, (2, 4, 0, 1, 3, 5))   # (dh, dw, B, PH, PW, K)
    return patches.reshape(4, B * PH * PW, K), (B, PH, PW)


def conv_relu_pool(x_nhwc, w_mat, b_row, *, kh, kw):
    """relu(conv2d(x, w) + b) followed by 2x2/2 maxpool, fused in one kernel.

    w_mat: (K, N) bf16 already repacked / N-padded; b_row: (1, N) f32.
    Returns NHWC (B, PH, PW, N) bf16 with padded output channels exactly zero.
    """
    cols, (B, PH, PW) = _im2col_pooled(x_nhwc, kh, kw)
    _, M, K = cols.shape
    N = w_mat.shape[1]
    TM, Mp = _pick_tm(M, 4 * K * cols.dtype.itemsize)
    if Mp != M:
        cols = jnp.pad(cols, ((0, 0), (0, Mp - M), (0, 0)))
    block_bytes = (2 * (4 * TM * K * 2 + K * N * 2 + N * 4 + TM * N * 2)
                   + 4 * TM * N * 4)                 # + in-kernel f32 matmul result
    out = pl.pallas_call(
        _conv_pool_kernel,
        out_shape=jax.ShapeDtypeStruct((Mp, N), jnp.bfloat16),
        grid=(Mp // TM,),
        in_specs=[
            pl.BlockSpec((4, TM, K), lambda i: (0, i, 0)),
            pl.BlockSpec((K, N), lambda i: (0, 0)),
            pl.BlockSpec((1, N), lambda i: (0, 0)),
        ],
        out_specs=pl.BlockSpec((TM, N), lambda i: (i, 0)),
        compiler_params=pltpu.CompilerParams(
            dimension_semantics=("parallel",),
            vmem_limit_bytes=_vmem_limit(block_bytes)),
    )(cols, w_mat, b_row)
    return out[:M].reshape(B, PH, PW, N)


def mlp_head(x, w1, b1, w2, b2, *, valid_n):
    """log_softmax(relu(x @ w1 + b1) @ w2 + b2), one fused kernel."""
    M, K = x.shape
    N1, N2 = w1.shape[1], w2.shape[1]
    TM, Mp = _pick_tm(M, K * x.dtype.itemsize, budget=8 << 20)
    x_p = x if Mp == M else jnp.pad(x, ((0, Mp - M), (0, 0)))
    block_bytes = (2 * (TM * K * 2 + K * N1 * 2 + N1 * 4 + N1 * N2 * 2 + N2 * 4
                        + TM * N2 * 4)
                   + TM * N1 * 4)                    # + in-kernel f32 hidden
    out = pl.pallas_call(
        functools.partial(_mlp_head_kernel, valid_n=valid_n),
        out_shape=jax.ShapeDtypeStruct((Mp, N2), jnp.float32),
        grid=(Mp // TM,),
        in_specs=[
            pl.BlockSpec((TM, K), lambda i: (i, 0)),
            pl.BlockSpec((K, N1), lambda i: (0, 0)),
            pl.BlockSpec((1, N1), lambda i: (0, 0)),
            pl.BlockSpec((N1, N2), lambda i: (0, 0)),
            pl.BlockSpec((1, N2), lambda i: (0, 0)),
        ],
        out_specs=pl.BlockSpec((TM, N2), lambda i: (i, 0)),
        compiler_params=pltpu.CompilerParams(
            dimension_semantics=("parallel",),
            vmem_limit_bytes=_vmem_limit(block_bytes)),
    )(x_p, w1, b1, w2, b2)
    return out[:M, :valid_n]


# --------------------------- parameter repacking -----------------------------

def prepare_params(params):
    """One-time repack of torch-layout params into bf16, lane-dense operands.
    Contraction (K) dims are kept at their real sizes (25 / 500 / 800 / 512);
    only output (N) dims are padded to multiples of 128."""
    f32, bf16 = jnp.float32, jnp.bfloat16
    # conv1: (20,1,5,5) -> (kh,kw,cin,cout) -> (25,20) -> pad N 20->128
    c1w = jnp.transpose(params["conv1_w"], (2, 3, 1, 0)).reshape(25, 20)
    c1w = jnp.pad(c1w, ((0, 0), (0, 128 - 20))).astype(bf16)
    c1b = jnp.pad(params["conv1_b"], (0, 128 - 20)).reshape(1, 128).astype(f32)
    # conv2: (50,20,5,5) -> (kh,kw,cin,cout) -> (500,50) -> pad N 50->128
    c2w = jnp.transpose(params["conv2_w"], (2, 3, 1, 0)).reshape(500, 50)
    c2w = jnp.pad(c2w, ((0, 0), (0, 128 - 50))).astype(bf16)
    c2b = jnp.pad(params["conv2_b"], (0, 128 - 50)).reshape(1, 128).astype(f32)
    # fc1: torch stores (500, 800) with input order (c,h,w) on a (50,4,4) map.
    # Our flatten is NHWC over the 50 real channels -> permute rows to (h,w,c);
    # pad out 500->512.
    w1t = params["fc1_w"].T.reshape(50, 4, 4, 500)                  # (c,h,w,out)
    w1t = jnp.transpose(w1t, (1, 2, 0, 3)).reshape(800, 500)        # (h,w,c) rows
    fc1w = jnp.pad(w1t, ((0, 0), (0, 512 - 500))).astype(bf16)
    fc1b = jnp.pad(params["fc1_b"], (0, 512 - 500)).reshape(1, 512).astype(f32)
    # fc2: (10, 500) -> (500,10) -> pad K 500->512 (fc1's padded cols are zero),
    # N 10->128 (masked in log_softmax).
    fc2w = jnp.pad(params["fc2_w"].T, ((0, 512 - 500), (0, 128 - 10))).astype(bf16)
    fc2b = jnp.pad(params["fc2_b"], (0, 128 - 10)).reshape(1, 128).astype(f32)
    return {"c1w": c1w, "c1b": c1b, "c2w": c2w, "c2b": c2b,
            "fc1w": fc1w, "fc1b": fc1b, "fc2w": fc2w, "fc2b": fc2b}


# ------------------------------- the model ----------------------------------

def net_forward(x_nchw, pp):
    B = x_nchw.shape[0]
    x = jnp.transpose(x_nchw, (0, 2, 3, 1)).astype(jnp.bfloat16)   # NHWC (B,28,28,1)
    x = conv_relu_pool(x, pp["c1w"], pp["c1b"], kh=5, kw=5)        # (B,12,12,128)
    # slice back to the 20 real channels before conv2's contraction (K=500)
    x = conv_relu_pool(x[..., :20], pp["c2w"], pp["c2b"], kh=5, kw=5)  # (B,4,4,128)
    # slice back to the 50 real channels before the fc1 contraction (K=800)
    x = x[..., :50].reshape(B, 4 * 4 * 50)
    return mlp_head(x, pp["fc1w"], pp["fc1b"], pp["fc2w"], pp["fc2b"], valid_n=10)


# ------------------------------ reference & init -----------------------------

def net_reference(x_nchw, params):
    """Pure-XLA f32 reference with identical semantics to the torch module."""
    x = jax.lax.conv_general_dilated(
        x_nchw, params["conv1_w"], (1, 1), "VALID",
        dimension_numbers=("NCHW", "OIHW", "NCHW"))
    x = jax.nn.relu(x + params["conv1_b"][None, :, None, None])
    x = jax.lax.reduce_window(x, -jnp.inf, jax.lax.max,
                              (1, 1, 2, 2), (1, 1, 2, 2), "VALID")
    x = jax.lax.conv_general_dilated(
        x, params["conv2_w"], (1, 1), "VALID",
        dimension_numbers=("NCHW", "OIHW", "NCHW"))
    x = jax.nn.relu(x + params["conv2_b"][None, :, None, None])
    x = jax.lax.reduce_window(x, -jnp.inf, jax.lax.max,
                              (1, 1, 2, 2), (1, 1, 2, 2), "VALID")
    x = x.reshape(x.shape[0], -1)                            # NCHW flatten == torch view
    x = jax.nn.relu(x @ params["fc1_w"].T + params["fc1_b"])
    x = x @ params["fc2_w"].T + params["fc2_b"]
    return jax.nn.log_softmax(x, axis=-1)


def init_params(key):
    ks = jax.random.split(key, 8)

    def w(k, shape, fan_in):
        return jax.random.normal(k, shape, jnp.float32) / jnp.sqrt(float(fan_in))

    return {
        "conv1_w": w(ks[0], (20, 1, 5, 5), 1 * 5 * 5),
        "conv1_b": w(ks[1], (20,), 1 * 5 * 5),
        "conv2_w": w(ks[2], (50, 20, 5, 5), 20 * 5 * 5),
        "conv2_b": w(ks[3], (50,), 20 * 5 * 5),
        "fc1_w": w(ks[4], (500, 800), 800),   # torch Linear stores (out, in)
        "fc1_b": w(ks[5], (500,), 800),
        "fc2_w": w(ks[6], (10, 500), 500),
        "fc2_b": w(ks[7], (10,), 500),
    }


if __name__ == "__main__":
    key = jax.random.PRNGKey(0)
    pkey, xkey = jax.random.split(key)
    params = init_params(pkey)
    prepped = prepare_params(params)        # one-time repack, outside jit
    # fc1 (4*4*50) forces the MNIST spatial size 28x28; batch kept small (=2).
    x = jax.random.normal(xkey, (2, 1, 28, 28), jnp.float32)

    out = jax.jit(net_forward)(x, prepped)
    jax.block_until_ready(out)

    assert out.shape == (2, 10) and out.dtype == jnp.float32
    # log_softmax rows must (approximately) sum to 1 in prob space.
    assert bool(jnp.allclose(jnp.sum(jnp.exp(out), axis=1), 1.0, atol=1e-4))
    # Numerics must match the pure-XLA f32 reference of the torch module
    # (tolerance widened slightly for bf16 matmul operands, f32 accumulation).
    ref = jax.jit(net_reference)(x, params)
    assert bool(jnp.allclose(out, ref, atol=2e-2, rtol=2e-2))
    print("KERNEL_OK")
</pallas_src>

<mosaic_0001>
module attributes {stable_mosaic.version = 11 : i64} {
  func.func @_conv_pool_kernel(%arg0: i32, %arg1: memref<4x144x25xbf16, #tpu.memory_space<vmem>>, %arg2: memref<25x128xbf16, #tpu.memory_space<vmem>>, %arg3: memref<1x128xf32, #tpu.memory_space<vmem>>, %arg4: memref<144x128xbf16, #tpu.memory_space<vmem>>) attributes {dimension_semantics = [#tpu.dimension_semantics<parallel>], iteration_bounds = array<i64: 2>, scalar_prefetch = 0 : i64, scratch_operands = 0 : i64, tpu.core_type = #tpu.core_type<tc>, window_params = [{transform_indices = @transform_0, window_bounds = array<i64: 4, 144, 25>}, {pipeline_mode = #tpu.pipeline_mode<synchronous>, transform_indices = @transform_1, window_bounds = array<i64: 25, 128>}, {pipeline_mode = #tpu.pipeline_mode<synchronous>, transform_indices = @transform_2, window_bounds = array<i64: 1, 128>}, {transform_indices = @transform_3, window_bounds = array<i64: 144, 128>}]} {
    %c0 = arith.constant 0 : index
    %c0_0 = arith.constant 0 : index
    %c0_1 = arith.constant 0 : index
    %0 = vector.load %arg1[%c0, %c0_0, %c0_1] : memref<4x144x25xbf16, #tpu.memory_space<vmem>>, vector<4x144x25xbf16>
    %1 = vector.shape_cast %0 : vector<4x144x25xbf16> to vector<576x25xbf16>
    %c0_2 = arith.constant 0 : index
    %c0_3 = arith.constant 0 : index
    %2 = vector.load %arg2[%c0_2, %c0_3] : memref<25x128xbf16, #tpu.memory_space<vmem>>, vector<25x128xbf16>
    %cst = arith.constant dense<0.000000e+00> : vector<576x128xf32>
    %3 = tpu.matmul %1, %2, %cst {dimension_numbers = #tpu.dot_dimension_numbers<[1], [0], [0], [1], [0, 0, 1, 1], [], []>} : vector<576x25xbf16>, vector<25x128xbf16>, vector<576x128xf32> -> vector<576x128xf32>
    %4 = vector.shape_cast %3 : vector<576x128xf32> to vector<4x144x128xf32>
    %5 = vector.extract_strided_slice %4 {offsets = [0, 0, 0], sizes = [1, 144, 128], strides = [1, 1, 1]} : vector<4x144x128xf32> to vector<1x144x128xf32>
    %6 = vector.shape_cast %5 : vector<1x144x128xf32> to vector<144x128xf32>
    %7 = vector.extract_strided_slice %4 {offsets = [1, 0, 0], sizes = [1, 144, 128], strides = [1, 1, 1]} : vector<4x144x128xf32> to vector<1x144x128xf32>
    %8 = vector.shape_cast %7 : vector<1x144x128xf32> to vector<144x128xf32>
    %9 = arith.maximumf %6, %8 : vector<144x128xf32>
    %10 = vector.extract_strided_slice %4 {offsets = [2, 0, 0], sizes = [1, 144, 128], strides = [1, 1, 1]} : vector<4x144x128xf32> to vector<1x144x128xf32>
    %11 = vector.shape_cast %10 : vector<1x144x128xf32> to vector<144x128xf32>
    %12 = vector.extract_strided_slice %4 {offsets = [3, 0, 0], sizes = [1, 144, 128], strides = [1, 1, 1]} : vector<4x144x128xf32> to vector<1x144x128xf32>
    %13 = vector.shape_cast %12 : vector<1x144x128xf32> to vector<144x128xf32>
    %14 = arith.maximumf %11, %13 : vector<144x128xf32>
    %15 = arith.maximumf %9, %14 : vector<144x128xf32>
    %c0_4 = arith.constant 0 : index
    %c0_5 = arith.constant 0 : index
    %16 = vector.load %arg3[%c0_4, %c0_5] : memref<1x128xf32, #tpu.memory_space<vmem>>, vector<1x128xf32>
    %17 = vector.broadcast %16 : vector<1x128xf32> to vector<144x128xf32>
    %18 = arith.addf %15, %17 : vector<144x128xf32>
    %cst_6 = arith.constant 0.000000e+00 : f32
    %19 = vector.broadcast %cst_6 : f32 to vector<144x128xf32>
    %20 = arith.maximumf %18, %19 : vector<144x128xf32>
    %21 = arith.truncf %20 : vector<144x128xf32> to vector<144x128xbf16>
    %c0_7 = arith.constant 0 : index
    %c0_8 = arith.constant 0 : index
    %22 = vector.load %arg4[%c0_7, %c0_8] : memref<144x128xbf16, #tpu.memory_space<vmem>>, vector<144x128xbf16>
    tpu.vector_store %arg4[%c0_7, %c0_8], %21 {strides = array<i32>} : memref<144x128xbf16, #tpu.memory_space<vmem>>, vector<144x128xbf16>,
    return
  }
  func.func @transform_0(%arg0: i32) -> (i32, i32, i32) {
    %c0_i32 = arith.constant 0 : i32
    %c0_i32_0 = arith.constant 0 : i32
    %c0_i32_1 = arith.constant 0 : i32
    return %c0_i32, %arg0, %c0_i32_0 : i32, i32, i32
  }
  func.func @transform_1(%arg0: i32) -> (i32, i32) {
    %c0_i32 = arith.constant 0 : i32
    %c0_i32_0 = arith.constant 0 : i32
    %c0_i32_1 = arith.constant 0 : i32
    return %c0_i32, %c0_i32_0 : i32, i32
  }
  func.func @transform_2(%arg0: i32) -> (i32, i32) {
    %c0_i32 = arith.constant 0 : i32
    %c0_i32_0 = arith.constant 0 : i32
    %c0_i32_1 = arith.constant 0 : i32
    return %c0_i32, %c0_i32_0 : i32, i32
  }
  func.func @transform_3(%arg0: i32) -> (i32, i32) {
    %c0_i32 = arith.constant 0 : i32
    %c0_i32_0 = arith.constant 0 : i32
    return %arg0, %c0_i32 : i32, i32
  }
}

module attributes {stable_mosaic.version = 11 : i64} {
  func.func @_conv_pool_kernel(%arg0: i32, %arg1: memref<4x16x500xbf16, #tpu.memory_space<vmem>>, %arg2: memref<500x128xbf16, #tpu.memory_space<vmem>>, %arg3: memref<1x128xf32, #tpu.memory_space<vmem>>, %arg4: memref<16x128xbf16, #tpu.memory_space<vmem>>) attributes {dimension_semantics = [#tpu.dimension_semantics<parallel>], iteration_bounds = array<i64: 2>, scalar_prefetch = 0 : i64, scratch_operands = 0 : i64, tpu.core_type = #tpu.core_type<tc>, window_params = [{transform_indices = @transform_0, window_bounds = array<i64: 4, 16, 500>}, {pipeline_mode = #tpu.pipeline_mode<synchronous>, transform_indices = @transform_1, window_bounds = array<i64: 500, 128>}, {pipeline_mode = #tpu.pipeline_mode<synchronous>, transform_indices = @transform_2, window_bounds = array<i64: 1, 128>}, {transform_indices = @transform_3, window_bounds = array<i64: 16, 128>}]} {
    %c0 = arith.constant 0 : index
    %c0_0 = arith.constant 0 : index
    %c0_1 = arith.constant 0 : index
    %0 = vector.load %arg1[%c0, %c0_0, %c0_1] : memref<4x16x500xbf16, #tpu.memory_space<vmem>>, vector<4x16x500xbf16>
    %1 = vector.shape_cast %0 : vector<4x16x500xbf16> to vector<64x500xbf16>
    %c0_2 = arith.constant 0 : index
    %c0_3 = arith.constant 0 : index
    %2 = vector.load %arg2[%c0_2, %c0_3] : memref<500x128xbf16, #tpu.memory_space<vmem>>, vector<500x128xbf16>
    %cst = arith.constant dense<0.000000e+00> : vector<64x128xf32>
    %3 = tpu.matmul %1, %2, %cst {dimension_numbers = #tpu.dot_dimension_numbers<[1], [0], [0], [1], [0, 0, 1, 1], [], []>} : vector<64x500xbf16>, vector<500x128xbf16>, vector<64x128xf32> -> vector<64x128xf32>
    %4 = vector.shape_cast %3 : vector<64x128xf32> to vector<4x16x128xf32>
    %5 = vector.extract_strided_slice %4 {offsets = [0, 0, 0], sizes = [1, 16, 128], strides = [1, 1, 1]} : vector<4x16x128xf32> to vector<1x16x128xf32>
    %6 = vector.shape_cast %5 : vector<1x16x128xf32> to vector<16x128xf32>
    %7 = vector.extract_strided_slice %4 {offsets = [1, 0, 0], sizes = [1, 16, 128], strides = [1, 1, 1]} : vector<4x16x128xf32> to vector<1x16x128xf32>
    %8 = vector.shape_cast %7 : vector<1x16x128xf32> to vector<16x128xf32>
    %9 = arith.maximumf %6, %8 : vector<16x128xf32>
    %10 = vector.extract_strided_slice %4 {offsets = [2, 0, 0], sizes = [1, 16, 128], strides = [1, 1, 1]} : vector<4x16x128xf32> to vector<1x16x128xf32>
    %11 = vector.shape_cast %10 : vector<1x16x128xf32> to vector<16x128xf32>
    %12 = vector.extract_strided_slice %4 {offsets = [3, 0, 0], sizes = [1, 16, 128], strides = [1, 1, 1]} : vector<4x16x128xf32> to vector<1x16x128xf32>
    %13 = vector.shape_cast %12 : vector<1x16x128xf32> to vector<16x128xf32>
    %14 = arith.maximumf %11, %13 : vector<16x128xf32>
    %15 = arith.maximumf %9, %14 : vector<16x128xf32>
    %c0_4 = arith.constant 0 : index
    %c0_5 = arith.constant 0 : index
    %16 = vector.load %arg3[%c0_4, %c0_5] : memref<1x128xf32, #tpu.memory_space<vmem>>, vector<1x128xf32>
    %17 = vector.broadcast %16 : vector<1x128xf32> to vector<16x128xf32>
    %18 = arith.addf %15, %17 : vector<16x128xf32>
    %cst_6 = arith.constant 0.000000e+00 : f32
    %19 = vector.broadcast %cst_6 : f32 to vector<16x128xf32>
    %20 = arith.maximumf %18, %19 : vector<16x128xf32>
    %21 = arith.truncf %20 : vector<16x128xf32> to vector<16x128xbf16>
    %c0_7 = arith.constant 0 : index
    %c0_8 = arith.constant 0 : index
    %22 = vector.load %arg4[%c0_7, %c0_8] : memref<16x128xbf16, #tpu.memory_space<vmem>>, vector<16x128xbf16>
    tpu.vector_store %arg4[%c0_7, %c0_8], %21 {strides = array<i32>} : memref<16x128xbf16, #tpu.memory_space<vmem>>, vector<16x128xbf16>,
    return
  }
  func.func @transform_0(%arg0: i32) -> (i32, i32, i32) {
    %c0_i32 = arith.constant 0 : i32
    %c0_i32_0 = arith.constant 0 : i32
    %c0_i32_1 = arith.constant 0 : i32
    return %c0_i32, %arg0, %c0_i32_0 : i32, i32, i32
  }
  func.func @transform_1(%arg0: i32) -> (i32, i32) {
    %c0_i32 = arith.constant 0 : i32
    %c0_i32_0 = arith.constant 0 : i32
    %c0_i32_1 = arith.constant 0 : i32
    return %c0_i32, %c0_i32_0 : i32, i32
  }
  func.func @transform_2(%arg0: i32) -> (i32, i32) {
    %c0_i32 = arith.constant 0 : i32
    %c0_i32_0 = arith.constant 0 : i32
    %c0_i32_1 = arith.constant 0 : i32
    return %c0_i32, %c0_i32_0 : i32, i32
  }
  func.func @transform_3(%arg0: i32) -> (i32, i32) {
    %c0_i32 = arith.constant 0 : i32
    %c0_i32_0 = arith.constant 0 : i32
    return %arg0, %c0_i32 : i32, i32
  }
}

module attributes {stable_mosaic.version = 11 : i64} {
  func.func @_mlp_head_kernel(%arg0: i32, %arg1: memref<16x800xbf16, #tpu.memory_space<vmem>>, %arg2: memref<800x512xbf16, #tpu.memory_space<vmem>>, %arg3: memref<1x512xf32, #tpu.memory_space<vmem>>, %arg4: memref<512x128xbf16, #tpu.memory_space<vmem>>, %arg5: memref<1x128xf32, #tpu.memory_space<vmem>>, %arg6: memref<16x128xf32, #tpu.memory_space<vmem>>) attributes {dimension_semantics = [#tpu.dimension_semantics<parallel>], iteration_bounds = array<i64: 1>, scalar_prefetch = 0 : i64, scratch_operands = 0 : i64, tpu.core_type = #tpu.core_type<tc>, window_params = [{transform_indices = @transform_0, window_bounds = array<i64: 16, 800>}, {pipeline_mode = #tpu.pipeline_mode<synchronous>, transform_indices = @transform_1, window_bounds = array<i64: 800, 512>}, {pipeline_mode = #tpu.pipeline_mode<synchronous>, transform_indices = @transform_2, window_bounds = array<i64: 1, 512>}, {pipeline_mode = #tpu.pipeline_mode<synchronous>, transform_indices = @transform_3, window_bounds = array<i64: 512, 128>}, {pipeline_mode = #tpu.pipeline_mode<synchronous>, transform_indices = @transform_4, window_bounds = array<i64: 1, 128>}, {transform_indices = @transform_5, window_bounds = array<i64: 16, 128>}]} {
    %c0 = arith.constant 0 : index
    %c0_0 = arith.constant 0 : index
    %0 = vector.load %arg1[%c0, %c0_0] : memref<16x800xbf16, #tpu.memory_space<vmem>>, vector<16x800xbf16>
    %c0_1 = arith.constant 0 : index
    %c0_2 = arith.constant 0 : index
    %1 = vector.load %arg2[%c0_1, %c0_2] : memref<800x512xbf16, #tpu.memory_space<vmem>>, vector<800x512xbf16>
    %cst = arith.constant dense<0.000000e+00> : vector<16x512xf32>
    %2 = tpu.matmul %0, %1, %cst {dimension_numbers = #tpu.dot_dimension_numbers<[1], [0], [0], [1], [0, 0, 1, 1], [], []>} : vector<16x800xbf16>, vector<800x512xbf16>, vector<16x512xf32> -> vector<16x512xf32>
    %c0_3 = arith.constant 0 : index
    %c0_4 = arith.constant 0 : index
    %3 = vector.load %arg3[%c0_3, %c0_4] : memref<1x512xf32, #tpu.memory_space<vmem>>, vector<1x512xf32>
    %4 = vector.broadcast %3 : vector<1x512xf32> to vector<16x512xf32>
    %5 = arith.addf %2, %4 : vector<16x512xf32>
    %cst_5 = arith.constant 0.000000e+00 : f32
    %6 = vector.broadcast %cst_5 : f32 to vector<16x512xf32>
    %7 = arith.maximumf %5, %6 : vector<16x512xf32>
    %8 = arith.truncf %7 : vector<16x512xf32> to vector<16x512xbf16>
    %c0_6 = arith.constant 0 : index
    %c0_7 = arith.constant 0 : index
    %9 = vector.load %arg4[%c0_6, %c0_7] : memref<512x128xbf16, #tpu.memory_space<vmem>>, vector<512x128xbf16>
    %cst_8 = arith.constant dense<0.000000e+00> : vector<16x128xf32>
    %10 = tpu.matmul %8, %9, %cst_8 {dimension_numbers = #tpu.dot_dimension_numbers<[1], [0], [0], [1], [0, 0, 1, 1], [], []>} : vector<16x512xbf16>, vector<512x128xbf16>, vector<16x128xf32> -> vector<16x128xf32>
    %c0_9 = arith.constant 0 : index
    %c0_10 = arith.constant 0 : index
    %11 = vector.load %arg5[%c0_9, %c0_10] : memref<1x128xf32, #tpu.memory_space<vmem>>, vector<1x128xf32>
    %12 = vector.broadcast %11 : vector<1x128xf32> to vector<16x128xf32>
    %13 = arith.addf %10, %12 : vector<16x128xf32>
    %14 = tpu.iota {dimensions = array<i32: 1>} : vector<16x128xi32>
    %c10_i32 = arith.constant 10 : i32
    %15 = vector.broadcast %c10_i32 : i32 to vector<16x128xi32>
    %16 = arith.cmpi slt, %14, %15 : vector<16x128xi32>
    %cst_11 = arith.constant -1.000000e+30 : f32
    %17 = vector.broadcast %cst_11 : f32 to vector<16x128xf32>
    %18 = arith.select %16, %13, %17 : vector<16x128xi1>, vector<16x128xf32>
    %cst_12 = arith.constant dense<0xFF800000> : vector<16xf32>
    %19 = vector.multi_reduction <maximumf>, %18, %cst_12 [1] : vector<16x128xf32> to vector<16xf32>
    %20 = vector.shape_cast %19 : vector<16xf32> to vector<16x1xf32>
    %21 = vector.broadcast %20 : vector<16x1xf32> to vector<16x128xf32>
    %22 = arith.subf %18, %21 : vector<16x128xf32>
    %23 = math.exp %22 : vector<16x128xf32>
    %cst_13 = arith.constant dense<0.000000e+00> : vector<16xf32>
    %24 = vector.multi_reduction <add>, %23, %cst_13 [1] : vector<16x128xf32> to vector<16xf32>
    %25 = vector.shape_cast %24 : vector<16xf32> to vector<16x1xf32>
    %26 = math.log %25 : vector<16x1xf32>
    %27 = vector.broadcast %26 : vector<16x1xf32> to vector<16x128xf32>
    %28 = arith.subf %22, %27 : vector<16x128xf32>
    %c0_14 = arith.constant 0 : index
    %c0_15 = arith.constant 0 : index
    %29 = vector.load %arg6[%c0_14, %c0_15] : memref<16x128xf32, #tpu.memory_space<vmem>>, vector<16x128xf32>
    tpu.vector_store %arg6[%c0_14, %c0_15], %28 {strides = array<i32>} : memref<16x128xf32, #tpu.memory_space<vmem>>, vector<16x128xf32>,
    return
  }
  func.func @transform_0(%arg0: i32) -> (i32, i32) {
    %c0_i32 = arith.constant 0 : i32
    %c0_i32_0 = arith.constant 0 : i32
    return %arg0, %c0_i32 : i32, i32
  }
  func.func @transform_1(%arg0: i32) -> (i32, i32) {
    %c0_i32 = arith.constant 0 : i32
    %c0_i32_0 = arith.constant 0 : i32
    %c0_i32_1 = arith.constant 0 : i32
    return %c0_i32, %c0_i32_0 : i32, i32
  }
  func.func @transform_2(%arg0: i32) -> (i32, i32) {
    %c0_i32 = arith.constant 0 : i32
    %c0_i32_0 = arith.constant 0 : i32
    %c0_i32_1 = arith.constant 0 : i32
    return %c0_i32, %c0_i32_0 : i32, i32
  }
  func.func @transform_3(%arg0: i32) -> (i32, i32) {
    %c0_i32 = arith.constant 0 : i32
    %c0_i32_0 = arith.constant 0 : i32
    %c0_i32_1 = arith.constant 0 : i32
    return %c0_i32, %c0_i32_0 : i32, i32
  }
  func.func @transform_4(%arg0: i32) -> (i32, i32) {
    %c0_i32 = arith.constant 0 : i32
    %c0_i32_0 = arith.constant 0 : i32
    %c0_i32_1 = arith.constant 0 : i32
    return %c0_i32, %c0_i32_0 : i32, i32
  }
  func.func @transform_5(%arg0: i32) -> (i32, i32) {
    %c0_i32 = arith.constant 0 : i32
    %c0_i32_0 = arith.constant 0 : i32
    return %arg0, %c0_i32 : i32, i32
  }
}

</mosaic_0001>

<llo_original>
// kernel: net_forward.3
$region0: #{net_forward.3}
  #allocation0 [shape = 'u32[]', space=smem, size = 0x4, offset = 0x4, fixed_abs, tag = 'smem constant byte address 0x4 - core index']
  #allocation1 [shape = 'u32[72,128]{1,0:T(1,128)}', space=vmem, size = 0x9000, scoped, tag = 'internal scratch']
  %s0 = inlined_call_operand.vmem [shape: bf16[4,288,25], index: 0, kind: input, shape index: {}]
  %s1 = inlined_call_operand.vmem [shape: bf16[25,128], index: 1, kind: input, shape index: {}]
  %s2 = inlined_call_operand.vmem [shape: f32[1,128], index: 2, kind: input, shape index: {}]
  %s3 = inlined_call_operand.vmem [shape: bf16[288,128], index: 3, kind: output, shape index: {}]
  %s4 = sld [smem:[#allocation0]]
  $region86: #{net_forward.3} parent=0
    _
  %s6 = ssub.s32 1, %s4
  %s7 = scalar_select 0, %s6, %s4
  $region1: #{net_forward.3} parent=0
    #allocation2 [shape = 'u8[294912]{0}', space=vmem, size = 0x48000, scoped, tag = 'input window, operand 0']
    loop: start=0, step=1, limit=4
    $region2: #{net_forward.3} parent=1 // loop_pre_header
      _
    $region3: #{net_forward.3} parent=1 // loop_header
      %s9 = sphi 0, %s13
      %p10 = scmp.ge.s32.totalorder %s9, 4
      %s19 = sphi 0, %s21
      %s22 = sphi 0, %s19
      %s23 = sphi 0, %s22
      %s39 = sphi 0, %s23
      %s43 = sphi 0, %s43
      %s45 = sphi 0, %s43
      %s46 = sphi 0, %s45
      %s60 = sphi 0, %s46
      %s64 = sphi 0, %s64
      %s66 = sphi 0, %s64
      %s67 = sphi 0, %s66
      %s81 = sphi 0, %s67
      %s87 = sphi 0, %s89
      %s90 = sphi 0, %s87
      %s91 = sphi 0, %s90
      %s107 = sphi 0, %s91
    $region4: #{net_forward.3} parent=1 // loop_header_branch
      %12 = sbr.rel (%p10) target = $region8
    $region5: #{net_forward.3} parent=1 // loop_body
      %s14 = ssub.s32 %s9, 1
      %s15 = ssub.s32 %s9, 2
      %s16 = sadd.s32 %s9, 1
      %s17 = ssub.s32 %s9, %s16
      %p18 = scmp.eq.s32.totalorder %s17, 0
      %s20 = sadd.s32 %s19, 1
      %s21 = scalar_select %p18, %s19, %s20
      %p24 = pneg %p18
      %p25 = scmp.eq.s32.totalorder %s9, 1
      %p26 = por %p24, %p25
      %p27 = scmp.ne.s32.totalorder %s19, %s22
      %p28 = scmp.eq.s32.totalorder %s9, 0
      %p29 = por %p27, %p28
      %p30 = scmp.ne.s32.totalorder %s19, %s22
      %p31 = scmp.eq.s32.totalorder %s14, 1
      %p32 = por %p30, %p31
      %p33 = scmp.ne.s32.totalorder %s22, %s23
      %p34 = scmp.eq.s32.totalorder %s14, 0
      %p35 = por %p33, %p34
      %p36 = scmp.ne.s32.totalorder %s22, %s23
      %p37 = scmp.eq.s32.totalorder %s15, 1
      %p38 = por %p36, %p37
      %p40 = scmp.ne.s32.totalorder %s23, %s39
      %p41 = scmp.eq.s32.totalorder %s15, 0
      %p42 = por %p40, %p41
      %s44 = sadd.s32 %s43, 1
      %p47 = scmp.eq.s32.totalorder %s9, 1
      %p48 = scmp.ne.s32.totalorder %s43, %s45
      %p49 = scmp.eq.s32.totalorder %s9, 0
      %p50 = por %p48, %p49
      %p51 = scmp.ne.s32.totalorder %s43, %s45
      %p52 = scmp.eq.s32.totalorder %s14, 1
      %p53 = por %p51, %p52
      %p54 = scmp.ne.s32.totalorder %s45, %s46
      %p55 = scmp.eq.s32.totalorder %s14, 0
      %p56 = por %p54, %p55
      %p57 = scmp.ne.s32.totalorder %s45, %s46
      %p58 = scmp.eq.s32.totalorder %s15, 1
      %p59 = por %p57, %p58
      %p61 = scmp.ne.s32.totalorder %s46, %s60
      %p62 = scmp.eq.s32.totalorder %s15, 0
      %p63 = por %p61, %p62
      %s65 = sadd.s32 %s64, 1
      %p68 = scmp.eq.s32.totalorder %s9, 1
      %p69 = scmp.ne.s32.totalorder %s64, %s66
      %p70 = scmp.eq.s32.totalorder %s9, 0
      %p71 = por %p69, %p70
      %p72 = scmp.ne.s32.totalorder %s64, %s66
      %p73 = scmp.eq.s32.totalorder %s14, 1
      %p74 = por %p72, %p73
      %p75 = scmp.ne.s32.totalorder %s66, %s67
      %p76 = scmp.eq.s32.totalorder %s14, 0
      %p77 = por %p75, %p76
      %p78 = scmp.ne.s32.totalorder %s66, %s67
      %p79 = scmp.eq.s32.totalorder %s15, 1
      %p80 = por %p78, %p79
      %p82 = scmp.ne.s32.totalorder %s67, %s81
      %p83 = scmp.eq.s32.totalorder %s15, 0
      %p84 = por %p82, %p83
      %s85 = ssub.s32 %s9, %s16
      %p86 = scmp.eq.s32.totalorder %s85, 0
      %s88 = sadd.s32 %s87, 1
      %s89 = scalar_select %p86, %s87, %s88
      %p92 = pneg %p86
      %p93 = scmp.eq.s32.totalorder %s9, 1
      %p94 = por %p92, %p93
      %p95 = scmp.ne.s32.totalorder %s87, %s90
      %p96 = scmp.eq.s32.totalorder %s9, 0
      %p97 = por %p95, %p96
      %p98 = scmp.ne.s32.totalorder %s87, %s90
      %p99 = scmp.eq.s32.totalorder %s14, 1
      %p100 = por %p98, %p99
      %p101 = scmp.ne.s32.totalorder %s90, %s91
      %p102 = scmp.eq.s32.totalorder %s14, 0
      %p103 = por %p101, %p102
      %p104 = scmp.ne.s32.totalorder %s90, %s91
      %p105 = scmp.eq.s32.totalorder %s15, 1
      %p106 = por %p104, %p105
      %p108 = scmp.ne.s32.totalorder %s91, %s107
      %p109 = scmp.eq.s32.totalorder %s15, 0
      %p110 = por %p108, %p109
      %p111 = scmp.le.s32.totalorder 1, %s9
      %p112 = scmp.lt.s32.totalorder %s9, 3
      %p113 = pnand %p111, %p112
      %p114 = pneg %p113
      // Predicated region
      $region9: #{net_forward.3} parent=5 // pred_check
        _
      $region10: #{net_forward.3} parent=5 // pred_check_branch
        %116 = sbr.rel (%p113) target = $region12
      $region11: #{net_forward.3} parent=5 // pred_region
        %s117 = ssub.s32 %s9, 1
        // Predicated region
        $region13: #{net_forward.3} parent=11 // pred_check
          %p118 = pneg %p56
        $region14: #{net_forward.3} parent=11 // pred_check_branch
          %120 = sbr.rel (%p118) target = $region16
        $region15: #{net_forward.3} parent=11 // pred_region
          _
        $region16: #{net_forward.3} parent=11 // pred_fallthru
          _
        // Predicated region
        $region17: #{net_forward.3} parent=11 // pred_check
          %p121 = pneg %p77
        $region18: #{net_forward.3} parent=11 // pred_check_branch
          %123 = sbr.rel (%p121) target = $region20
        $region19: #{net_forward.3} parent=11 // pred_region
          _
        $region20: #{net_forward.3} parent=11 // pred_fallthru
          _
      $region12: #{net_forward.3} parent=5 // pred_fallthru
        _
      %p124 = scmp.lt.s32.totalorder %s9, 2
      // Predicated region
      $region21: #{net_forward.3} parent=5 // pred_check
        %p125 = pneg %p124
      $region22: #{net_forward.3} parent=5 // pred_check_branch
        %127 = sbr.rel (%p125) target = $region24
      $region23: #{net_forward.3} parent=5 // pred_region
        // Predicated region
        $region25: #{net_forward.3} parent=23 // pred_check
          %p128 = pneg %p29
        $region26: #{net_forward.3} parent=23 // pred_check_branch
          %130 = sbr.rel (%p128) target = $region28
        $region27: #{net_forward.3} parent=23 // pred_region
          %s131 = sand.u32 %s19, 1
          %s132 = sand.u32 %s19, 1
          %s133 = smul.addr %s132, 288
          %s134 = scalar_lea.vmem [#allocation2], %s133
          %s135 = smul.u32 18, %s9
          %s136 = smul.addr %s135, 4
          %s137 = scalar_lea.vmem %s0, %s136
          // Predicated region
          $region29: #{net_forward.3} parent=27 // pred_check
            _
          $region30: #{net_forward.3} parent=27 // pred_check_branch
            %139 = sbr.rel (0) target = $region32
          $region31: #{net_forward.3} parent=27 // pred_region
            // Predicated region
            $region33: #{net_forward.3} parent=31 // pred_check
              _
            $region34: #{net_forward.3} parent=31 // pred_check_branch
              %141 = sbr.rel target = $region36
            $region35: #{net_forward.3} parent=31 // pred_region
              // Predicated region
              $region48: #{net_forward.3} parent=35 // pred_check
                _
              $region49: #{net_forward.3} parent=35 // pred_check_branch
                %299 = sbr.rel (0) target = $region51
              $region50: #{net_forward.3} parent=35 // pred_region
                loop: start=0, step=1, limit=1
                $region52: #{net_forward.3} parent=50 // loop_pre_header
                  _
                $region53: #{net_forward.3} parent=50 // loop_header
                  %s301 = sphi 0, %s305
                  %p302 = scmp.ge.s32.totalorder %s301, 1
                  %s306 = sphi %s137, %s137
                  %s307 = sphi %s134, %s134
                $region54: #{net_forward.3} parent=50 // loop_header_branch
                  %304 = sbr.rel (%p302) target = $region58
                $region55: #{net_forward.3} parent=50 // loop_body
                  _
                $region56: #{net_forward.3} parent=50 // loop_footer
                  %s305 = sadd.s32 1, %s301
                $region57: #{net_forward.3} parent=50 // loop_footer_branch
                  %300 = sbr.rel target = $region53
                $region58: #{net_forward.3} parent=50 // loop_exit
                  _
                %s309 = ssub.s32 16, 1
                loop: start=0, step=1, limit=1
                $region59: #{net_forward.3} parent=50 // loop_pre_header
                  _
                $region60: #{net_forward.3} parent=50 // loop_header
                  %s311 = sphi 0, %s315
                  %p312 = scmp.ge.s32.totalorder %s311, 1
                  %s316 = sphi %s137, %s137
                  %s317 = sphi %s134, %s134
                $region61: #{net_forward.3} parent=50 // loop_header_branch
                  %314 = sbr.rel (%p312) target = $region65
                $region62: #{net_forward.3} parent=50 // loop_body
                  %v318 = vld [vmem:[%s316] sm:%s309]
                  %319 = vst [vmem:[%s317] sm:%s309] %v318
                  %v320 = vld [vmem:[%s316 + $0x4] sm:%s309]
                  %321 = vst [vmem:[%s317 + $0x4] sm:%s309] %v320
                  %v322 = vld [vmem:[%s316 + $0x8] sm:%s309]
                  %323 = vst [vmem:[%s317 + $0x8] sm:%s309] %v322
                  %v324 = vld [vmem:[%s316 + $0xc] sm:%s309]
                  %325 = vst [vmem:[%s317 + $0xc] sm:%s309] %v324
                  %v326 = vld [vmem:[%s316 + $0x10] sm:%s309]
                  %327 = vst [vmem:[%s317 + $0x10] sm:%s309] %v326
                  %v328 = vld [vmem:[%s316 + $0x14] sm:%s309]
                  %329 = vst [vmem:[%s317 + $0x14] sm:%s309] %v328
                  %v330 = vld [vmem:[%s316 + $0x18] sm:%s309]
                  %331 = vst [vmem:[%s317 + $0x18] sm:%s309] %v330
                  %v332 = vld [vmem:[%s316 + $0x1c] sm:%s309]
                  %333 = vst [vmem:[%s317 + $0x1c] sm:%s309] %v332
                  %v334 = vld [vmem:[%s316 + $0x20] sm:%s309]
                  %335 = vst [vmem:[%s317 + $0x20] sm:%s309] %v334
                  %v336 = vld [vmem:[%s316 + $0x24] sm:%s309]
                  %337 = vst [vmem:[%s317 + $0x24] sm:%s309] %v336
                  %v338 = vld [vmem:[%s316 + $0x28] sm:%s309]
                  %339 = vst [vmem:[%s317 + $0x28] sm:%s309] %v338
                  %v340 = vld [vmem:[%s316 + $0x2c] sm:%s309]
                  %341 = vst [vmem:[%s317 + $0x2c] sm:%s309] %v340
                  %v342 = vld [vmem:[%s316 + $0x30] sm:%s309]
                  %343 = vst [vmem:[%s317 + $0x30] sm:%s309] %v342
                  %v344 = vld [vmem:[%s316 + $0x34] sm:%s309]
                  %345 = vst [vmem:[%s317 + $0x34] sm:%s309] %v344
                  %v346 = vld [vmem:[%s316 + $0x38] sm:%s309]
                  %347 = vst [vmem:[%s317 + $0x38] sm:%s309] %v346
                  %v348 = vld [vmem:[%s316 + $0x3c] sm:%s309]
                  %349 = vst [vmem:[%s317 + $0x3c] sm:%s309] %v348
                  %v350 = vld [vmem:[%s316 + $0x40] sm:%s309]
                  %351 = vst [vmem:[%s317 + $0x40] sm:%s309] %v350
                  %v352 = vld [vmem:[%s316 + $0x44] sm:%s309]
                  %353 = vst [vmem:[%s317 + $0x44] sm:%s309] %v352
                  %v354 = vld [vmem:[%s316 + $0x90] sm:%s309]
                  %355 = vst [vmem:[%s317 + $0x48] sm:%s309] %v354
                  %v356 = vld [vmem:[%s316 + $0x94] sm:%s309]
                  %357 = vst [vmem:[%s317 + $0x4c] sm:%s309] %v356
                  %v358 = vld [vmem:[%s316 + $0x98] sm:%s309]
                  %359 = vst [vmem:[%s317 + $0x50] sm:%s309] %v358
                  %v360 = vld [vmem:[%s316 + $0x9c] sm:%s309]
                  %361 = vst [vmem:[%s317 + $0x54] sm:%s309] %v360
                  %v362 = vld [vmem:[%s316 + $0xa0] sm:%s309]
                  %363 = vst [vmem:[%s317 + $0x58] sm:%s309] %v362
                  %v364 = vld [vmem:[%s316 + $0xa4] sm:%s309]
                  %365 = vst [vmem:[%s317 + $0x5c] sm:%s309] %v364
                  %v366 = vld [vmem:[%s316 + $0xa8] sm:%s309]
                  %367 = vst [vmem:[%s317 + $0x60] sm:%s309] %v366
                  %v368 = vld [vmem:[%s316 + $0xac] sm:%s309]
                  %369 = vst [vmem:[%s317 + $0x64] sm:%s309] %v368
                  %v370 = vld [vmem:[%s316 + $0xb0] sm:%s309]
                  %371 = vst [vmem:[%s317 + $0x68] sm:%s309] %v370
                  %v372 = vld [vmem:[%s316 + $0xb4] sm:%s309]
                  %373 = vst [vmem:[%s317 + $0x6c] sm:%s309] %v372
                  %v374 = vld [vmem:[%s316 + $0xb8] sm:%s309]
                  %375 = vst [vmem:[%s317 + $0x70] sm:%s309] %v374
                  %v376 = vld [vmem:[%s316 + $0xbc] sm:%s309]
                  %377 = vst [vmem:[%s317 + $0x74] sm:%s309] %v376
                  %v378 = vld [vmem:[%s316 + $0xc0] sm:%s309]
                  %379 = vst [vmem:[%s317 + $0x78] sm:%s309] %v378
                  %v380 = vld [vmem:[%s316 + $0xc4] sm:%s309]
                  %381 = vst [vmem:[%s317 + $0x7c] sm:%s309] %v380
                  %v382 = vld [vmem:[%s316 + $0xc8] sm:%s309]
                  %383 = vst [vmem:[%s317 + $0x80] sm:%s309] %v382
                  %v384 = vld [vmem:[%s316 + $0xcc] sm:%s309]
                  %385 = vst [vmem:[%s317 + $0x84] sm:%s309] %v384
                  %v386 = vld [vmem:[%s316 + $0xd0] sm:%s309]
                  %387 = vst [vmem:[%s317 + $0x88] sm:%s309] %v386
                  %v388 = vld [vmem:[%s316 + $0xd4] sm:%s309]
                  %389 = vst [vmem:[%s317 + $0x8c] sm:%s309] %v388
                  %v390 = vld [vmem:[%s316 + $0x120] sm:%s309]
                  %391 = vst [vmem:[%s317 + $0x90] sm:%s309] %v390
                  %v392 = vld [vmem:[%s316 + $0x124] sm:%s309]
                  %393 = vst [vmem:[%s317 + $0x94] sm:%s309] %v392
                  %v394 = vld [vmem:[%s316 + $0x128] sm:%s309]
                  %395 = vst [vmem:[%s317 + $0x98] sm:%s309] %v394
                  %v396 = vld [vmem:[%s316 + $0x12c] sm:%s309]
                  %397 = vst [vmem:[%s317 + $0x9c] sm:%s309] %v396
                  %v398 = vld [vmem:[%s316 + $0x130] sm:%s309]
                  %399 = vst [vmem:[%s317 + $0xa0] sm:%s309] %v398
                  %v400 = vld [vmem:[%s316 + $0x134] sm:%s309]
                  %401 = vst [vmem:[%s317 + $0xa4] sm:%s309] %v400
                  %v402 = vld [vmem:[%s316 + $0x138] sm:%s309]
                  %403 = vst [vmem:[%s317 + $0xa8] sm:%s309] %v402
                  %v404 = vld [vmem:[%s316 + $0x13c] sm:%s309]
                  %405 = vst [vmem:[%s317 + $0xac] sm:%s309] %v404
                  %v406 = vld [vmem:[%s316 + $0x140] sm:%s309]
                  %407 = vst [vmem:[%s317 + $0xb0] sm:%s309] %v406
                  %v408 = vld [vmem:[%s316 + $0x144] sm:%s309]
                  %409 = vst [vmem:[%s317 + $0xb4] sm:%s309] %v408
                  %v410 = vld [vmem:[%s316 + $0x148] sm:%s309]
                  %411 = vst [vmem:[%s317 + $0xb8] sm:%s309] %v410
                  %v412 = vld [vmem:[%s316 + $0x14c] sm:%s309]
                  %413 = vst [vmem:[%s317 + $0xbc] sm:%s309] %v412
                  %v414 = vld [vmem:[%s316 + $0x150] sm:%s309]
                  %415 = vst [vmem:[%s317 + $0xc0] sm:%s309] %v414
                  %v416 = vld [vmem:[%s316 + $0x154] sm:%s309]
                  %417 = vst [vmem:[%s317 + $0xc4] sm:%s309] %v416
                  %v418 = vld [vmem:[%s316 + $0x158] sm:%s309]
                  %419 = vst [vmem:[%s317 + $0xc8] sm:%s309] %v418
                  %v420 = vld [vmem:[%s316 + $0x15c] sm:%s309]
                  %421 = vst [vmem:[%s317 + $0xcc] sm:%s309] %v420
                  %v422 = vld [vmem:[%s316 + $0x160] sm:%s309]
                  %423 = vst [vmem:[%s317 + $0xd0] sm:%s309] %v422
                  %v424 = vld [vmem:[%s316 + $0x164] sm:%s309]
                  %425 = vst [vmem:[%s317 + $0xd4] sm:%s309] %v424
                  %v426 = vld [vmem:[%s316 + $0x1b0] sm:%s309]
                  %427 = vst [vmem:[%s317 + $0xd8] sm:%s309] %v426
                  %v428 = vld [vmem:[%s316 + $0x1b4] sm:%s309]
                  %429 = vst [vmem:[%s317 + $0xdc] sm:%s309] %v428
                  %v430 = vld [vmem:[%s316 + $0x1b8] sm:%s309]
                  %431 = vst [vmem:[%s317 + $0xe0] sm:%s309] %v430
                  %v432 = vld [vmem:[%s316 + $0x1bc] sm:%s309]
                  %433 = vst [vmem:[%s317 + $0xe4] sm:%s309] %v432
                  %v434 = vld [vmem:[%s316 + $0x1c0] sm:%s309]
                  %435 = vst [vmem:[%s317 + $0xe8] sm:%s309] %v434
                  %v436 = vld [vmem:[%s316 + $0x1c4] sm:%s309]
                  %437 = vst [vmem:[%s317 + $0xec] sm:%s309] %v436
                  %v438 = vld [vmem:[%s316 + $0x1c8] sm:%s309]
                  %439 = vst [vmem:[%s317 + $0xf0] sm:%s309] %v438
                  %v440 = vld [vmem:[%s316 + $0x1cc] sm:%s309]
                  %441 = vst [vmem:[%s317 + $0xf4] sm:%s309] %v440
                  %v442 = vld [vmem:[%s316 + $0x1d0] sm:%s309]
                  %443 = vst [vmem:[%s317 + $0xf8] sm:%s309] %v442
                  %v444 = vld [vmem:[%s316 + $0x1d4] sm:%s309]
                  %445 = vst [vmem:[%s317 + $0xfc] sm:%s309] %v444
                  %v446 = vld [vmem:[%s316 + $0x1d8] sm:%s309]
                  %447 = vst [vmem:[%s317 + $0x100] sm:%s309] %v446
                  %v448 = vld [vmem:[%s316 + $0x1dc] sm:%s309]
                  %449 = vst [vmem:[%s317 + $0x104] sm:%s309] %v448
                  %v450 = vld [vmem:[%s316 + $0x1e0] sm:%s309]
                  %451 = vst [vmem:[%s317 + $0x108] sm:%s309] %v450
                  %v452 = vld [vmem:[%s316 + $0x1e4] sm:%s309]
                  %453 = vst [vmem:[%s317 + $0x10c] sm:%s309] %v452
                  %v454 = vld [vmem:[%s316 + $0x1e8] sm:%s309]
                  %455 = vst [vmem:[%s317 + $0x110] sm:%s309] %v454
                  %v456 = vld [vmem:[%s316 + $0x1ec] sm:%s309]
                  %457 = vst [vmem:[%s317 + $0x114] sm:%s309] %v456
                  %v458 = vld [vmem:[%s316 + $0x1f0] sm:%s309]
                  %459 = vst [vmem:[%s317 + $0x118] sm:%s309] %v458
                  %v460 = vld [vmem:[%s316 + $0x1f4] sm:%s309]
                  %461 = vst [vmem:[%s317 + $0x11c] sm:%s309] %v460
                $region63: #{net_forward.3} parent=50 // loop_footer
                  %s315 = sadd.s32 1, %s311
                $region64: #{net_forward.3} parent=50 // loop_footer_branch
                  %310 = sbr.rel target = $region60
                $region65: #{net_forward.3} parent=50 // loop_exit
                  _
              $region51: #{net_forward.3} parent=35 // pred_fallthru
                _
            $region36: #{net_forward.3} parent=31 // pred_fallthru
              _
            // Predicated region
            $region37: #{net_forward.3} parent=31 // pred_check
              _
            $region38: #{net_forward.3} parent=31 // pred_check_branch
              %143 = sbr.rel (0) target = $region40
            $region39: #{net_forward.3} parent=31 // pred_region
              %s145 = ssub.s32 16, 1
              loop: start=0, step=1, limit=1
              $region41: #{net_forward.3} parent=39 // loop_pre_header
                _
              $region42: #{net_forward.3} parent=39 // loop_header
                %s147 = sphi 0, %s151
                %p148 = scmp.ge.s32.totalorder %s147, 1
                %s152 = sphi %s137, %s137
                %s153 = sphi %s134, %s134
              $region43: #{net_forward.3} parent=39 // loop_header_branch
                %150 = sbr.rel (%p148) target = $region47
              $region44: #{net_forward.3} parent=39 // loop_body
                %v154 = vld [vmem:[%s152] sm:%s145]
                %155 = vst [vmem:[%s153] sm:%s145] %v154
                %v156 = vld [vmem:[%s152 + $0x4] sm:%s145]
                %157 = vst [vmem:[%s153 + $0x4] sm:%s145] %v156
                %v158 = vld [vmem:[%s152 + $0x8] sm:%s145]
                %159 = vst [vmem:[%s153 + $0x8] sm:%s145] %v158
                %v160 = vld [vmem:[%s152 + $0xc] sm:%s145]
                %161 = vst [vmem:[%s153 + $0xc] sm:%s145] %v160
                %v162 = vld [vmem:[%s152 + $0x10] sm:%s145]
                %163 = vst [vmem:[%s153 + $0x10] sm:%s145] %v162
                %v164 = vld [vmem:[%s152 + $0x14] sm:%s145]
                %165 = vst [vmem:[%s153 + $0x14] sm:%s145] %v164
                %v166 = vld [vmem:[%s152 + $0x18] sm:%s145]
                %167 = vst [vmem:[%s153 + $0x18] sm:%s145] %v166
                %v168 = vld [vmem:[%s152 + $0x1c] sm:%s145]
                %169 = vst [vmem:[%s153 + $0x1c] sm:%s145] %v168
                %v170 = vld [vmem:[%s152 + $0x20] sm:%s145]
                %171 = vst [vmem:[%s153 + $0x20] sm:%s145] %v170
                %v172 = vld [vmem:[%s152 + $0x24] sm:%s145]
                %173 = vst [vmem:[%s153 + $0x24] sm:%s145] %v172
                %v174 = vld [vmem:[%s152 + $0x28] sm:%s145]
                %175 = vst [vmem:[%s153 + $0x28] sm:%s145] %v174
                %v176 = vld [vmem:[%s152 + $0x2c] sm:%s145]
                %177 = vst [vmem:[%s153 + $0x2c] sm:%s145] %v176
                %v178 = vld [vmem:[%s152 + $0x30] sm:%s145]
                %179 = vst [vmem:[%s153 + $0x30] sm:%s145] %v178
                %v180 = vld [vmem:[%s152 + $0x34] sm:%s145]
                %181 = vst [vmem:[%s153 + $0x34] sm:%s145] %v180
                %v182 = vld [vmem:[%s152 + $0x38] sm:%s145]
                %183 = vst [vmem:[%s153 + $0x38] sm:%s145] %v182
                %v184 = vld [vmem:[%s152 + $0x3c] sm:%s145]
                %185 = vst [vmem:[%s153 + $0x3c] sm:%s145] %v184
                %v186 = vld [vmem:[%s152 + $0x40] sm:%s145]
                %187 = vst [vmem:[%s153 + $0x40] sm:%s145] %v186
                %v188 = vld [vmem:[%s152 + $0x44] sm:%s145]
                %189 = vst [vmem:[%s153 + $0x44] sm:%s145] %v188
                %v190 = vld [vmem:[%s152 + $0x90] sm:%s145]
                %191 = vst [vmem:[%s153 + $0x48] sm:%s145] %v190
                %v192 = vld [vmem:[%s152 + $0x94] sm:%s145]
                %193 = vst [vmem:[%s153 + $0x4c] sm:%s145] %v192
                %v194 = vld [vmem:[%s152 + $0x98] sm:%s145]
                %195 = vst [vmem:[%s153 + $0x50] sm:%s145] %v194
                %v196 = vld [vmem:[%s152 + $0x9c] sm:%s145]
                %197 = vst [vmem:[%s153 + $0x54] sm:%s145] %v196
                %v198 = vld [vmem:[%s152 + $0xa0] sm:%s145]
                %199 = vst [vmem:[%s153 + $0x58] sm:%s145] %v198
                %v200 = vld [vmem:[%s152 + $0xa4] sm:%s145]
                %201 = vst [vmem:[%s153 + $0x5c] sm:%s145] %v200
                %v202 = vld [vmem:[%s152 + $0xa8] sm:%s145]
                %203 = vst [vmem:[%s153 + $0x60] sm:%s145] %v202
                %v204 = vld [vmem:[%s152 + $0xac] sm:%s145]
                %205 = vst [vmem:[%s153 + $0x64] sm:%s145] %v204
                %v206 = vld [vmem:[%s152 + $0xb0] sm:%s145]
                %207 = vst [vmem:[%s153 + $0x68] sm:%s145] %v206
                %v208 = vld [vmem:[%s152 + $0xb4] sm:%s145]
                %209 = vst [vmem:[%s153 + $0x6c] sm:%s145] %v208
                %v210 = vld [vmem:[%s152 + $0xb8] sm:%s145]
                %211 = vst [vmem:[%s153 + $0x70] sm:%s145] %v210
                %v212 = vld [vmem:[%s152 + $0xbc] sm:%s145]
                %213 = vst [vmem:[%s153 + $0x74] sm:%s145] %v212
                %v214 = vld [vmem:[%s152 + $0xc0] sm:%s145]
                %215 = vst [vmem:[%s153 + $0x78] sm:%s145] %v214
                %v216 = vld [vmem:[%s152 + $0xc4] sm:%s145]
                %217 = vst [vmem:[%s153 + $0x7c] sm:%s145] %v216
                %v218 = vld [vmem:[%s152 + $0xc8] sm:%s145]
                %219 = vst [vmem:[%s153 + $0x80] sm:%s145] %v218
                %v220 = vld [vmem:[%s152 + $0xcc] sm:%s145]
                %221 = vst [vmem:[%s153 + $0x84] sm:%s145] %v220
                %v222 = vld [vmem:[%s152 + $0xd0] sm:%s145]
                %223 = vst [vmem:[%s153 + $0x88] sm:%s145] %v222
                %v224 = vld [vmem:[%s152 + $0xd4] sm:%s145]
                %225 = vst [vmem:[%s153 + $0x8c] sm:%s145] %v224
                %v226 = vld [vmem:[%s152 + $0x120] sm:%s145]
                %227 = vst [vmem:[%s153 + $0x90] sm:%s145] %v226
                %v228 = vld [vmem:[%s152 + $0x124] sm:%s145]
                %229 = vst [vmem:[%s153 + $0x94] sm:%s145] %v228
                %v230 = vld [vmem:[%s152 + $0x128] sm:%s145]
                %231 = vst [vmem:[%s153 + $0x98] sm:%s145] %v230
                %v232 = vld [vmem:[%s152 + $0x12c] sm:%s145]
                %233 = vst [vmem:[%s153 + $0x9c] sm:%s145] %v232
                %v234 = vld [vmem:[%s152 + $0x130] sm:%s145]
                %235 = vst [vmem:[%s153 + $0xa0] sm:%s145] %v234
                %v236 = vld [vmem:[%s152 + $0x134] sm:%s145]
                %237 = vst [vmem:[%s153 + $0xa4] sm:%s145] %v236
                %v238 = vld [vmem:[%s152 + $0x138] sm:%s145]
                %239 = vst [vmem:[%s153 + $0xa8] sm:%s145] %v238
                %v240 = vld [vmem:[%s152 + $0x13c] sm:%s145]
                %241 = vst [vmem:[%s153 + $0xac] sm:%s145] %v240
                %v242 = vld [vmem:[%s152 + $0x140] sm:%s145]
                %243 = vst [vmem:[%s153 + $0xb0] sm:%s145] %v242
                %v244 = vld [vmem:[%s152 + $0x144] sm:%s145]
                %245 = vst [vmem:[%s153 + $0xb4] sm:%s145] %v244
                %v246 = vld [vmem:[%s152 + $0x148] sm:%s145]
                %247 = vst [vmem:[%s153 + $0xb8] sm:%s145] %v246
                %v248 = vld [vmem:[%s152 + $0x14c] sm:%s145]
                %249 = vst [vmem:[%s153 + $0xbc] sm:%s145] %v248
                %v250 = vld [vmem:[%s152 + $0x150] sm:%s145]
                %251 = vst [vmem:[%s153 + $0xc0] sm:%s145] %v250
                %v252 = vld [vmem:[%s152 + $0x154] sm:%s145]
                %253 = vst [vmem:[%s153 + $0xc4] sm:%s145] %v252
                %v254 = vld [vmem:[%s152 + $0x158] sm:%s145]
                %255 = vst [vmem:[%s153 + $0xc8] sm:%s145] %v254
                %v256 = vld [vmem:[%s152 + $0x15c] sm:%s145]
                %257 = vst [vmem:[%s153 + $0xcc] sm:%s145] %v256
                %v258 = vld [vmem:[%s152 + $0x160] sm:%s145]
                %259 = vst [vmem:[%s153 + $0xd0] sm:%s145] %v258
                %v260 = vld [vmem:[%s152 + $0x164] sm:%s145]
                %261 = vst [vmem:[%s153 + $0xd4] sm:%s145] %v260
                %v262 = vld [vmem:[%s152 + $0x1b0] sm:%s145]
                %263 = vst [vmem:[%s153 + $0xd8] sm:%s145] %v262
                %v264 = vld [vmem:[%s152 + $0x1b4] sm:%s145]
                %265 = vst [vmem:[%s153 + $0xdc] sm:%s145] %v264
                %v266 = vld [vmem:[%s152 + $0x1b8] sm:%s145]
                %267 = vst [vmem:[%s153 + $0xe0] sm:%s145] %v266
                %v268 = vld [vmem:[%s152 + $0x1bc] sm:%s145]
                %269 = vst [vmem:[%s153 + $0xe4] sm:%s145] %v268
                %v270 = vld [vmem:[%s152 + $0x1c0] sm:%s145]
                %271 = vst [vmem:[%s153 + $0xe8] sm:%s145] %v270
                %v272 = vld [vmem:[%s152 + $0x1c4] sm:%s145]
                %273 = vst [vmem:[%s153 + $0xec] sm:%s145] %v272
                %v274 = vld [vmem:[%s152 + $0x1c8] sm:%s145]
                %275 = vst [vmem:[%s153 + $0xf0] sm:%s145] %v274
                %v276 = vld [vmem:[%s152 + $0x1cc] sm:%s145]
                %277 = vst [vmem:[%s153 + $0xf4] sm:%s145] %v276
                %v278 = vld [vmem:[%s152 + $0x1d0] sm:%s145]
                %279 = vst [vmem:[%s153 + $0xf8] sm:%s145] %v278
                %v280 = vld [vmem:[%s152 + $0x1d4] sm:%s145]
                %281 = vst [vmem:[%s153 + $0xfc] sm:%s145] %v280
                %v282 = vld [vmem:[%s152 + $0x1d8] sm:%s145]
                %283 = vst [vmem:[%s153 + $0x100] sm:%s145] %v282
                %v284 = vld [vmem:[%s152 + $0x1dc] sm:%s145]
                %285 = vst [vmem:[%s153 + $0x104] sm:%s145] %v284
                %v286 = vld [vmem:[%s152 + $0x1e0] sm:%s145]
                %287 = vst [vmem:[%s153 + $0x108] sm:%s145] %v286
                %v288 = vld [vmem:[%s152 + $0x1e4] sm:%s145]
                %289 = vst [vmem:[%s153 + $0x10c] sm:%s145] %v288
                %v290 = vld [vmem:[%s152 + $0x1e8] sm:%s145]
                %291 = vst [vmem:[%s153 + $0x110] sm:%s145] %v290
                %v292 = vld [vmem:[%s152 + $0x1ec] sm:%s145]
                %293 = vst [vmem:[%s153 + $0x114] sm:%s145] %v292
                %v294 = vld [vmem:[%s152 + $0x1f0] sm:%s145]
                %295 = vst [vmem:[%s153 + $0x118] sm:%s145] %v294
                %v296 = vld [vmem:[%s152 + $0x1f4] sm:%s145]
                %297 = vst [vmem:[%s153 + $0x11c] sm:%s145] %v296
              $region45: #{net_forward.3} parent=39 // loop_footer
                %s151 = sadd.s32 1, %s147
              $region46: #{net_forward.3} parent=39 // loop_footer_branch
                %146 = sbr.rel target = $region42
              $region47: #{net_forward.3} parent=39 // loop_exit
                _
            $region40: #{net_forward.3} parent=31 // pred_fallthru
              _
          $region32: #{net_forward.3} parent=27 // pred_fallthru
            _
          %462 = vnop
        $region28: #{net_forward.3} parent=23 // pred_fallthru
          _
      $region24: #{net_forward.3} parent=5 // pred_fallthru
        _
      %p463 = scmp.le.s32.totalorder 1, %s9
      %p464 = scmp.lt.s32.totalorder %s9, 3
      %p465 = pnand %p463, %p464
      %p466 = pneg %p465
      // Predicated region
      $region66: #{net_forward.3} parent=5 // pred_check
        _
      $region67: #{net_forward.3} parent=5 // pred_check_branch
        %468 = sbr.rel (%p465) target = $region69
      $region68: #{net_forward.3} parent=5 // pred_region
        %s469 = ssub.s32 %s9, 1
        %s470 = sand.u32 %s22, 1
        %s471 = sand.u32 %s22, 1
        %s472 = smul.addr %s471, 288
        %s473 = scalar_lea.vmem [#allocation2], %s472
        // Predicated region
        $region70: #{net_forward.3} parent=68 // pred_check
          %p474 = pneg %p35
        $region71: #{net_forward.3} parent=68 // pred_check_branch
          %476 = sbr.rel (%p474) target = $region73
        $region72: #{net_forward.3} parent=68 // pred_region
          _
        $region73: #{net_forward.3} parent=68 // pred_fallthru
          _
        %s477 = sand.u32 %s22, 1
        %s478 = sand.u32 %s22, 1
        %s479 = smul.addr %s478, 288
        %s480 = scalar_lea.vmem [#allocation2], %s479
        %p481 = pneg %p35
        %p482 = pneg %p32
        %p483 = pneg %p56
        %p484 = pneg %p53
        %p485 = pneg %p77
        %p486 = pneg %p74
        %p487 = pneg %p103
        %p488 = pneg %p100
        %s489 = smul.u32 18, %s14
        %p490 = scmp.lt.s32.totalorder %s489, 35
        %s491 = scalar_select %p490, %s489, 35
        %s492 = smul.addr %s491, 4
        %s493 = scalar_lea.vmem %s3, %s492
        %s494 = smul.u32 18, %s14
        %s495 = smul.u32 18, %s14
        %p496 = scmp.lt.s32.totalorder %s495, 35
        %s497 = scalar_select %p496, %s495, 35
        %s498 = smul.addr %s497, 4
        %s499 = scalar_lea.vmem %s3, %s498
        %s500 = smul.u32 18, %s14
        %v502 = vld [vmem:[%s473] sm:$0xf]
        %v503 = vld [vmem:[%s473 + $0x4] sm:$0xf]
        %v504 = vld [vmem:[%s473 + $0x8] sm:$0xf]
        %v505 = vld [vmem:[%s473 + $0xc] sm:$0xf]
        %v506 = vld [vmem:[%s473 + $0x10] sm:$0xf]
        %v507 = vld [vmem:[%s473 + $0x14] sm:$0xf]
        %v508 = vld [vmem:[%s473 + $0x18] sm:$0xf]
        %v509 = vld [vmem:[%s473 + $0x1c] sm:$0xf]
        %v510 = vld [vmem:[%s473 + $0x20] sm:$0xf]
        %v511 = vld [vmem:[%s473 + $0x24] sm:$0xf]
        %v512 = vld [vmem:[%s473 + $0x28] sm:$0xf]
        %v513 = vld [vmem:[%s473 + $0x2c] sm:$0xf]
        %v514 = vld [vmem:[%s473 + $0x30] sm:$0xf]
        %v515 = vld [vmem:[%s473 + $0x34] sm:$0xf]
        %v516 = vld [vmem:[%s473 + $0x38] sm:$0xf]
        %v517 = vld [vmem:[%s473 + $0x3c] sm:$0xf]
        %v518 = vld [vmem:[%s473 + $0x40] sm:$0xf]
        %v519 = vld [vmem:[%s473 + $0x44] sm:$0xf]
        %v520 = vld [vmem:[%s473 + $0x48] sm:$0xf]
        %v521 = vld [vmem:[%s473 + $0x4c] sm:$0xf]
        %v522 = vld [vmem:[%s473 + $0x50] sm:$0xf]
        %v523 = vld [vmem:[%s473 + $0x54] sm:$0xf]
        %v524 = vld [vmem:[%s473 + $0x58] sm:$0xf]
        %v525 = vld [vmem:[%s473 + $0x5c] sm:$0xf]
        %v526 = vld [vmem:[%s473 + $0x60] sm:$0xf]
        %v527 = vld [vmem:[%s473 + $0x64] sm:$0xf]
        %v528 = vld [vmem:[%s473 + $0x68] sm:$0xf]
        %v529 = vld [vmem:[%s473 + $0x6c] sm:$0xf]
        %v530 = vld [vmem:[%s473 + $0x70] sm:$0xf]
        %v531 = vld [vmem:[%s473 + $0x74] sm:$0xf]
        %v532 = vld [vmem:[%s473 + $0x78] sm:$0xf]
        %v533 = vld [vmem:[%s473 + $0x7c] sm:$0xf]
        %v534 = vld [vmem:[%s473 + $0x80] sm:$0xf]
        %v535 = vld [vmem:[%s473 + $0x84] sm:$0xf]
        %v536 = vld [vmem:[%s473 + $0x88] sm:$0xf]
        %v537 = vld [vmem:[%s473 + $0x8c] sm:$0xf]
        %v538 = vld [vmem:[%s473 + $0x90] sm:$0xf]
        %v539 = vld [vmem:[%s473 + $0x94] sm:$0xf]
        %v540 = vld [vmem:[%s473 + $0x98] sm:$0xf]
        %v541 = vld [vmem:[%s473 + $0x9c] sm:$0xf]
        %v542 = vld [vmem:[%s473 + $0xa0] sm:$0xf]
        %v543 = vld [vmem:[%s473 + $0xa4] sm:$0xf]
        %v544 = vld [vmem:[%s473 + $0xa8] sm:$0xf]
        %v545 = vld [vmem:[%s473 + $0xac] sm:$0xf]
        %v546 = vld [vmem:[%s473 + $0xb0] sm:$0xf]
        %v547 = vld [vmem:[%s473 + $0xb4] sm:$0xf]
        %v548 = vld [vmem:[%s473 + $0xb8] sm:$0xf]
        %v549 = vld [vmem:[%s473 + $0xbc] sm:$0xf]
        %v550 = vld [vmem:[%s473 + $0xc0] sm:$0xf]
        %v551 = vld [vmem:[%s473 + $0xc4] sm:$0xf]
        %v552 = vld [vmem:[%s473 + $0xc8] sm:$0xf]
        %v553 = vld [vmem:[%s473 + $0xcc] sm:$0xf]
        %v554 = vld [vmem:[%s473 + $0xd0] sm:$0xf]
        %v555 = vld [vmem:[%s473 + $0xd4] sm:$0xf]
        %v556 = vld [vmem:[%s473 + $0xd8] sm:$0xf]
        %v557 = vld [vmem:[%s473 + $0xdc] sm:$0xf]
        %v558 = vld [vmem:[%s473 + $0xe0] sm:$0xf]
        %v559 = vld [vmem:[%s473 + $0xe4] sm:$0xf]
        %v560 = vld [vmem:[%s473 + $0xe8] sm:$0xf]
        %v561 = vld [vmem:[%s473 + $0xec] sm:$0xf]
        %v562 = vld [vmem:[%s473 + $0xf0] sm:$0xf]
        %v563 = vld [vmem:[%s473 + $0xf4] sm:$0xf]
        %v564 = vld [vmem:[%s473 + $0xf8] sm:$0xf]
        %v565 = vld [vmem:[%s473 + $0xfc] sm:$0xf]
        %v566 = vld [vmem:[%s473 + $0x100] sm:$0xf]
        %v567 = vld [vmem:[%s473 + $0x104] sm:$0xf]
        %v568 = vld [vmem:[%s473 + $0x108] sm:$0xf]
        %v569 = vld [vmem:[%s473 + $0x10c] sm:$0xf]
        %v570 = vld [vmem:[%s473 + $0x110] sm:$0xf]
        %v571 = vld [vmem:[%s473 + $0x114] sm:$0xf]
        %v572 = vld [vmem:[%s473 + $0x118] sm:$0xf]
        %v573 = vld [vmem:[%s473 + $0x11c] sm:$0xf]
        %v574 = vld [vmem:[%s1] sm:$0xf]
        %v575 = vld [vmem:[%s1 + $0x4] sm:$0xf]
        %v576 = vld [vmem:[%s1 + $0x8] sm:$0xf]
        %v577 = vld [vmem:[%s1 + $0xc] sm:$0x1]
        %v650 = vunpack.c.l.b16 %v502
        %v651 = vunpack.c.l.b16 %v503
        %v652 = vunpack.c.l.b16 %v504
        %v653 = vunpack.c.l.b16 %v505
        %v654 = vunpack.c.l.b16 %v506
        %v655 = vunpack.c.l.b16 %v507
        %v656 = vunpack.c.l.b16 %v508
        %v657 = vunpack.c.l.b16 %v509
        %v658 = vunpack.c.l.b16 %v510
        %v659 = vunpack.c.l.b16 %v511
        %v660 = vunpack.c.l.b16 %v512
        %v661 = vunpack.c.l.b16 %v513
        %v662 = vunpack.c.l.b16 %v514
        %v663 = vunpack.c.l.b16 %v515
        %v664 = vunpack.c.l.b16 %v516
        %v665 = vunpack.c.l.b16 %v517
        %v666 = vunpack.c.l.b16 %v518
        %v667 = vunpack.c.l.b16 %v519
        %v668 = vunpack.c.l.b16 %v520
        %v669 = vunpack.c.l.b16 %v521
        %v670 = vunpack.c.l.b16 %v522
        %v671 = vunpack.c.l.b16 %v523
        %v672 = vunpack.c.l.b16 %v524
        %v673 = vunpack.c.l.b16 %v525
        %v674 = vunpack.c.l.b16 %v526
        %v675 = vunpack.c.l.b16 %v527
        %v676 = vunpack.c.l.b16 %v528
        %v677 = vunpack.c.l.b16 %v529
        %v678 = vunpack.c.l.b16 %v530
        %v679 = vunpack.c.l.b16 %v531
        %v680 = vunpack.c.l.b16 %v532
        %v681 = vunpack.c.l.b16 %v533
        %v682 = vunpack.c.l.b16 %v534
        %v683 = vunpack.c.l.b16 %v535
        %v684 = vunpack.c.l.b16 %v536
        %v685 = vunpack.c.l.b16 %v537
        %v686 = vunpack.c.l.b16 %v538
        %v687 = vunpack.c.l.b16 %v539
        %v688 = vunpack.c.l.b16 %v540
        %v689 = vunpack.c.l.b16 %v541
        %v690 = vunpack.c.l.b16 %v542
        %v691 = vunpack.c.l.b16 %v543
        %v692 = vunpack.c.l.b16 %v544
        %v693 = vunpack.c.l.b16 %v545
        %v694 = vunpack.c.l.b16 %v546
        %v695 = vunpack.c.l.b16 %v547
        %v696 = vunpack.c.l.b16 %v548
        %v697 = vunpack.c.l.b16 %v549
        %v698 = vunpack.c.l.b16 %v550
        %v699 = vunpack.c.l.b16 %v551
        %v700 = vunpack.c.l.b16 %v552
        %v701 = vunpack.c.l.b16 %v553
        %v702 = vunpack.c.l.b16 %v554
        %v703 = vunpack.c.l.b16 %v555
        %v704 = vunpack.c.l.b16 %v556
        %v705 = vunpack.c.l.b16 %v557
        %v706 = vunpack.c.l.b16 %v558
        %v707 = vunpack.c.l.b16 %v559
        %v708 = vunpack.c.l.b16 %v560
        %v709 = vunpack.c.l.b16 %v561
        %v710 = vunpack.c.l.b16 %v562
        %v711 = vunpack.c.l.b16 %v563
        %v712 = vunpack.c.l.b16 %v564
        %v713 = vunpack.c.l.b16 %v565
        %v714 = vunpack.c.l.b16 %v566
        %v715 = vunpack.c.l.b16 %v567
        %v716 = vunpack.c.l.b16 %v568
        %v717 = vunpack.c.l.b16 %v569
        %v718 = vunpack.c.l.b16 %v570
        %v719 = vunpack.c.l.b16 %v571
        %v720 = vunpack.c.l.b16 %v572
        %v721 = vunpack.c.l.b16 %v573
        %v722 = vpack.c.b16 %v651, %v650
        %v723 = vpack.c.b16 %v653, %v652
        %v724 = vpack.c.b16 %v655, %v654
        %v725 = vpack.c.b16 %v657, %v656
        %v726 = vpack.c.b16 %v659, %v658
        %v727 = vpack.c.b16 %v661, %v660
        %v728 = vpack.c.b16 %v663, %v662
        %v729 = vpack.c.b16 %v665, %v664
        %v730 = vpack.c.b16 %v667, %v666
        %v731 = vpack.c.b16 %v669, %v668
        %v732 = vpack.c.b16 %v671, %v670
        %v733 = vpack.c.b16 %v673, %v672
        %v734 = vpack.c.b16 %v675, %v674
        %v735 = vpack.c.b16 %v677, %v676
        %v736 = vpack.c.b16 %v679, %v678
        %v737 = vpack.c.b16 %v681, %v680
        %v738 = vpack.c.b16 %v683, %v682
        %v739 = vpack.c.b16 %v685, %v684
        %v740 = vpack.c.b16 %v687, %v686
        %v741 = vpack.c.b16 %v689, %v688
        %v742 = vpack.c.b16 %v691, %v690
        %v743 = vpack.c.b16 %v693, %v692
        %v744 = vpack.c.b16 %v695, %v694
        %v745 = vpack.c.b16 %v697, %v696
        %v746 = vpack.c.b16 %v699, %v698
        %v747 = vpack.c.b16 %v701, %v700
        %v748 = vpack.c.b16 %v703, %v702
        %v749 = vpack.c.b16 %v705, %v704
        %v750 = vpack.c.b16 %v707, %v706
        %v751 = vpack.c.b16 %v709, %v708
        %v752 = vpack.c.b16 %v711, %v710
        %v753 = vpack.c.b16 %v713, %v712
        %v754 = vpack.c.b16 %v715, %v714
        %v755 = vpack.c.b16 %v717, %v716
        %v756 = vpack.c.b16 %v719, %v718
        %v757 = vpack.c.b16 %v721, %v720
        %v762 = vunpack.c.l.b16 %v574
        %v763 = vunpack.c.l.b16 %v575
        %v764 = vunpack.c.l.b16 %v576
        %v765 = vunpack.c.l.b16 %v577
        %v766 = vpack.c.b16 %v763, %v762
        %v767 = vpack.c.b16 %v765, %v764
        %vm769 = vcmask 203776
        %v771 = vsel %vm769, %v722, 0
        %v774 = vsel %vm769, %v723, 0
        %v777 = vsel %vm769, %v724, 0
        %v780 = vsel %vm769, %v725, 0
        %v783 = vsel %vm769, %v726, 0
        %v786 = vsel %vm769, %v727, 0
        %v789 = vsel %vm769, %v728, 0
        %v792 = vsel %vm769, %v729, 0
        %v795 = vsel %vm769, %v730, 0
        %v798 = vsel %vm769, %v731, 0
        %v801 = vsel %vm769, %v732, 0
        %v804 = vsel %vm769, %v733, 0
        %v807 = vsel %vm769, %v734, 0
        %v810 = vsel %vm769, %v735, 0
        %v813 = vsel %vm769, %v736, 0
        %v816 = vsel %vm769, %v737, 0
        %v819 = vsel %vm769, %v738, 0
        %v822 = vsel %vm769, %v739, 0
        %v825 = vsel %vm769, %v740, 0
        %v828 = vsel %vm769, %v741, 0
        %v831 = vsel %vm769, %v742, 0
        %v834 = vsel %vm769, %v743, 0
        %v837 = vsel %vm769, %v744, 0
        %v840 = vsel %vm769, %v745, 0
        %v843 = vsel %vm769, %v746, 0
        %v846 = vsel %vm769, %v747, 0
        %v849 = vsel %vm769, %v748, 0
        %v852 = vsel %vm769, %v749, 0
        %v855 = vsel %vm769, %v750, 0
        %v858 = vsel %vm769, %v751, 0
        %v861 = vsel %vm769, %v752, 0
        %v864 = vsel %vm769, %v753, 0
        %v867 = vsel %vm769, %v754, 0
        %v870 = vsel %vm769, %v755, 0
        %v873 = vsel %vm769, %v756, 0
        %v876 = vsel %vm769, %v757, 0
        %vm878 = vcmask 1043456
        %vm879 = vcmask 1044480
        %v880 = vsel %vm878, 4294967295, 65535
        %v881 = vsel %vm879, %v880, 0
        %v883 = vand.u32 %v767, %v881
        %885 = vmatpush.bf16.msra.mxu0 0
        %886 = vmatpush.bf16.msra.mxu0 0
        %887 = vmatpush.bf16.msra.mxu0 0
        %888 = vmatpush.bf16.msra.mxu0 0
        %889 = vmatpush.bf16.msra.mxu0 0
        %890 = vmatpush.bf16.msra.mxu0 0
        %891 = vmatpush.bf16.msra.mxu0 %v883
        %892 = vmatpush.bf16.msra.mxu0 %v766
        %893 = vmatmul.bf16.gmra.mxu0 %v771
        %v894 = vpop.f32.mrf.mxu0
        %v895 = vadd.f32 0.0, %v894
        %v896 = vpop.f32.mrf.mxu0
        %v897 = vadd.f32 0.0, %v896
        %898 = vmatmul.bf16.gmra.mxu0 %v774
        %v899 = vpop.f32.mrf.mxu0
        %v900 = vadd.f32 0.0, %v899
        %v901 = vpop.f32.mrf.mxu0
        %v902 = vadd.f32 0.0, %v901
        %903 = vmatmul.bf16.gmra.mxu0 %v777
        %v904 = vpop.f32.mrf.mxu0
        %v905 = vadd.f32 0.0, %v904
        %v906 = vpop.f32.mrf.mxu0
        %v907 = vadd.f32 0.0, %v906
        %908 = vmatmul.bf16.gmra.mxu0 %v780
        %v909 = vpop.f32.mrf.mxu0
        %v910 = vadd.f32 0.0, %v909
        %v911 = vpop.f32.mrf.mxu0
        %v912 = vadd.f32 0.0, %v911
        %913 = vmatmul.bf16.gmra.mxu0 %v783
        %v914 = vpop.f32.mrf.mxu0
        %v915 = vadd.f32 0.0, %v914
        %v916 = vpop.f32.mrf.mxu0
        %v917 = vadd.f32 0.0, %v916
        %918 = vmatmul.bf16.gmra.mxu0 %v786
        %v919 = vpop.f32.mrf.mxu0
        %v920 = vadd.f32 0.0, %v919
        %v921 = vpop.f32.mrf.mxu0
        %v922 = vadd.f32 0.0, %v921
        %923 = vmatmul.bf16.gmra.mxu0 %v789
        %v924 = vpop.f32.mrf.mxu0
        %v925 = vadd.f32 0.0, %v924
        %v926 = vpop.f32.mrf.mxu0
        %v927 = vadd.f32 0.0, %v926
        %928 = vmatmul.bf16.gmra.mxu0 %v792
        %v929 = vpop.f32.mrf.mxu0
        %v930 = vadd.f32 0.0, %v929
        %v931 = vpop.f32.mrf.mxu0
        %v932 = vadd.f32 0.0, %v931
        %933 = vmatmul.bf16.gmra.mxu0 %v795
        %v934 = vpop.f32.mrf.mxu0
        %v935 = vadd.f32 0.0, %v934
        %v936 = vpop.f32.mrf.mxu0
        %v937 = vadd.f32 0.0, %v936
        %938 = vmatmul.bf16.gmra.mxu0 %v798
        %v939 = vpop.f32.mrf.mxu0
        %v940 = vadd.f32 0.0, %v939
        %v941 = vpop.f32.mrf.mxu0
        %v942 = vadd.f32 0.0, %v941
        %943 = vmatmul.bf16.gmra.mxu0 %v801
        %v944 = vpop.f32.mrf.mxu0
        %v945 = vadd.f32 0.0, %v944
        %v946 = vpop.f32.mrf.mxu0
        %v947 = vadd.f32 0.0, %v946
        %948 = vmatmul.bf16.gmra.mxu0 %v804
        %v949 = vpop.f32.mrf.mxu0
        %v950 = vadd.f32 0.0, %v949
        %v951 = vpop.f32.mrf.mxu0
        %v952 = vadd.f32 0.0, %v951
        %953 = vmatmul.bf16.gmra.mxu0 %v807
        %v954 = vpop.f32.mrf.mxu0
        %v955 = vadd.f32 0.0, %v954
        %v956 = vpop.f32.mrf.mxu0
        %v957 = vadd.f32 0.0, %v956
        %958 = vmatmul.bf16.gmra.mxu0 %v810
        %v959 = vpop.f32.mrf.mxu0
        %v960 = vadd.f32 0.0, %v959
        %v961 = vpop.f32.mrf.mxu0
        %v962 = vadd.f32 0.0, %v961
        %963 = vmatmul.bf16.gmra.mxu0 %v813
        %v964 = vpop.f32.mrf.mxu0
        %v965 = vadd.f32 0.0, %v964
        %v966 = vpop.f32.mrf.mxu0
        %v967 = vadd.f32 0.0, %v966
        %968 = vmatmul.bf16.gmra.mxu0 %v816
        %v969 = vpop.f32.mrf.mxu0
        %v970 = vadd.f32 0.0, %v969
        %v971 = vpop.f32.mrf.mxu0
        %v972 = vadd.f32 0.0, %v971
        %973 = vmatmul.bf16.gmra.mxu0 %v819
        %v974 = vpop.f32.mrf.mxu0
        %v975 = vadd.f32 0.0, %v974
        %v976 = vpop.f32.mrf.mxu0
        %v977 = vadd.f32 0.0, %v976
        %978 = vmatmul.bf16.gmra.mxu0 %v822
        %v979 = vpop.f32.mrf.mxu0
        %v980 = vadd.f32 0.0, %v979
        %v981 = vpop.f32.mrf.mxu0
        %v982 = vadd.f32 0.0, %v981
        %983 = vmatmul.bf16.gmra.mxu0 %v825
        %v984 = vpop.f32.mrf.mxu0
        %v985 = vadd.f32 0.0, %v984
        %v986 = vpop.f32.mrf.mxu0
        %v987 = vadd.f32 0.0, %v986
        %988 = vmatmul.bf16.gmra.mxu0 %v828
        %v989 = vpop.f32.mrf.mxu0
        %v990 = vadd.f32 0.0, %v989
        %v991 = vpop.f32.mrf.mxu0
        %v992 = vadd.f32 0.0, %v991
        %993 = vmatmul.bf16.gmra.mxu0 %v831
        %v994 = vpop.f32.mrf.mxu0
        %v995 = vadd.f32 0.0, %v994
        %v996 = vpop.f32.mrf.mxu0
        %v997 = vadd.f32 0.0, %v996
        %998 = vmatmul.bf16.gmra.mxu0 %v834
        %v999 = vpop.f32.mrf.mxu0
        %v1000 = vadd.f32 0.0, %v999
        %v1001 = vpop.f32.mrf.mxu0
        %v1002 = vadd.f32 0.0, %v1001
        %1003 = vmatmul.bf16.gmra.mxu0 %v837
        %v1004 = vpop.f32.mrf.mxu0
        %v1005 = vadd.f32 0.0, %v1004
        %v1006 = vpop.f32.mrf.mxu0
        %v1007 = vadd.f32 0.0, %v1006
        %1008 = vmatmul.bf16.gmra.mxu0 %v840
        %v1009 = vpop.f32.mrf.mxu0
        %v1010 = vadd.f32 0.0, %v1009
        %v1011 = vpop.f32.mrf.mxu0
        %v1012 = vadd.f32 0.0, %v1011
        %1013 = vmatmul.bf16.gmra.mxu0 %v843
        %v1014 = vpop.f32.mrf.mxu0
        %v1015 = vadd.f32 0.0, %v1014
        %v1016 = vpop.f32.mrf.mxu0
        %v1017 = vadd.f32 0.0, %v1016
        %1018 = vmatmul.bf16.gmra.mxu0 %v846
        %v1019 = vpop.f32.mrf.mxu0
        %v1020 = vadd.f32 0.0, %v1019
        %v1021 = vpop.f32.mrf.mxu0
        %v1022 = vadd.f32 0.0, %v1021
        %1023 = vmatmul.bf16.gmra.mxu0 %v849
        %v1024 = vpop.f32.mrf.mxu0
        %v1025 = vadd.f32 0.0, %v1024
        %v1026 = vpop.f32.mrf.mxu0
        %v1027 = vadd.f32 0.0, %v1026
        %1028 = vmatmul.bf16.gmra.mxu0 %v852
        %v1029 = vpop.f32.mrf.mxu0
        %v1030 = vadd.f32 0.0, %v1029
        %v1031 = vpop.f32.mrf.mxu0
        %v1032 = vadd.f32 0.0, %v1031
        %1033 = vmatmul.bf16.gmra.mxu0 %v855
        %v1034 = vpop.f32.mrf.mxu0
        %v1035 = vadd.f32 0.0, %v1034
        %v1036 = vpop.f32.mrf.mxu0
        %v1037 = vadd.f32 0.0, %v1036
        %1038 = vmatmul.bf16.gmra.mxu0 %v858
        %v1039 = vpop.f32.mrf.mxu0
        %v1040 = vadd.f32 0.0, %v1039
        %v1041 = vpop.f32.mrf.mxu0
        %v1042 = vadd.f32 0.0, %v1041
        %1043 = vmatmul.bf16.gmra.mxu0 %v861
        %v1044 = vpop.f32.mrf.mxu0
        %v1045 = vadd.f32 0.0, %v1044
        %v1046 = vpop.f32.mrf.mxu0
        %v1047 = vadd.f32 0.0, %v1046
        %1048 = vmatmul.bf16.gmra.mxu0 %v864
        %v1049 = vpop.f32.mrf.mxu0
        %v1050 = vadd.f32 0.0, %v1049
        %v1051 = vpop.f32.mrf.mxu0
        %v1052 = vadd.f32 0.0, %v1051
        %1053 = vmatmul.bf16.gmra.mxu0 %v867
        %v1054 = vpop.f32.mrf.mxu0
        %v1055 = vadd.f32 0.0, %v1054
        %v1056 = vpop.f32.mrf.mxu0
        %v1057 = vadd.f32 0.0, %v1056
        %1058 = vmatmul.bf16.gmra.mxu0 %v870
        %v1059 = vpop.f32.mrf.mxu0
        %v1060 = vadd.f32 0.0, %v1059
        %v1061 = vpop.f32.mrf.mxu0
        %v1062 = vadd.f32 0.0, %v1061
        %1063 = vmatmul.bf16.gmra.mxu0 %v873
        %v1064 = vpop.f32.mrf.mxu0
        %v1065 = vadd.f32 0.0, %v1064
        %v1066 = vpop.f32.mrf.mxu0
        %v1067 = vadd.f32 0.0, %v1066
        %1068 = vmatmul.bf16.gmra.mxu0 %v876
        %v1069 = vpop.f32.mrf.mxu0
        %v1070 = vadd.f32 0.0, %v1069
        %v1071 = vpop.f32.mrf.mxu0
        %v1072 = vadd.f32 0.0, %v1071
        %1073 = vdwg.mxu0
        %v1074 = vmax.f32 %v895, %v940
        %v1075 = vmax.f32 %v897, %v942
        %v1076 = vmax.f32 %v900, %v945
        %v1077 = vmax.f32 %v902, %v947
        %v1078 = vmax.f32 %v905, %v950
        %v1079 = vmax.f32 %v907, %v952
        %v1080 = vmax.f32 %v910, %v955
        %v1081 = vmax.f32 %v912, %v957
        %v1082 = vmax.f32 %v915, %v960
        %v1083 = vmax.f32 %v917, %v962
        %v1084 = vmax.f32 %v920, %v965
        %v1085 = vmax.f32 %v922, %v967
        %v1086 = vmax.f32 %v925, %v970
        %v1087 = vmax.f32 %v927, %v972
        %v1088 = vmax.f32 %v930, %v975
        %v1089 = vmax.f32 %v932, %v977
        %v1090 = vmax.f32 %v935, %v980
        %v1091 = vmax.f32 %v937, %v982
        %v1092 = vmax.f32 %v985, %v1030
        %v1093 = vmax.f32 %v987, %v1032
        %v1094 = vmax.f32 %v990, %v1035
        %v1095 = vmax.f32 %v992, %v1037
        %v1096 = vmax.f32 %v995, %v1040
        %v1097 = vmax.f32 %v997, %v1042
        %v1098 = vmax.f32 %v1000, %v1045
        %v1099 = vmax.f32 %v1002, %v1047
        %v1100 = vmax.f32 %v1005, %v1050
        %v1101 = vmax.f32 %v1007, %v1052
        %v1102 = vmax.f32 %v1010, %v1055
        %v1103 = vmax.f32 %v1012, %v1057
        %v1104 = vmax.f32 %v1015, %v1060
        %v1105 = vmax.f32 %v1017, %v1062
        %v1106 = vmax.f32 %v1020, %v1065
        %v1107 = vmax.f32 %v1022, %v1067
        %v1108 = vmax.f32 %v1025, %v1070
        %v1109 = vmax.f32 %v1027, %v1072
        %v1110 = vmax.f32 %v1074, %v1092
        %v1111 = vmax.f32 %v1075, %v1093
        %v1112 = vmax.f32 %v1076, %v1094
        %v1113 = vmax.f32 %v1077, %v1095
        %v1114 = vmax.f32 %v1078, %v1096
        %v1115 = vmax.f32 %v1079, %v1097
        %v1116 = vmax.f32 %v1080, %v1098
        %v1117 = vmax.f32 %v1081, %v1099
        %v1118 = vmax.f32 %v1082, %v1100
        %v1119 = vmax.f32 %v1083, %v1101
        %v1120 = vmax.f32 %v1084, %v1102
        %v1121 = vmax.f32 %v1085, %v1103
        %v1122 = vmax.f32 %v1086, %v1104
        %v1123 = vmax.f32 %v1087, %v1105
        %v1124 = vmax.f32 %v1088, %v1106
        %v1125 = vmax.f32 %v1089, %v1107
        %v1126 = vmax.f32 %v1090, %v1108
        %v1127 = vmax.f32 %v1091, %v1109
        %v1128 = vld [vmem:[%s2] sm:$0x1]
        %v1130 = vperm.slane %v1128, 0
        %v1132 = vadd.f32 %v1110, %v1130
        %v1133 = vadd.f32 %v1111, %v1130
        %v1134 = vadd.f32 %v1112, %v1130
        %v1135 = vadd.f32 %v1113, %v1130
        %v1136 = vadd.f32 %v1114, %v1130
        %v1137 = vadd.f32 %v1115, %v1130
        %v1138 = vadd.f32 %v1116, %v1130
        %v1139 = vadd.f32 %v1117, %v1130
        %v1140 = vadd.f32 %v1118, %v1130
        %v1141 = vadd.f32 %v1119, %v1130
        %v1142 = vadd.f32 %v1120, %v1130
        %v1143 = vadd.f32 %v1121, %v1130
        %v1144 = vadd.f32 %v1122, %v1130
        %v1145 = vadd.f32 %v1123, %v1130
        %v1146 = vadd.f32 %v1124, %v1130
        %v1147 = vadd.f32 %v1125, %v1130
        %v1148 = vadd.f32 %v1126, %v1130
        %v1149 = vadd.f32 %v1127, %v1130
        %v1150 = vmax.f32 %v1132, 0.0
        %v1151 = vmax.f32 %v1133, 0.0
        %v1152 = vmax.f32 %v1134, 0.0
        %v1153 = vmax.f32 %v1135, 0.0
        %v1154 = vmax.f32 %v1136, 0.0
        %v1155 = vmax.f32 %v1137, 0.0
        %v1156 = vmax.f32 %v1138, 0.0
        %v1157 = vmax.f32 %v1139, 0.0
        %v1158 = vmax.f32 %v1140, 0.0
        %v1159 = vmax.f32 %v1141, 0.0
        %v1160 = vmax.f32 %v1142, 0.0
        %v1161 = vmax.f32 %v1143, 0.0
        %v1162 = vmax.f32 %v1144, 0.0
        %v1163 = vmax.f32 %v1145, 0.0
        %v1164 = vmax.f32 %v1146, 0.0
        %v1165 = vmax.f32 %v1147, 0.0
        %v1166 = vmax.f32 %v1148, 0.0
        %v1167 = vmax.f32 %v1149, 0.0
        %v1168 = vpack.c.bf16 %v1150, %v1150
        %v1169 = vpack.c.bf16 %v1151, %v1151
        %v1170 = vpack.c.bf16 %v1152, %v1152
        %v1171 = vpack.c.bf16 %v1153, %v1153
        %v1172 = vpack.c.bf16 %v1154, %v1154
        %v1173 = vpack.c.bf16 %v1155, %v1155
        %v1174 = vpack.c.bf16 %v1156, %v1156
        %v1175 = vpack.c.bf16 %v1157, %v1157
        %v1176 = vpack.c.bf16 %v1158, %v1158
        %v1177 = vpack.c.bf16 %v1159, %v1159
        %v1178 = vpack.c.bf16 %v1160, %v1160
        %v1179 = vpack.c.bf16 %v1161, %v1161
        %v1180 = vpack.c.bf16 %v1162, %v1162
        %v1181 = vpack.c.bf16 %v1163, %v1163
        %v1182 = vpack.c.bf16 %v1164, %v1164
        %v1183 = vpack.c.bf16 %v1165, %v1165
        %v1184 = vpack.c.bf16 %v1166, %v1166
        %v1185 = vpack.c.bf16 %v1167, %v1167
        %1186 = vst [vmem:[%s499] sm:$0xf] %v1168
        %1187 = vst [vmem:[%s499 + $0x4] sm:$0xf] %v1169
        %1188 = vst [vmem:[%s499 + $0x8] sm:$0xf] %v1170
        %1189 = vst [vmem:[%s499 + $0xc] sm:$0xf] %v1171
        %1190 = vst [vmem:[%s499 + $0x10] sm:$0xf] %v1172
        %1191 = vst [vmem:[%s499 + $0x14] sm:$0xf] %v1173
        %1192 = vst [vmem:[%s499 + $0x18] sm:$0xf] %v1174
        %1193 = vst [vmem:[%s499 + $0x1c] sm:$0xf] %v1175
        %1194 = vst [vmem:[%s499 + $0x20] sm:$0xf] %v1176
        %1195 = vst [vmem:[%s499 + $0x24] sm:$0xf] %v1177
        %1196 = vst [vmem:[%s499 + $0x28] sm:$0xf] %v1178
        %1197 = vst [vmem:[%s499 + $0x2c] sm:$0xf] %v1179
        %1198 = vst [vmem:[%s499 + $0x30] sm:$0xf] %v1180
        %1199 = vst [vmem:[%s499 + $0x34] sm:$0xf] %v1181
        %1200 = vst [vmem:[%s499 + $0x38] sm:$0xf] %v1182
        %1201 = vst [vmem:[%s499 + $0x3c] sm:$0xf] %v1183
        %1202 = vst [vmem:[%s499 + $0x40] sm:$0xf] %v1184
        %1203 = vst [vmem:[%s499 + $0x44] sm:$0xf] %v1185
        %s1204 = smul.u32 18, %s14
        %p1205 = scmp.lt.s32.totalorder %s1204, 35
        %s1206 = scalar_select %p1205, %s1204, 35
        %s1207 = smul.addr %s1206, 4
        %s1208 = scalar_lea.vmem %s3, %s1207
        // Predicated region
        $region74: #{net_forward.3} parent=68 // pred_check
          %p1209 = pneg %p100
        $region75: #{net_forward.3} parent=68 // pred_check_branch
          %1211 = sbr.rel (%p1209) target = $region77
        $region76: #{net_forward.3} parent=68 // pred_region
          %s1212 = smul.u32 18, %s14
        $region77: #{net_forward.3} parent=68 // pred_fallthru
          _
      $region69: #{net_forward.3} parent=5 // pred_fallthru
        _
      %p1213 = scmp.le.s32.totalorder 2, %s9
      // Predicated region
      $region78: #{net_forward.3} parent=5 // pred_check
        %p1214 = pneg %p1213
      $region79: #{net_forward.3} parent=5 // pred_check_branch
        %1216 = sbr.rel (%p1214) target = $region81
      $region80: #{net_forward.3} parent=5 // pred_region
        %s1217 = ssub.s32 %s9, 2
        // Predicated region
        $region82: #{net_forward.3} parent=80 // pred_check
          %p1218 = pneg %p106
        $region83: #{net_forward.3} parent=80 // pred_check_branch
          %1220 = sbr.rel (%p1218) target = $region85
        $region84: #{net_forward.3} parent=80 // pred_region
          %s1221 = smul.u32 18, %s15
          %p1222 = scmp.lt.s32.totalorder %s1221, 35
          %s1223 = scalar_select %p1222, %s1221, 35
          %s1224 = smul.addr %s1223, 4
          %s1225 = scalar_lea.vmem %s3, %s1224
        $region85: #{net_forward.3} parent=80 // pred_fallthru
          _
      $region81: #{net_forward.3} parent=5 // pred_fallthru
        _
    $region6: #{net_forward.3} parent=1 // loop_footer
      %s13 = sadd.s32 1, %s9
    $region7: #{net_forward.3} parent=1 // loop_footer_branch
      %8 = sbr.rel target = $region3
    $region8: #{net_forward.3} parent=1 // loop_exit
      _

// kernel: net_forward.4
$region0: #{net_forward.4}
  #allocation0 [shape = 'u32[]', space=smem, size = 0x4, offset = 0x4, fixed_abs, tag = 'smem constant byte address 0x4 - core index']
  #allocation1 [shape = 'u32[72,128]{1,0:T(1,128)}', space=vmem, size = 0x9000, scoped, tag = 'internal scratch']
  %s0 = inlined_call_operand.vmem [shape: bf16[4,32,500], index: 0, kind: input, shape index: {}]
  %s1 = inlined_call_operand.vmem [shape: bf16[500,128], index: 1, kind: input, shape index: {}]
  %s2 = inlined_call_operand.vmem [shape: f32[1,128], index: 2, kind: input, shape index: {}]
  %s3 = inlined_call_operand.vmem [shape: bf16[32,128], index: 3, kind: output, shape index: {}]
  %s4 = sld [smem:[#allocation0]]
  $region68: #{net_forward.4} parent=0
    _
  %s6 = ssub.s32 1, %s4
  %s7 = scalar_select 0, %s6, %s4
  $region1: #{net_forward.4} parent=0
    #allocation2 [shape = 'u8[131072]{0}', space=vmem, size = 0x20000, scoped, tag = 'input window, operand 0']
    loop: start=0, step=1, limit=4
    $region2: #{net_forward.4} parent=1 // loop_pre_header
      _
    $region3: #{net_forward.4} parent=1 // loop_header
      %s9 = sphi 0, %s13
      %p10 = scmp.ge.s32.totalorder %s9, 4
      %s19 = sphi 0, %s21
      %s22 = sphi 0, %s19
      %s23 = sphi 0, %s22
      %s39 = sphi 0, %s23
      %s43 = sphi 0, %s43
      %s45 = sphi 0, %s43
      %s46 = sphi 0, %s45
      %s60 = sphi 0, %s46
      %s64 = sphi 0, %s64
      %s66 = sphi 0, %s64
      %s67 = sphi 0, %s66
      %s81 = sphi 0, %s67
      %s87 = sphi 0, %s89
      %s90 = sphi 0, %s87
      %s91 = sphi 0, %s90
      %s107 = sphi 0, %s91
    $region4: #{net_forward.4} parent=1 // loop_header_branch
      %12 = sbr.rel (%p10) target = $region8
    $region5: #{net_forward.4} parent=1 // loop_body
      %s14 = ssub.s32 %s9, 1
      %s15 = ssub.s32 %s9, 2
      %s16 = sadd.s32 %s9, 1
      %s17 = ssub.s32 %s9, %s16
      %p18 = scmp.eq.s32.totalorder %s17, 0
      %s20 = sadd.s32 %s19, 1
      %s21 = scalar_select %p18, %s19, %s20
      %p24 = pneg %p18
      %p25 = scmp.eq.s32.totalorder %s9, 1
      %p26 = por %p24, %p25
      %p27 = scmp.ne.s32.totalorder %s19, %s22
      %p28 = scmp.eq.s32.totalorder %s9, 0
      %p29 = por %p27, %p28
      %p30 = scmp.ne.s32.totalorder %s19, %s22
      %p31 = scmp.eq.s32.totalorder %s14, 1
      %p32 = por %p30, %p31
      %p33 = scmp.ne.s32.totalorder %s22, %s23
      %p34 = scmp.eq.s32.totalorder %s14, 0
      %p35 = por %p33, %p34
      %p36 = scmp.ne.s32.totalorder %s22, %s23
      %p37 = scmp.eq.s32.totalorder %s15, 1
      %p38 = por %p36, %p37
      %p40 = scmp.ne.s32.totalorder %s23, %s39
      %p41 = scmp.eq.s32.totalorder %s15, 0
      %p42 = por %p40, %p41
      %s44 = sadd.s32 %s43, 1
      %p47 = scmp.eq.s32.totalorder %s9, 1
      %p48 = scmp.ne.s32.totalorder %s43, %s45
      %p49 = scmp.eq.s32.totalorder %s9, 0
      %p50 = por %p48, %p49
      %p51 = scmp.ne.s32.totalorder %s43, %s45
      %p52 = scmp.eq.s32.totalorder %s14, 1
      %p53 = por %p51, %p52
      %p54 = scmp.ne.s32.totalorder %s45, %s46
      %p55 = scmp.eq.s32.totalorder %s14, 0
      %p56 = por %p54, %p55
      %p57 = scmp.ne.s32.totalorder %s45, %s46
      %p58 = scmp.eq.s32.totalorder %s15, 1
      %p59 = por %p57, %p58
      %p61 = scmp.ne.s32.totalorder %s46, %s60
      %p62 = scmp.eq.s32.totalorder %s15, 0
      %p63 = por %p61, %p62
      %s65 = sadd.s32 %s64, 1
      %p68 = scmp.eq.s32.totalorder %s9, 1
      %p69 = scmp.ne.s32.totalorder %s64, %s66
      %p70 = scmp.eq.s32.totalorder %s9, 0
      %p71 = por %p69, %p70
      %p72 = scmp.ne.s32.totalorder %s64, %s66
      %p73 = scmp.eq.s32.totalorder %s14, 1
      %p74 = por %p72, %p73
      %p75 = scmp.ne.s32.totalorder %s66, %s67
      %p76 = scmp.eq.s32.totalorder %s14, 0
      %p77 = por %p75, %p76
      %p78 = scmp.ne.s32.totalorder %s66, %s67
      %p79 = scmp.eq.s32.totalorder %s15, 1
      %p80 = por %p78, %p79
      %p82 = scmp.ne.s32.totalorder %s67, %s81
      %p83 = scmp.eq.s32.totalorder %s15, 0
      %p84 = por %p82, %p83
      %s85 = ssub.s32 %s9, %s16
      %p86 = scmp.eq.s32.totalorder %s85, 0
      %s88 = sadd.s32 %s87, 1
      %s89 = scalar_select %p86, %s87, %s88
      %p92 = pneg %p86
      %p93 = scmp.eq.s32.totalorder %s9, 1
      %p94 = por %p92, %p93
      %p95 = scmp.ne.s32.totalorder %s87, %s90
      %p96 = scmp.eq.s32.totalorder %s9, 0
      %p97 = por %p95, %p96
      %p98 = scmp.ne.s32.totalorder %s87, %s90
      %p99 = scmp.eq.s32.totalorder %s14, 1
      %p100 = por %p98, %p99
      %p101 = scmp.ne.s32.totalorder %s90, %s91
      %p102 = scmp.eq.s32.totalorder %s14, 0
      %p103 = por %p101, %p102
      %p104 = scmp.ne.s32.totalorder %s90, %s91
      %p105 = scmp.eq.s32.totalorder %s15, 1
      %p106 = por %p104, %p105
      %p108 = scmp.ne.s32.totalorder %s91, %s107
      %p109 = scmp.eq.s32.totalorder %s15, 0
      %p110 = por %p108, %p109
      %p111 = scmp.le.s32.totalorder 1, %s9
      %p112 = scmp.lt.s32.totalorder %s9, 3
      %p113 = pnand %p111, %p112
      %p114 = pneg %p113
      // Predicated region
      $region9: #{net_forward.4} parent=5 // pred_check
        _
      $region10: #{net_forward.4} parent=5 // pred_check_branch
        %116 = sbr.rel (%p113) target = $region12
      $region11: #{net_forward.4} parent=5 // pred_region
        %s117 = ssub.s32 %s9, 1
        // Predicated region
        $region13: #{net_forward.4} parent=11 // pred_check
          %p118 = pneg %p56
        $region14: #{net_forward.4} parent=11 // pred_check_branch
          %120 = sbr.rel (%p118) target = $region16
        $region15: #{net_forward.4} parent=11 // pred_region
          _
        $region16: #{net_forward.4} parent=11 // pred_fallthru
          _
        // Predicated region
        $region17: #{net_forward.4} parent=11 // pred_check
          %p121 = pneg %p77
        $region18: #{net_forward.4} parent=11 // pred_check_branch
          %123 = sbr.rel (%p121) target = $region20
        $region19: #{net_forward.4} parent=11 // pred_region
          _
        $region20: #{net_forward.4} parent=11 // pred_fallthru
          _
      $region12: #{net_forward.4} parent=5 // pred_fallthru
        _
      %p124 = scmp.lt.s32.totalorder %s9, 2
      // Predicated region
      $region21: #{net_forward.4} parent=5 // pred_check
        %p125 = pneg %p124
      $region22: #{net_forward.4} parent=5 // pred_check_branch
        %127 = sbr.rel (%p125) target = $region24
      $region23: #{net_forward.4} parent=5 // pred_region
        // Predicated region
        $region25: #{net_forward.4} parent=23 // pred_check
          %p128 = pneg %p29
        $region26: #{net_forward.4} parent=23 // pred_check_branch
          %130 = sbr.rel (%p128) target = $region28
        $region27: #{net_forward.4} parent=23 // pred_region
          %s131 = sand.u32 %s19, 1
          %s132 = sand.u32 %s19, 1
          %s133 = smul.addr %s132, 128
          %s134 = scalar_lea.vmem [#allocation2], %s133
          %s135 = smul.u32 2, %s9
          %s136 = smul.addr %s135, 4
          %s137 = smul.addr %s136, 4
          %s138 = scalar_lea.vmem %s0, %s137
          // Predicated region
          $region29: #{net_forward.4} parent=27 // pred_check
            _
          $region30: #{net_forward.4} parent=27 // pred_check_branch
            %140 = sbr.rel (0) target = $region32
          $region31: #{net_forward.4} parent=27 // pred_region
            // Predicated region
            $region33: #{net_forward.4} parent=31 // pred_check
              _
            $region34: #{net_forward.4} parent=31 // pred_check_branch
              %142 = sbr.rel (0) target = $region36
            $region35: #{net_forward.4} parent=31 // pred_region
              loop: start=0, step=1, limit=1
              $region37: #{net_forward.4} parent=35 // loop_pre_header
                _
              $region38: #{net_forward.4} parent=35 // loop_header
                %s144 = sphi 0, %s148
                %p145 = scmp.ge.s32.totalorder %s144, 1
                %s149 = sphi %s138, %s138
                %s150 = sphi %s134, %s134
              $region39: #{net_forward.4} parent=35 // loop_header_branch
                %147 = sbr.rel (%p145) target = $region43
              $region40: #{net_forward.4} parent=35 // loop_body
                %v151 = vld [vmem:[%s149] sm:$0xff]
                %152 = vst [vmem:[%s150] sm:$0xff] %v151
                %v153 = vld [vmem:[%s149 + $0x8] sm:$0xff]
                %154 = vst [vmem:[%s150 + $0x8] sm:$0xff] %v153
                %v155 = vld [vmem:[%s149 + $0x10] sm:$0xff]
                %156 = vst [vmem:[%s150 + $0x10] sm:$0xff] %v155
                %v157 = vld [vmem:[%s149 + $0x18] sm:$0xff]
                %158 = vst [vmem:[%s150 + $0x18] sm:$0xff] %v157
                %v159 = vld [vmem:[%s149 + $0x40] sm:$0xff]
                %160 = vst [vmem:[%s150 + $0x20] sm:$0xff] %v159
                %v161 = vld [vmem:[%s149 + $0x48] sm:$0xff]
                %162 = vst [vmem:[%s150 + $0x28] sm:$0xff] %v161
                %v163 = vld [vmem:[%s149 + $0x50] sm:$0xff]
                %164 = vst [vmem:[%s150 + $0x30] sm:$0xff] %v163
                %v165 = vld [vmem:[%s149 + $0x58] sm:$0xff]
                %166 = vst [vmem:[%s150 + $0x38] sm:$0xff] %v165
                %v167 = vld [vmem:[%s149 + $0x80] sm:$0xff]
                %168 = vst [vmem:[%s150 + $0x40] sm:$0xff] %v167
                %v169 = vld [vmem:[%s149 + $0x88] sm:$0xff]
                %170 = vst [vmem:[%s150 + $0x48] sm:$0xff] %v169
                %v171 = vld [vmem:[%s149 + $0x90] sm:$0xff]
                %172 = vst [vmem:[%s150 + $0x50] sm:$0xff] %v171
                %v173 = vld [vmem:[%s149 + $0x98] sm:$0xff]
                %174 = vst [vmem:[%s150 + $0x58] sm:$0xff] %v173
                %v175 = vld [vmem:[%s149 + $0xc0] sm:$0xff]
                %176 = vst [vmem:[%s150 + $0x60] sm:$0xff] %v175
                %v177 = vld [vmem:[%s149 + $0xc8] sm:$0xff]
                %178 = vst [vmem:[%s150 + $0x68] sm:$0xff] %v177
                %v179 = vld [vmem:[%s149 + $0xd0] sm:$0xff]
                %180 = vst [vmem:[%s150 + $0x70] sm:$0xff] %v179
                %v181 = vld [vmem:[%s149 + $0xd8] sm:$0xff]
                %182 = vst [vmem:[%s150 + $0x78] sm:$0xff] %v181
              $region41: #{net_forward.4} parent=35 // loop_footer
                %s148 = sadd.s32 1, %s144
              $region42: #{net_forward.4} parent=35 // loop_footer_branch
                %143 = sbr.rel target = $region38
              $region43: #{net_forward.4} parent=35 // loop_exit
                _
            $region36: #{net_forward.4} parent=31 // pred_fallthru
              _
            // Predicated region
            $region44: #{net_forward.4} parent=31 // pred_check
              _
            $region45: #{net_forward.4} parent=31 // pred_check_branch
              %184 = sbr.rel target = $region47
            $region46: #{net_forward.4} parent=31 // pred_region
              _
            $region47: #{net_forward.4} parent=31 // pred_fallthru
              _
          $region32: #{net_forward.4} parent=27 // pred_fallthru
            _
          %185 = vnop
        $region28: #{net_forward.4} parent=23 // pred_fallthru
          _
      $region24: #{net_forward.4} parent=5 // pred_fallthru
        _
      %p186 = scmp.le.s32.totalorder 1, %s9
      %p187 = scmp.lt.s32.totalorder %s9, 3
      %p188 = pnand %p186, %p187
      %p189 = pneg %p188
      // Predicated region
      $region48: #{net_forward.4} parent=5 // pred_check
        _
      $region49: #{net_forward.4} parent=5 // pred_check_branch
        %191 = sbr.rel (%p188) target = $region51
      $region50: #{net_forward.4} parent=5 // pred_region
        %s192 = ssub.s32 %s9, 1
        %s193 = sand.u32 %s22, 1
        %s194 = sand.u32 %s22, 1
        %s195 = smul.addr %s194, 128
        %s196 = scalar_lea.vmem [#allocation2], %s195
        // Predicated region
        $region52: #{net_forward.4} parent=50 // pred_check
          %p197 = pneg %p35
        $region53: #{net_forward.4} parent=50 // pred_check_branch
          %199 = sbr.rel (%p197) target = $region55
        $region54: #{net_forward.4} parent=50 // pred_region
          _
        $region55: #{net_forward.4} parent=50 // pred_fallthru
          _
        %s200 = sand.u32 %s22, 1
        %s201 = sand.u32 %s22, 1
        %s202 = smul.addr %s201, 128
        %s203 = scalar_lea.vmem [#allocation2], %s202
        %p204 = pneg %p35
        %p205 = pneg %p32
        %p206 = pneg %p56
        %p207 = pneg %p53
        %p208 = pneg %p77
        %p209 = pneg %p74
        %p210 = pneg %p103
        %p211 = pneg %p100
        %s212 = smul.u32 2, %s14
        %p213 = scmp.lt.s32.totalorder %s212, 3
        %s214 = scalar_select %p213, %s212, 3
        %s215 = smul.addr %s214, 4
        %s216 = scalar_lea.vmem %s3, %s215
        %s217 = smul.u32 2, %s14
        %s218 = smul.u32 2, %s14
        %p219 = scmp.lt.s32.totalorder %s218, 3
        %s220 = scalar_select %p219, %s218, 3
        %s221 = smul.addr %s220, 4
        %s222 = scalar_lea.vmem %s3, %s221
        %s223 = smul.u32 2, %s14
        %v224 = vld [vmem:[%s196] sm:$0xff]
        %v225 = vld [vmem:[%s196 + $0x8] sm:$0xff]
        %v226 = vld [vmem:[%s196 + $0x10] sm:$0xff]
        %v227 = vld [vmem:[%s196 + $0x18] sm:$0xff]
        %v228 = vld [vmem:[%s196 + $0x20] sm:$0xff]
        %v229 = vld [vmem:[%s196 + $0x28] sm:$0xff]
        %v230 = vld [vmem:[%s196 + $0x30] sm:$0xff]
        %v231 = vld [vmem:[%s196 + $0x38] sm:$0xff]
        %v232 = vld [vmem:[%s196 + $0x40] sm:$0xff]
        %v233 = vld [vmem:[%s196 + $0x48] sm:$0xff]
        %v234 = vld [vmem:[%s196 + $0x50] sm:$0xff]
        %v235 = vld [vmem:[%s196 + $0x58] sm:$0xff]
        %v236 = vld [vmem:[%s196 + $0x60] sm:$0xff]
        %v237 = vld [vmem:[%s196 + $0x68] sm:$0xff]
        %v238 = vld [vmem:[%s196 + $0x70] sm:$0xff]
        %v239 = vld [vmem:[%s196 + $0x78] sm:$0xff]
        %v240 = vld [vmem:[%s1] sm:$0xf]
        %v241 = vld [vmem:[%s1 + $0x4] sm:$0xf]
        %v242 = vld [vmem:[%s1 + $0x8] sm:$0xf]
        %v243 = vld [vmem:[%s1 + $0xc] sm:$0xf]
        %v244 = vld [vmem:[%s1 + $0x10] sm:$0xf]
        %v245 = vld [vmem:[%s1 + $0x14] sm:$0xf]
        %v246 = vld [vmem:[%s1 + $0x18] sm:$0xf]
        %v247 = vld [vmem:[%s1 + $0x1c] sm:$0xf]
        %v248 = vld [vmem:[%s1 + $0x20] sm:$0xf]
        %v249 = vld [vmem:[%s1 + $0x24] sm:$0xf]
        %v250 = vld [vmem:[%s1 + $0x28] sm:$0xf]
        %v251 = vld [vmem:[%s1 + $0x2c] sm:$0xf]
        %v252 = vld [vmem:[%s1 + $0x30] sm:$0xf]
        %v253 = vld [vmem:[%s1 + $0x34] sm:$0xf]
        %v254 = vld [vmem:[%s1 + $0x38] sm:$0xf]
        %v255 = vld [vmem:[%s1 + $0x3c] sm:$0xf]
        %v256 = vld [vmem:[%s1 + $0x40] sm:$0xf]
        %v257 = vld [vmem:[%s1 + $0x44] sm:$0xf]
        %v258 = vld [vmem:[%s1 + $0x48] sm:$0xf]
        %v259 = vld [vmem:[%s1 + $0x4c] sm:$0xf]
        %v260 = vld [vmem:[%s1 + $0x50] sm:$0xf]
        %v261 = vld [vmem:[%s1 + $0x54] sm:$0xf]
        %v262 = vld [vmem:[%s1 + $0x58] sm:$0xf]
        %v263 = vld [vmem:[%s1 + $0x5c] sm:$0xf]
        %v264 = vld [vmem:[%s1 + $0x60] sm:$0xf]
        %v265 = vld [vmem:[%s1 + $0x64] sm:$0xf]
        %v266 = vld [vmem:[%s1 + $0x68] sm:$0xf]
        %v267 = vld [vmem:[%s1 + $0x6c] sm:$0xf]
        %v268 = vld [vmem:[%s1 + $0x70] sm:$0xf]
        %v269 = vld [vmem:[%s1 + $0x74] sm:$0xf]
        %v270 = vld [vmem:[%s1 + $0x78] sm:$0xf]
        %v271 = vld [vmem:[%s1 + $0x7c] sm:$0xf]
        %v272 = vld [vmem:[%s1 + $0x80] sm:$0xf]
        %v273 = vld [vmem:[%s1 + $0x84] sm:$0xf]
        %v274 = vld [vmem:[%s1 + $0x88] sm:$0xf]
        %v275 = vld [vmem:[%s1 + $0x8c] sm:$0xf]
        %v276 = vld [vmem:[%s1 + $0x90] sm:$0xf]
        %v277 = vld [vmem:[%s1 + $0x94] sm:$0xf]
        %v278 = vld [vmem:[%s1 + $0x98] sm:$0xf]
        %v279 = vld [vmem:[%s1 + $0x9c] sm:$0xf]
        %v280 = vld [vmem:[%s1 + $0xa0] sm:$0xf]
        %v281 = vld [vmem:[%s1 + $0xa4] sm:$0xf]
        %v282 = vld [vmem:[%s1 + $0xa8] sm:$0xf]
        %v283 = vld [vmem:[%s1 + $0xac] sm:$0xf]
        %v284 = vld [vmem:[%s1 + $0xb0] sm:$0xf]
        %v285 = vld [vmem:[%s1 + $0xb4] sm:$0xf]
        %v286 = vld [vmem:[%s1 + $0xb8] sm:$0xf]
        %v287 = vld [vmem:[%s1 + $0xbc] sm:$0xf]
        %v288 = vld [vmem:[%s1 + $0xc0] sm:$0xf]
        %v289 = vld [vmem:[%s1 + $0xc4] sm:$0xf]
        %v290 = vld [vmem:[%s1 + $0xc8] sm:$0xf]
        %v291 = vld [vmem:[%s1 + $0xcc] sm:$0xf]
        %v292 = vld [vmem:[%s1 + $0xd0] sm:$0xf]
        %v293 = vld [vmem:[%s1 + $0xd4] sm:$0xf]
        %v294 = vld [vmem:[%s1 + $0xd8] sm:$0xf]
        %v295 = vld [vmem:[%s1 + $0xdc] sm:$0xf]
        %v296 = vld [vmem:[%s1 + $0xe0] sm:$0xf]
        %v297 = vld [vmem:[%s1 + $0xe4] sm:$0xf]
        %v298 = vld [vmem:[%s1 + $0xe8] sm:$0xf]
        %v299 = vld [vmem:[%s1 + $0xec] sm:$0xf]
        %v300 = vld [vmem:[%s1 + $0xf0] sm:$0xf]
        %v301 = vld [vmem:[%s1 + $0xf4] sm:$0xf]
        %v302 = vld [vmem:[%s1 + $0xf8] sm:$0x3]
        %v319 = vunpack.c.l.b16 %v224
        %v320 = vunpack.c.h.b16 %v224
        %v321 = vunpack.c.l.b16 %v225
        %v322 = vunpack.c.h.b16 %v225
        %v323 = vunpack.c.l.b16 %v226
        %v324 = vunpack.c.h.b16 %v226
        %v325 = vunpack.c.l.b16 %v227
        %v326 = vunpack.c.h.b16 %v227
        %v327 = vunpack.c.l.b16 %v228
        %v328 = vunpack.c.h.b16 %v228
        %v329 = vunpack.c.l.b16 %v229
        %v330 = vunpack.c.h.b16 %v229
        %v331 = vunpack.c.l.b16 %v230
        %v332 = vunpack.c.h.b16 %v230
        %v333 = vunpack.c.l.b16 %v231
        %v334 = vunpack.c.h.b16 %v231
        %v335 = vunpack.c.l.b16 %v232
        %v336 = vunpack.c.h.b16 %v232
        %v337 = vunpack.c.l.b16 %v233
        %v338 = vunpack.c.h.b16 %v233
        %v339 = vunpack.c.l.b16 %v234
        %v340 = vunpack.c.h.b16 %v234
        %v341 = vunpack.c.l.b16 %v235
        %v342 = vunpack.c.h.b16 %v235
        %v343 = vunpack.c.l.b16 %v236
        %v344 = vunpack.c.h.b16 %v236
        %v345 = vunpack.c.l.b16 %v237
        %v346 = vunpack.c.h.b16 %v237
        %v347 = vunpack.c.l.b16 %v238
        %v348 = vunpack.c.h.b16 %v238
        %v349 = vunpack.c.l.b16 %v239
        %v350 = vunpack.c.h.b16 %v239
        %v351 = vpack.c.b16 %v323, %v319
        %v352 = vpack.c.b16 %v324, %v320
        %v353 = vpack.c.b16 %v325, %v321
        %v354 = vpack.c.b16 %v326, %v322
        %v355 = vpack.c.b16 %v331, %v327
        %v356 = vpack.c.b16 %v332, %v328
        %v357 = vpack.c.b16 %v333, %v329
        %v358 = vpack.c.b16 %v334, %v330
        %v359 = vpack.c.b16 %v339, %v335
        %v360 = vpack.c.b16 %v340, %v336
        %v361 = vpack.c.b16 %v341, %v337
        %v362 = vpack.c.b16 %v342, %v338
        %v363 = vpack.c.b16 %v347, %v343
        %v364 = vpack.c.b16 %v348, %v344
        %v365 = vpack.c.b16 %v349, %v345
        %v366 = vpack.c.b16 %v350, %v346
        %v442 = vunpack.c.l.b16 %v240
        %v443 = vunpack.c.l.b16 %v241
        %v444 = vunpack.c.l.b16 %v242
        %v445 = vunpack.c.l.b16 %v243
        %v446 = vunpack.c.l.b16 %v244
        %v447 = vunpack.c.l.b16 %v245
        %v448 = vunpack.c.l.b16 %v246
        %v449 = vunpack.c.l.b16 %v247
        %v450 = vunpack.c.l.b16 %v248
        %v451 = vunpack.c.l.b16 %v249
        %v452 = vunpack.c.l.b16 %v250
        %v453 = vunpack.c.l.b16 %v251
        %v454 = vunpack.c.l.b16 %v252
        %v455 = vunpack.c.l.b16 %v253
        %v456 = vunpack.c.l.b16 %v254
        %v457 = vunpack.c.l.b16 %v255
        %v458 = vunpack.c.l.b16 %v256
        %v459 = vunpack.c.l.b16 %v257
        %v460 = vunpack.c.l.b16 %v258
        %v461 = vunpack.c.l.b16 %v259
        %v462 = vunpack.c.l.b16 %v260
        %v463 = vunpack.c.l.b16 %v261
        %v464 = vunpack.c.l.b16 %v262
        %v465 = vunpack.c.l.b16 %v263
        %v466 = vunpack.c.l.b16 %v264
        %v467 = vunpack.c.l.b16 %v265
        %v468 = vunpack.c.l.b16 %v266
        %v469 = vunpack.c.l.b16 %v267
        %v470 = vunpack.c.l.b16 %v268
        %v471 = vunpack.c.l.b16 %v269
        %v472 = vunpack.c.l.b16 %v270
        %v473 = vunpack.c.l.b16 %v271
        %v474 = vunpack.c.l.b16 %v272
        %v475 = vunpack.c.l.b16 %v273
        %v476 = vunpack.c.l.b16 %v274
        %v477 = vunpack.c.l.b16 %v275
        %v478 = vunpack.c.l.b16 %v276
        %v479 = vunpack.c.l.b16 %v277
        %v480 = vunpack.c.l.b16 %v278
        %v481 = vunpack.c.l.b16 %v279
        %v482 = vunpack.c.l.b16 %v280
        %v483 = vunpack.c.l.b16 %v281
        %v484 = vunpack.c.l.b16 %v282
        %v485 = vunpack.c.l.b16 %v283
        %v486 = vunpack.c.l.b16 %v284
        %v487 = vunpack.c.l.b16 %v285
        %v488 = vunpack.c.l.b16 %v286
        %v489 = vunpack.c.l.b16 %v287
        %v490 = vunpack.c.l.b16 %v288
        %v491 = vunpack.c.l.b16 %v289
        %v492 = vunpack.c.l.b16 %v290
        %v493 = vunpack.c.l.b16 %v291
        %v494 = vunpack.c.l.b16 %v292
        %v495 = vunpack.c.l.b16 %v293
        %v496 = vunpack.c.l.b16 %v294
        %v497 = vunpack.c.l.b16 %v295
        %v498 = vunpack.c.l.b16 %v296
        %v499 = vunpack.c.l.b16 %v297
        %v500 = vunpack.c.l.b16 %v298
        %v501 = vunpack.c.l.b16 %v299
        %v502 = vunpack.c.l.b16 %v300
        %v503 = vunpack.c.l.b16 %v301
        %v504 = vunpack.c.l.b16 %v302
        %v505 = vpack.c.b16 %v443, %v442
        %v506 = vpack.c.b16 %v445, %v444
        %v507 = vpack.c.b16 %v447, %v446
        %v508 = vpack.c.b16 %v449, %v448
        %v509 = vpack.c.b16 %v451, %v450
        %v510 = vpack.c.b16 %v453, %v452
        %v511 = vpack.c.b16 %v455, %v454
        %v512 = vpack.c.b16 %v457, %v456
        %v513 = vpack.c.b16 %v459, %v458
        %v514 = vpack.c.b16 %v461, %v460
        %v515 = vpack.c.b16 %v463, %v462
        %v516 = vpack.c.b16 %v465, %v464
        %v517 = vpack.c.b16 %v467, %v466
        %v518 = vpack.c.b16 %v469, %v468
        %v519 = vpack.c.b16 %v471, %v470
        %v520 = vpack.c.b16 %v473, %v472
        %v521 = vpack.c.b16 %v475, %v474
        %v522 = vpack.c.b16 %v477, %v476
        %v523 = vpack.c.b16 %v479, %v478
        %v524 = vpack.c.b16 %v481, %v480
        %v525 = vpack.c.b16 %v483, %v482
        %v526 = vpack.c.b16 %v485, %v484
        %v527 = vpack.c.b16 %v487, %v486
        %v528 = vpack.c.b16 %v489, %v488
        %v529 = vpack.c.b16 %v491, %v490
        %v530 = vpack.c.b16 %v493, %v492
        %v531 = vpack.c.b16 %v495, %v494
        %v532 = vpack.c.b16 %v497, %v496
        %v533 = vpack.c.b16 %v499, %v498
        %v534 = vpack.c.b16 %v501, %v500
        %v535 = vpack.c.b16 %v503, %v502
        %v536 = vpack.c.b16 %v504, %v504
        %vm568 = vcmask 949248
        %v570 = vsel %vm568, %v354, 0
        %v573 = vsel %vm568, %v358, 0
        %v576 = vsel %vm568, %v362, 0
        %v579 = vsel %vm568, %v366, 0
        %vm581 = vcmask 1041408
        %v583 = vsel %vm581, %v536, 0
        %585 = vmatpush.bf16.msra.mxu0 %v512
        %586 = vmatpush.bf16.msra.mxu0 %v511
        %587 = vmatpush.bf16.msra.mxu0 %v510
        %588 = vmatpush.bf16.msra.mxu0 %v509
        %589 = vmatpush.bf16.msra.mxu0 %v508
        %590 = vmatpush.bf16.msra.mxu0 %v507
        %591 = vmatpush.bf16.msra.mxu0 %v506
        %592 = vmatpush.bf16.msra.mxu0 %v505
        %593 = vmatmul.bf16.gmra.mxu0 %v351
        %v594 = vpop.f32.mrf.mxu0
        %v595 = vadd.f32 0.0, %v594
        %v596 = vpop.f32.mrf.mxu0
        %v597 = vadd.f32 0.0, %v596
        %598 = vmatmul.bf16.gmra.mxu0 %v355
        %v599 = vpop.f32.mrf.mxu0
        %v600 = vadd.f32 0.0, %v599
        %v601 = vpop.f32.mrf.mxu0
        %v602 = vadd.f32 0.0, %v601
        %603 = vmatmul.bf16.gmra.mxu0 %v359
        %v604 = vpop.f32.mrf.mxu0
        %v605 = vadd.f32 0.0, %v604
        %v606 = vpop.f32.mrf.mxu0
        %v607 = vadd.f32 0.0, %v606
        %608 = vmatmul.bf16.gmra.mxu0 %v363
        %v609 = vpop.f32.mrf.mxu0
        %v610 = vadd.f32 0.0, %v609
        %v611 = vpop.f32.mrf.mxu0
        %v612 = vadd.f32 0.0, %v611
        %613 = vdwg.mxu0
        %614 = vmatpush.bf16.msra.mxu0 %v520
        %615 = vmatpush.bf16.msra.mxu0 %v519
        %616 = vmatpush.bf16.msra.mxu0 %v518
        %617 = vmatpush.bf16.msra.mxu0 %v517
        %618 = vmatpush.bf16.msra.mxu0 %v516
        %619 = vmatpush.bf16.msra.mxu0 %v515
        %620 = vmatpush.bf16.msra.mxu0 %v514
        %621 = vmatpush.bf16.msra.mxu0 %v513
        %622 = vmatmul.bf16.gmra.mxu0 %v352
        %v623 = vpop.f32.mrf.mxu0
        %v624 = vadd.f32 %v595, %v623
        %v625 = vpop.f32.mrf.mxu0
        %v626 = vadd.f32 %v597, %v625
        %627 = vmatmul.bf16.gmra.mxu0 %v356
        %v628 = vpop.f32.mrf.mxu0
        %v629 = vadd.f32 %v600, %v628
        %v630 = vpop.f32.mrf.mxu0
        %v631 = vadd.f32 %v602, %v630
        %632 = vmatmul.bf16.gmra.mxu0 %v360
        %v633 = vpop.f32.mrf.mxu0
        %v634 = vadd.f32 %v605, %v633
        %v635 = vpop.f32.mrf.mxu0
        %v636 = vadd.f32 %v607, %v635
        %637 = vmatmul.bf16.gmra.mxu0 %v364
        %v638 = vpop.f32.mrf.mxu0
        %v639 = vadd.f32 %v610, %v638
        %v640 = vpop.f32.mrf.mxu0
        %v641 = vadd.f32 %v612, %v640
        %642 = vdwg.mxu0
        %643 = vmatpush.bf16.msra.mxu0 %v528
        %644 = vmatpush.bf16.msra.mxu0 %v527
        %645 = vmatpush.bf16.msra.mxu0 %v526
        %646 = vmatpush.bf16.msra.mxu0 %v525
        %647 = vmatpush.bf16.msra.mxu0 %v524
        %648 = vmatpush.bf16.msra.mxu0 %v523
        %649 = vmatpush.bf16.msra.mxu0 %v522
        %650 = vmatpush.bf16.msra.mxu0 %v521
        %651 = vmatmul.bf16.gmra.mxu0 %v353
        %v652 = vpop.f32.mrf.mxu0
        %v653 = vadd.f32 %v624, %v652
        %v654 = vpop.f32.mrf.mxu0
        %v655 = vadd.f32 %v626, %v654
        %656 = vmatmul.bf16.gmra.mxu0 %v357
        %v657 = vpop.f32.mrf.mxu0
        %v658 = vadd.f32 %v629, %v657
        %v659 = vpop.f32.mrf.mxu0
        %v660 = vadd.f32 %v631, %v659
        %661 = vmatmul.bf16.gmra.mxu0 %v361
        %v662 = vpop.f32.mrf.mxu0
        %v663 = vadd.f32 %v634, %v662
        %v664 = vpop.f32.mrf.mxu0
        %v665 = vadd.f32 %v636, %v664
        %666 = vmatmul.bf16.gmra.mxu0 %v365
        %v667 = vpop.f32.mrf.mxu0
        %v668 = vadd.f32 %v639, %v667
        %v669 = vpop.f32.mrf.mxu0
        %v670 = vadd.f32 %v641, %v669
        %671 = vdwg.mxu0
        %672 = vmatpush.bf16.msra.mxu0 %v583
        %673 = vmatpush.bf16.msra.mxu0 %v535
        %674 = vmatpush.bf16.msra.mxu0 %v534
        %675 = vmatpush.bf16.msra.mxu0 %v533
        %676 = vmatpush.bf16.msra.mxu0 %v532
        %677 = vmatpush.bf16.msra.mxu0 %v531
        %678 = vmatpush.bf16.msra.mxu0 %v530
        %679 = vmatpush.bf16.msra.mxu0 %v529
        %680 = vmatmul.bf16.gmra.mxu0 %v570
        %v681 = vpop.f32.mrf.mxu0
        %v682 = vadd.f32 %v653, %v681
        %v683 = vpop.f32.mrf.mxu0
        %v684 = vadd.f32 %v655, %v683
        %685 = vmatmul.bf16.gmra.mxu0 %v573
        %v686 = vpop.f32.mrf.mxu0
        %v687 = vadd.f32 %v658, %v686
        %v688 = vpop.f32.mrf.mxu0
        %v689 = vadd.f32 %v660, %v688
        %690 = vmatmul.bf16.gmra.mxu0 %v576
        %v691 = vpop.f32.mrf.mxu0
        %v692 = vadd.f32 %v663, %v691
        %v693 = vpop.f32.mrf.mxu0
        %v694 = vadd.f32 %v665, %v693
        %695 = vmatmul.bf16.gmra.mxu0 %v579
        %v696 = vpop.f32.mrf.mxu0
        %v697 = vadd.f32 %v668, %v696
        %v698 = vpop.f32.mrf.mxu0
        %v699 = vadd.f32 %v670, %v698
        %700 = vdwg.mxu0
        %v701 = vmax.f32 %v682, %v687
        %v702 = vmax.f32 %v684, %v689
        %v703 = vmax.f32 %v692, %v697
        %v704 = vmax.f32 %v694, %v699
        %v705 = vmax.f32 %v701, %v703
        %v706 = vmax.f32 %v702, %v704
        %v707 = vld [vmem:[%s2] sm:$0x1]
        %v709 = vperm.slane %v707, 0
        %v711 = vadd.f32 %v705, %v709
        %v712 = vadd.f32 %v706, %v709
        %v713 = vmax.f32 %v711, 0.0
        %v714 = vmax.f32 %v712, 0.0
        %v715 = vpack.c.bf16 %v713, %v713
        %v716 = vpack.c.bf16 %v714, %v714
        %717 = vst [vmem:[%s222] sm:$0xf] %v715
        %718 = vst [vmem:[%s222 + $0x4] sm:$0xf] %v716
        %s719 = smul.u32 2, %s14
        %p720 = scmp.lt.s32.totalorder %s719, 3
        %s721 = scalar_select %p720, %s719, 3
        %s722 = smul.addr %s721, 4
        %s723 = scalar_lea.vmem %s3, %s722
        // Predicated region
        $region56: #{net_forward.4} parent=50 // pred_check
          %p724 = pneg %p100
        $region57: #{net_forward.4} parent=50 // pred_check_branch
          %726 = sbr.rel (%p724) target = $region59
        $region58: #{net_forward.4} parent=50 // pred_region
          %s727 = smul.u32 2, %s14
        $region59: #{net_forward.4} parent=50 // pred_fallthru
          _
      $region51: #{net_forward.4} parent=5 // pred_fallthru
        _
      %p728 = scmp.le.s32.totalorder 2, %s9
      // Predicated region
      $region60: #{net_forward.4} parent=5 // pred_check
        %p729 = pneg %p728
      $region61: #{net_forward.4} parent=5 // pred_check_branch
        %731 = sbr.rel (%p729) target = $region63
      $region62: #{net_forward.4} parent=5 // pred_region
        %s732 = ssub.s32 %s9, 2
        // Predicated region
        $region64: #{net_forward.4} parent=62 // pred_check
          %p733 = pneg %p106
        $region65: #{net_forward.4} parent=62 // pred_check_branch
          %735 = sbr.rel (%p733) target = $region67
        $region66: #{net_forward.4} parent=62 // pred_region
          %s736 = smul.u32 2, %s15
          %p737 = scmp.lt.s32.totalorder %s736, 3
          %s738 = scalar_select %p737, %s736, 3
          %s739 = smul.addr %s738, 4
          %s740 = scalar_lea.vmem %s3, %s739
        $region67: #{net_forward.4} parent=62 // pred_fallthru
          _
      $region63: #{net_forward.4} parent=5 // pred_fallthru
        _
    $region6: #{net_forward.4} parent=1 // loop_footer
      %s13 = sadd.s32 1, %s9
    $region7: #{net_forward.4} parent=1 // loop_footer_branch
      %8 = sbr.rel target = $region3
    $region8: #{net_forward.4} parent=1 // loop_exit
      _

// kernel: net_forward.5
$region0: #{net_forward.5}
  #allocation0 [shape = 'u32[]', space=smem, size = 0x4, offset = 0x4, fixed_abs, tag = 'smem constant byte address 0x4 - core index']
  #allocation1 [shape = 'u32[72,128]{1,0:T(1,128)}', space=vmem, size = 0x9000, scoped, tag = 'internal scratch']
  %s0 = inlined_call_operand.vmem [shape: bf16[16,800], index: 0, kind: input, shape index: {}]
  %s1 = inlined_call_operand.vmem [shape: bf16[800,512], index: 1, kind: input, shape index: {}]
  %s2 = inlined_call_operand.vmem [shape: f32[1,512], index: 2, kind: input, shape index: {}]
  %s3 = inlined_call_operand.vmem [shape: bf16[512,128], index: 3, kind: input, shape index: {}]
  %s4 = inlined_call_operand.vmem [shape: f32[1,128], index: 4, kind: input, shape index: {}]
  %s5 = inlined_call_operand.vmem [shape: f32[16,128], index: 5, kind: output, shape index: {}]
  %s6 = sld [smem:[#allocation0]]
  $region30: #{net_forward.5} parent=0
    _
  %s8 = ssub.s32 1, %s6
  %s9 = scalar_select 0, %s8, %s6
  // Predicated region
  $region2: #{net_forward.5} parent=0 // pred_check
    _
  $region3: #{net_forward.5} parent=0 // pred_check_branch
    %11 = sbr.rel (0) target = $region5
  $region4: #{net_forward.5} parent=0 // pred_region
    _
  $region5: #{net_forward.5} parent=0 // pred_fallthru
    _
  // Predicated region
  $region6: #{net_forward.5} parent=0 // pred_check
    _
  $region7: #{net_forward.5} parent=0 // pred_check_branch
    %13 = sbr.rel (0) target = $region9
  $region8: #{net_forward.5} parent=0 // pred_region
    _
  $region9: #{net_forward.5} parent=0 // pred_fallthru
    _
  // Predicated region
  $region10: #{net_forward.5} parent=0 // pred_check
    _
  $region11: #{net_forward.5} parent=0 // pred_check_branch
    %15 = sbr.rel (0) target = $region13
  $region12: #{net_forward.5} parent=0 // pred_region
    _
  $region13: #{net_forward.5} parent=0 // pred_fallthru
    _
  // Predicated region
  $region14: #{net_forward.5} parent=0 // pred_check
    _
  $region15: #{net_forward.5} parent=0 // pred_check_branch
    %17 = sbr.rel (0) target = $region17
  $region16: #{net_forward.5} parent=0 // pred_region
    _
  $region17: #{net_forward.5} parent=0 // pred_fallthru
    _
  // Predicated region
  $region18: #{net_forward.5} parent=0 // pred_check
    _
  $region19: #{net_forward.5} parent=0 // pred_check_branch
    %19 = sbr.rel (0) target = $region21
  $region20: #{net_forward.5} parent=0 // pred_region
    _
  $region21: #{net_forward.5} parent=0 // pred_fallthru
    _
  %v21 = vld [vmem:[%s0] sm:$0xff]
  %v22 = vld [vmem:[%s0 + $0x8] sm:$0xff]
  %v23 = vld [vmem:[%s0 + $0x10] sm:$0xff]
  %v24 = vld [vmem:[%s0 + $0x18] sm:$0xf]
  %v25 = vld [vmem:[%s0 + $0x1c] sm:$0xff]
  %v26 = vld [vmem:[%s0 + $0x24] sm:$0xff]
  %v27 = vld [vmem:[%s0 + $0x2c] sm:$0xff]
  %v28 = vld [vmem:[%s0 + $0x34] sm:$0xf]
  %v29 = vld [vmem:[%s1] sm:$0xff]
  %v30 = vld [vmem:[%s1 + $0x8] sm:$0xff]
  %v31 = vld [vmem:[%s1 + $0x10] sm:$0xff]
  %v32 = vld [vmem:[%s1 + $0x18] sm:$0xff]
  %v33 = vld [vmem:[%s1 + $0x20] sm:$0xff]
  %v34 = vld [vmem:[%s1 + $0x28] sm:$0xff]
  %v35 = vld [vmem:[%s1 + $0x30] sm:$0xff]
  %v36 = vld [vmem:[%s1 + $0x38] sm:$0xff]
  %v37 = vld [vmem:[%s1 + $0x40] sm:$0xff]
  %v38 = vld [vmem:[%s1 + $0x48] sm:$0xff]
  %v39 = vld [vmem:[%s1 + $0x50] sm:$0xff]
  %v40 = vld [vmem:[%s1 + $0x58] sm:$0xff]
  %v41 = vld [vmem:[%s1 + $0x60] sm:$0xff]
  %v42 = vld [vmem:[%s1 + $0x68] sm:$0xff]
  %v43 = vld [vmem:[%s1 + $0x70] sm:$0xff]
  %v44 = vld [vmem:[%s1 + $0x78] sm:$0xff]
  %v45 = vld [vmem:[%s1 + $0x80] sm:$0xff]
  %v46 = vld [vmem:[%s1 + $0x88] sm:$0xff]
  %v47 = vld [vmem:[%s1 + $0x90] sm:$0xff]
  %v48 = vld [vmem:[%s1 + $0x98] sm:$0xff]
  %v49 = vld [vmem:[%s1 + $0xa0] sm:$0xff]
  %v50 = vld [vmem:[%s1 + $0xa8] sm:$0xff]
  %v51 = vld [vmem:[%s1 + $0xb0] sm:$0xff]
  %v52 = vld [vmem:[%s1 + $0xb8] sm:$0xff]
  %v53 = vld [vmem:[%s1 + $0xc0] sm:$0xff]
  %v54 = vld [vmem:[%s1 + $0xc8] sm:$0xff]
  %v55 = vld [vmem:[%s1 + $0xd0] sm:$0xff]
  %v56 = vld [vmem:[%s1 + $0xd8] sm:$0xff]
  %v57 = vld [vmem:[%s1 + $0xe0] sm:$0xff]
  %v58 = vld [vmem:[%s1 + $0xe8] sm:$0xff]
  %v59 = vld [vmem:[%s1 + $0xf0] sm:$0xff]
  %v60 = vld [vmem:[%s1 + $0xf8] sm:$0xff]
  %v61 = vld [vmem:[%s1 + $0x100] sm:$0xff]
  %v62 = vld [vmem:[%s1 + $0x108] sm:$0xff]
  %v63 = vld [vmem:[%s1 + $0x110] sm:$0xff]
  %v64 = vld [vmem:[%s1 + $0x118] sm:$0xff]
  %v65 = vld [vmem:[%s1 + $0x120] sm:$0xff]
  %v66 = vld [vmem:[%s1 + $0x128] sm:$0xff]
  %v67 = vld [vmem:[%s1 + $0x130] sm:$0xff]
  %v68 = vld [vmem:[%s1 + $0x138] sm:$0xff]
  %v69 = vld [vmem:[%s1 + $0x140] sm:$0xff]
  %v70 = vld [vmem:[%s1 + $0x148] sm:$0xff]
  %v71 = vld [vmem:[%s1 + $0x150] sm:$0xff]
  %v72 = vld [vmem:[%s1 + $0x158] sm:$0xff]
  %v73 = vld [vmem:[%s1 + $0x160] sm:$0xff]
  %v74 = vld [vmem:[%s1 + $0x168] sm:$0xff]
  %v75 = vld [vmem:[%s1 + $0x170] sm:$0xff]
  %v76 = vld [vmem:[%s1 + $0x178] sm:$0xff]
  %v77 = vld [vmem:[%s1 + $0x180] sm:$0xff]
  %v78 = vld [vmem:[%s1 + $0x188] sm:$0xff]
  %v79 = vld [vmem:[%s1 + $0x190] sm:$0xff]
  %v80 = vld [vmem:[%s1 + $0x198] sm:$0xff]
  %v81 = vld [vmem:[%s1 + $0x1a0] sm:$0xff]
  %v82 = vld [vmem:[%s1 + $0x1a8] sm:$0xff]
  %v83 = vld [vmem:[%s1 + $0x1b0] sm:$0xff]
  %v84 = vld [vmem:[%s1 + $0x1b8] sm:$0xff]
  %v85 = vld [vmem:[%s1 + $0x1c0] sm:$0xff]
  %v86 = vld [vmem:[%s1 + $0x1c8] sm:$0xff]
  %v87 = vld [vmem:[%s1 + $0x1d0] sm:$0xff]
  %v88 = vld [vmem:[%s1 + $0x1d8] sm:$0xff]
  %v89 = vld [vmem:[%s1 + $0x1e0] sm:$0xff]
  %v90 = vld [vmem:[%s1 + $0x1e8] sm:$0xff]
  %v91 = vld [vmem:[%s1 + $0x1f0] sm:$0xff]
  %v92 = vld [vmem:[%s1 + $0x1f8] sm:$0xff]
  %v93 = vld [vmem:[%s1 + $0x200] sm:$0xff]
  %v94 = vld [vmem:[%s1 + $0x208] sm:$0xff]
  %v95 = vld [vmem:[%s1 + $0x210] sm:$0xff]
  %v96 = vld [vmem:[%s1 + $0x218] sm:$0xff]
  %v97 = vld [vmem:[%s1 + $0x220] sm:$0xff]
  %v98 = vld [vmem:[%s1 + $0x228] sm:$0xff]
  %v99 = vld [vmem:[%s1 + $0x230] sm:$0xff]
  %v100 = vld [vmem:[%s1 + $0x238] sm:$0xff]
  %v101 = vld [vmem:[%s1 + $0x240] sm:$0xff]
  %v102 = vld [vmem:[%s1 + $0x248] sm:$0xff]
  %v103 = vld [vmem:[%s1 + $0x250] sm:$0xff]
  %v104 = vld [vmem:[%s1 + $0x258] sm:$0xff]
  %v105 = vld [vmem:[%s1 + $0x260] sm:$0xff]
  %v106 = vld [vmem:[%s1 + $0x268] sm:$0xff]
  %v107 = vld [vmem:[%s1 + $0x270] sm:$0xff]
  %v108 = vld [vmem:[%s1 + $0x278] sm:$0xff]
  %v109 = vld [vmem:[%s1 + $0x280] sm:$0xff]
  %v110 = vld [vmem:[%s1 + $0x288] sm:$0xff]
  %v111 = vld [vmem:[%s1 + $0x290] sm:$0xff]
  %v112 = vld [vmem:[%s1 + $0x298] sm:$0xff]
  %v113 = vld [vmem:[%s1 + $0x2a0] sm:$0xff]
  %v114 = vld [vmem:[%s1 + $0x2a8] sm:$0xff]
  %v115 = vld [vmem:[%s1 + $0x2b0] sm:$0xff]
  %v116 = vld [vmem:[%s1 + $0x2b8] sm:$0xff]
  %v117 = vld [vmem:[%s1 + $0x2c0] sm:$0xff]
  %v118 = vld [vmem:[%s1 + $0x2c8] sm:$0xff]
  %v119 = vld [vmem:[%s1 + $0x2d0] sm:$0xff]
  %v120 = vld [vmem:[%s1 + $0x2d8] sm:$0xff]
  %v121 = vld [vmem:[%s1 + $0x2e0] sm:$0xff]
  %v122 = vld [vmem:[%s1 + $0x2e8] sm:$0xff]
  %v123 = vld [vmem:[%s1 + $0x2f0] sm:$0xff]
  %v124 = vld [vmem:[%s1 + $0x2f8] sm:$0xff]
  %v125 = vld [vmem:[%s1 + $0x300] sm:$0xff]
  %v126 = vld [vmem:[%s1 + $0x308] sm:$0xff]
  %v127 = vld [vmem:[%s1 + $0x310] sm:$0xff]
  %v128 = vld [vmem:[%s1 + $0x318] sm:$0xff]
  %v129 = vld [vmem:[%s1 + $0x320] sm:$0xff]
  %v130 = vld [vmem:[%s1 + $0x328] sm:$0xff]
  %v131 = vld [vmem:[%s1 + $0x330] sm:$0xff]
  %v132 = vld [vmem:[%s1 + $0x338] sm:$0xff]
  %v133 = vld [vmem:[%s1 + $0x340] sm:$0xff]
  %v134 = vld [vmem:[%s1 + $0x348] sm:$0xff]
  %v135 = vld [vmem:[%s1 + $0x350] sm:$0xff]
  %v136 = vld [vmem:[%s1 + $0x358] sm:$0xff]
  %v137 = vld [vmem:[%s1 + $0x360] sm:$0xff]
  %v138 = vld [vmem:[%s1 + $0x368] sm:$0xff]
  %v139 = vld [vmem:[%s1 + $0x370] sm:$0xff]
  %v140 = vld [vmem:[%s1 + $0x378] sm:$0xff]
  %v141 = vld [vmem:[%s1 + $0x380] sm:$0xff]
  %v142 = vld [vmem:[%s1 + $0x388] sm:$0xff]
  %v143 = vld [vmem:[%s1 + $0x390] sm:$0xff]
  %v144 = vld [vmem:[%s1 + $0x398] sm:$0xff]
  %v145 = vld [vmem:[%s1 + $0x3a0] sm:$0xff]
  %v146 = vld [vmem:[%s1 + $0x3a8] sm:$0xff]
  %v147 = vld [vmem:[%s1 + $0x3b0] sm:$0xff]
  %v148 = vld [vmem:[%s1 + $0x3b8] sm:$0xff]
  %v149 = vld [vmem:[%s1 + $0x3c0] sm:$0xff]
  %v150 = vld [vmem:[%s1 + $0x3c8] sm:$0xff]
  %v151 = vld [vmem:[%s1 + $0x3d0] sm:$0xff]
  %v152 = vld [vmem:[%s1 + $0x3d8] sm:$0xff]
  %v153 = vld [vmem:[%s1 + $0x3e0] sm:$0xff]
  %v154 = vld [vmem:[%s1 + $0x3e8] sm:$0xff]
  %v155 = vld [vmem:[%s1 + $0x3f0] sm:$0xff]
  %v156 = vld [vmem:[%s1 + $0x3f8] sm:$0xff]
  %v157 = vld [vmem:[%s1 + $0x400] sm:$0xff]
  %v158 = vld [vmem:[%s1 + $0x408] sm:$0xff]
  %v159 = vld [vmem:[%s1 + $0x410] sm:$0xff]
  %v160 = vld [vmem:[%s1 + $0x418] sm:$0xff]
  %v161 = vld [vmem:[%s1 + $0x420] sm:$0xff]
  %v162 = vld [vmem:[%s1 + $0x428] sm:$0xff]
  %v163 = vld [vmem:[%s1 + $0x430] sm:$0xff]
  %v164 = vld [vmem:[%s1 + $0x438] sm:$0xff]
  %v165 = vld [vmem:[%s1 + $0x440] sm:$0xff]
  %v166 = vld [vmem:[%s1 + $0x448] sm:$0xff]
  %v167 = vld [vmem:[%s1 + $0x450] sm:$0xff]
  %v168 = vld [vmem:[%s1 + $0x458] sm:$0xff]
  %v169 = vld [vmem:[%s1 + $0x460] sm:$0xff]
  %v170 = vld [vmem:[%s1 + $0x468] sm:$0xff]
  %v171 = vld [vmem:[%s1 + $0x470] sm:$0xff]
  %v172 = vld [vmem:[%s1 + $0x478] sm:$0xff]
  %v173 = vld [vmem:[%s1 + $0x480] sm:$0xff]
  %v174 = vld [vmem:[%s1 + $0x488] sm:$0xff]
  %v175 = vld [vmem:[%s1 + $0x490] sm:$0xff]
  %v176 = vld [vmem:[%s1 + $0x498] sm:$0xff]
  %v177 = vld [vmem:[%s1 + $0x4a0] sm:$0xff]
  %v178 = vld [vmem:[%s1 + $0x4a8] sm:$0xff]
  %v179 = vld [vmem:[%s1 + $0x4b0] sm:$0xff]
  %v180 = vld [vmem:[%s1 + $0x4b8] sm:$0xff]
  %v181 = vld [vmem:[%s1 + $0x4c0] sm:$0xff]
  %v182 = vld [vmem:[%s1 + $0x4c8] sm:$0xff]
  %v183 = vld [vmem:[%s1 + $0x4d0] sm:$0xff]
  %v184 = vld [vmem:[%s1 + $0x4d8] sm:$0xff]
  %v185 = vld [vmem:[%s1 + $0x4e0] sm:$0xff]
  %v186 = vld [vmem:[%s1 + $0x4e8] sm:$0xff]
  %v187 = vld [vmem:[%s1 + $0x4f0] sm:$0xff]
  %v188 = vld [vmem:[%s1 + $0x4f8] sm:$0xff]
  %v189 = vld [vmem:[%s1 + $0x500] sm:$0xff]
  %v190 = vld [vmem:[%s1 + $0x508] sm:$0xff]
  %v191 = vld [vmem:[%s1 + $0x510] sm:$0xff]
  %v192 = vld [vmem:[%s1 + $0x518] sm:$0xff]
  %v193 = vld [vmem:[%s1 + $0x520] sm:$0xff]
  %v194 = vld [vmem:[%s1 + $0x528] sm:$0xff]
  %v195 = vld [vmem:[%s1 + $0x530] sm:$0xff]
  %v196 = vld [vmem:[%s1 + $0x538] sm:$0xff]
  %v197 = vld [vmem:[%s1 + $0x540] sm:$0xff]
  %v198 = vld [vmem:[%s1 + $0x548] sm:$0xff]
  %v199 = vld [vmem:[%s1 + $0x550] sm:$0xff]
  %v200 = vld [vmem:[%s1 + $0x558] sm:$0xff]
  %v201 = vld [vmem:[%s1 + $0x560] sm:$0xff]
  %v202 = vld [vmem:[%s1 + $0x568] sm:$0xff]
  %v203 = vld [vmem:[%s1 + $0x570] sm:$0xff]
  %v204 = vld [vmem:[%s1 + $0x578] sm:$0xff]
  %v205 = vld [vmem:[%s1 + $0x580] sm:$0xff]
  %v206 = vld [vmem:[%s1 + $0x588] sm:$0xff]
  %v207 = vld [vmem:[%s1 + $0x590] sm:$0xff]
  %v208 = vld [vmem:[%s1 + $0x598] sm:$0xff]
  %v209 = vld [vmem:[%s1 + $0x5a0] sm:$0xff]
  %v210 = vld [vmem:[%s1 + $0x5a8] sm:$0xff]
  %v211 = vld [vmem:[%s1 + $0x5b0] sm:$0xff]
  %v212 = vld [vmem:[%s1 + $0x5b8] sm:$0xff]
  %v213 = vld [vmem:[%s1 + $0x5c0] sm:$0xff]
  %v214 = vld [vmem:[%s1 + $0x5c8] sm:$0xff]
  %v215 = vld [vmem:[%s1 + $0x5d0] sm:$0xff]
  %v216 = vld [vmem:[%s1 + $0x5d8] sm:$0xff]
  %v217 = vld [vmem:[%s1 + $0x5e0] sm:$0xff]
  %v218 = vld [vmem:[%s1 + $0x5e8] sm:$0xff]
  %v219 = vld [vmem:[%s1 + $0x5f0] sm:$0xff]
  %v220 = vld [vmem:[%s1 + $0x5f8] sm:$0xff]
  %v221 = vld [vmem:[%s1 + $0x600] sm:$0xff]
  %v222 = vld [vmem:[%s1 + $0x608] sm:$0xff]
  %v223 = vld [vmem:[%s1 + $0x610] sm:$0xff]
  %v224 = vld [vmem:[%s1 + $0x618] sm:$0xff]
  %v225 = vld [vmem:[%s1 + $0x620] sm:$0xff]
  %v226 = vld [vmem:[%s1 + $0x628] sm:$0xff]
  %v227 = vld [vmem:[%s1 + $0x630] sm:$0xff]
  %v228 = vld [vmem:[%s1 + $0x638] sm:$0xff]
  %v229 = vld [vmem:[%s2] sm:$0xf]
  %v231 = vperm.slane %v229, 0
  %v232 = vperm.slane %v229, 1
  %v233 = vperm.slane %v229, 2
  %v234 = vperm.slane %v229, 3
  %v247 = vunpack.c.l.b16 %v21
  %v248 = vunpack.c.h.b16 %v21
  %v249 = vunpack.c.l.b16 %v22
  %v250 = vunpack.c.h.b16 %v22
  %v251 = vunpack.c.l.b16 %v23
  %v252 = vunpack.c.h.b16 %v23
  %v253 = vunpack.c.l.b16 %v24
  %v254 = vunpack.c.l.b16 %v25
  %v255 = vunpack.c.h.b16 %v25
  %v256 = vunpack.c.l.b16 %v26
  %v257 = vunpack.c.h.b16 %v26
  %v258 = vunpack.c.l.b16 %v27
  %v259 = vunpack.c.h.b16 %v27
  %v260 = vunpack.c.l.b16 %v28
  %v261 = vpack.c.b16 %v254, %v247
  %v262 = vpack.c.b16 %v255, %v248
  %v263 = vpack.c.b16 %v256, %v249
  %v264 = vpack.c.b16 %v257, %v250
  %v265 = vpack.c.b16 %v258, %v251
  %v266 = vpack.c.b16 %v259, %v252
  %v267 = vpack.c.b16 %v260, %v253
  %v474 = vunpack.c.l.b16 %v29
  %v475 = vunpack.c.h.b16 %v29
  %v476 = vunpack.c.l.b16 %v30
  %v477 = vunpack.c.h.b16 %v30
  %v478 = vunpack.c.l.b16 %v31
  %v479 = vunpack.c.h.b16 %v31
  %v480 = vunpack.c.l.b16 %v32
  %v481 = vunpack.c.h.b16 %v32
  %v482 = vunpack.c.l.b16 %v33
  %v483 = vunpack.c.h.b16 %v33
  %v484 = vunpack.c.l.b16 %v34
  %v485 = vunpack.c.h.b16 %v34
  %v486 = vunpack.c.l.b16 %v35
  %v487 = vunpack.c.h.b16 %v35
  %v488 = vunpack.c.l.b16 %v36
  %v489 = vunpack.c.h.b16 %v36
  %v490 = vunpack.c.l.b16 %v37
  %v491 = vunpack.c.h.b16 %v37
  %v492 = vunpack.c.l.b16 %v38
  %v493 = vunpack.c.h.b16 %v38
  %v494 = vunpack.c.l.b16 %v39
  %v495 = vunpack.c.h.b16 %v39
  %v496 = vunpack.c.l.b16 %v40
  %v497 = vunpack.c.h.b16 %v40
  %v498 = vunpack.c.l.b16 %v41
  %v499 = vunpack.c.h.b16 %v41
  %v500 = vunpack.c.l.b16 %v42
  %v501 = vunpack.c.h.b16 %v42
  %v502 = vunpack.c.l.b16 %v43
  %v503 = vunpack.c.h.b16 %v43
  %v504 = vunpack.c.l.b16 %v44
  %v505 = vunpack.c.h.b16 %v44
  %v506 = vunpack.c.l.b16 %v45
  %v507 = vunpack.c.h.b16 %v45
  %v508 = vunpack.c.l.b16 %v46
  %v509 = vunpack.c.h.b16 %v46
  %v510 = vunpack.c.l.b16 %v47
  %v511 = vunpack.c.h.b16 %v47
  %v512 = vunpack.c.l.b16 %v48
  %v513 = vunpack.c.h.b16 %v48
  %v514 = vunpack.c.l.b16 %v49
  %v515 = vunpack.c.h.b16 %v49
  %v516 = vunpack.c.l.b16 %v50
  %v517 = vunpack.c.h.b16 %v50
  %v518 = vunpack.c.l.b16 %v51
  %v519 = vunpack.c.h.b16 %v51
  %v520 = vunpack.c.l.b16 %v52
  %v521 = vunpack.c.h.b16 %v52
  %v522 = vunpack.c.l.b16 %v53
  %v523 = vunpack.c.h.b16 %v53
  %v524 = vunpack.c.l.b16 %v54
  %v525 = vunpack.c.h.b16 %v54
  %v526 = vunpack.c.l.b16 %v55
  %v527 = vunpack.c.h.b16 %v55
  %v528 = vunpack.c.l.b16 %v56
  %v529 = vunpack.c.h.b16 %v56
  %v530 = vunpack.c.l.b16 %v57
  %v531 = vunpack.c.h.b16 %v57
  %v532 = vunpack.c.l.b16 %v58
  %v533 = vunpack.c.h.b16 %v58
  %v534 = vunpack.c.l.b16 %v59
  %v535 = vunpack.c.h.b16 %v59
  %v536 = vunpack.c.l.b16 %v60
  %v537 = vunpack.c.h.b16 %v60
  %v538 = vunpack.c.l.b16 %v61
  %v539 = vunpack.c.h.b16 %v61
  %v540 = vunpack.c.l.b16 %v62
  %v541 = vunpack.c.h.b16 %v62
  %v542 = vunpack.c.l.b16 %v63
  %v543 = vunpack.c.h.b16 %v63
  %v544 = vunpack.c.l.b16 %v64
  %v545 = vunpack.c.h.b16 %v64
  %v546 = vunpack.c.l.b16 %v65
  %v547 = vunpack.c.h.b16 %v65
  %v548 = vunpack.c.l.b16 %v66
  %v549 = vunpack.c.h.b16 %v66
  %v550 = vunpack.c.l.b16 %v67
  %v551 = vunpack.c.h.b16 %v67
  %v552 = vunpack.c.l.b16 %v68
  %v553 = vunpack.c.h.b16 %v68
  %v554 = vunpack.c.l.b16 %v69
  %v555 = vunpack.c.h.b16 %v69
  %v556 = vunpack.c.l.b16 %v70
  %v557 = vunpack.c.h.b16 %v70
  %v558 = vunpack.c.l.b16 %v71
  %v559 = vunpack.c.h.b16 %v71
  %v560 = vunpack.c.l.b16 %v72
  %v561 = vunpack.c.h.b16 %v72
  %v562 = vunpack.c.l.b16 %v73
  %v563 = vunpack.c.h.b16 %v73
  %v564 = vunpack.c.l.b16 %v74
  %v565 = vunpack.c.h.b16 %v74
  %v566 = vunpack.c.l.b16 %v75
  %v567 = vunpack.c.h.b16 %v75
  %v568 = vunpack.c.l.b16 %v76
  %v569 = vunpack.c.h.b16 %v76
  %v570 = vunpack.c.l.b16 %v77
  %v571 = vunpack.c.h.b16 %v77
  %v572 = vunpack.c.l.b16 %v78
  %v573 = vunpack.c.h.b16 %v78
  %v574 = vunpack.c.l.b16 %v79
  %v575 = vunpack.c.h.b16 %v79
  %v576 = vunpack.c.l.b16 %v80
  %v577 = vunpack.c.h.b16 %v80
  %v578 = vunpack.c.l.b16 %v81
  %v579 = vunpack.c.h.b16 %v81
  %v580 = vunpack.c.l.b16 %v82
  %v581 = vunpack.c.h.b16 %v82
  %v582 = vunpack.c.l.b16 %v83
  %v583 = vunpack.c.h.b16 %v83
  %v584 = vunpack.c.l.b16 %v84
  %v585 = vunpack.c.h.b16 %v84
  %v586 = vunpack.c.l.b16 %v85
  %v587 = vunpack.c.h.b16 %v85
  %v588 = vunpack.c.l.b16 %v86
  %v589 = vunpack.c.h.b16 %v86
  %v590 = vunpack.c.l.b16 %v87
  %v591 = vunpack.c.h.b16 %v87
  %v592 = vunpack.c.l.b16 %v88
  %v593 = vunpack.c.h.b16 %v88
  %v594 = vunpack.c.l.b16 %v89
  %v595 = vunpack.c.h.b16 %v89
  %v596 = vunpack.c.l.b16 %v90
  %v597 = vunpack.c.h.b16 %v90
  %v598 = vunpack.c.l.b16 %v91
  %v599 = vunpack.c.h.b16 %v91
  %v600 = vunpack.c.l.b16 %v92
  %v601 = vunpack.c.h.b16 %v92
  %v602 = vunpack.c.l.b16 %v93
  %v603 = vunpack.c.h.b16 %v93
  %v604 = vunpack.c.l.b16 %v94
  %v605 = vunpack.c.h.b16 %v94
  %v606 = vunpack.c.l.b16 %v95
  %v607 = vunpack.c.h.b16 %v95
  %v608 = vunpack.c.l.b16 %v96
  %v609 = vunpack.c.h.b16 %v96
  %v610 = vunpack.c.l.b16 %v97
  %v611 = vunpack.c.h.b16 %v97
  %v612 = vunpack.c.l.b16 %v98
  %v613 = vunpack.c.h.b16 %v98
  %v614 = vunpack.c.l.b16 %v99
  %v615 = vunpack.c.h.b16 %v99
  %v616 = vunpack.c.l.b16 %v100
  %v617 = vunpack.c.h.b16 %v100
  %v618 = vunpack.c.l.b16 %v101
  %v619 = vunpack.c.h.b16 %v101
  %v620 = vunpack.c.l.b16 %v102
  %v621 = vunpack.c.h.b16 %v102
  %v622 = vunpack.c.l.b16 %v103
  %v623 = vunpack.c.h.b16 %v103
  %v624 = vunpack.c.l.b16 %v104
  %v625 = vunpack.c.h.b16 %v104
  %v626 = vunpack.c.l.b16 %v105
  %v627 = vunpack.c.h.b16 %v105
  %v628 = vunpack.c.l.b16 %v106
  %v629 = vunpack.c.h.b16 %v106
  %v630 = vunpack.c.l.b16 %v107
  %v631 = vunpack.c.h.b16 %v107
  %v632 = vunpack.c.l.b16 %v108
  %v633 = vunpack.c.h.b16 %v108
  %v634 = vunpack.c.l.b16 %v109
  %v635 = vunpack.c.h.b16 %v109
  %v636 = vunpack.c.l.b16 %v110
  %v637 = vunpack.c.h.b16 %v110
  %v638 = vunpack.c.l.b16 %v111
  %v639 = vunpack.c.h.b16 %v111
  %v640 = vunpack.c.l.b16 %v112
  %v641 = vunpack.c.h.b16 %v112
  %v642 = vunpack.c.l.b16 %v113
  %v643 = vunpack.c.h.b16 %v113
  %v644 = vunpack.c.l.b16 %v114
  %v645 = vunpack.c.h.b16 %v114
  %v646 = vunpack.c.l.b16 %v115
  %v647 = vunpack.c.h.b16 %v115
  %v648 = vunpack.c.l.b16 %v116
  %v649 = vunpack.c.h.b16 %v116
  %v650 = vunpack.c.l.b16 %v117
  %v651 = vunpack.c.h.b16 %v117
  %v652 = vunpack.c.l.b16 %v118
  %v653 = vunpack.c.h.b16 %v118
  %v654 = vunpack.c.l.b16 %v119
  %v655 = vunpack.c.h.b16 %v119
  %v656 = vunpack.c.l.b16 %v120
  %v657 = vunpack.c.h.b16 %v120
  %v658 = vunpack.c.l.b16 %v121
  %v659 = vunpack.c.h.b16 %v121
  %v660 = vunpack.c.l.b16 %v122
  %v661 = vunpack.c.h.b16 %v122
  %v662 = vunpack.c.l.b16 %v123
  %v663 = vunpack.c.h.b16 %v123
  %v664 = vunpack.c.l.b16 %v124
  %v665 = vunpack.c.h.b16 %v124
  %v666 = vunpack.c.l.b16 %v125
  %v667 = vunpack.c.h.b16 %v125
  %v668 = vunpack.c.l.b16 %v126
  %v669 = vunpack.c.h.b16 %v126
  %v670 = vunpack.c.l.b16 %v127
  %v671 = vunpack.c.h.b16 %v127
  %v672 = vunpack.c.l.b16 %v128
  %v673 = vunpack.c.h.b16 %v128
  %v674 = vunpack.c.l.b16 %v129
  %v675 = vunpack.c.h.b16 %v129
  %v676 = vunpack.c.l.b16 %v130
  %v677 = vunpack.c.h.b16 %v130
  %v678 = vunpack.c.l.b16 %v131
  %v679 = vunpack.c.h.b16 %v131
  %v680 = vunpack.c.l.b16 %v132
  %v681 = vunpack.c.h.b16 %v132
  %v682 = vunpack.c.l.b16 %v133
  %v683 = vunpack.c.h.b16 %v133
  %v684 = vunpack.c.l.b16 %v134
  %v685 = vunpack.c.h.b16 %v134
  %v686 = vunpack.c.l.b16 %v135
  %v687 = vunpack.c.h.b16 %v135
  %v688 = vunpack.c.l.b16 %v136
  %v689 = vunpack.c.h.b16 %v136
  %v690 = vunpack.c.l.b16 %v137
  %v691 = vunpack.c.h.b16 %v137
  %v692 = vunpack.c.l.b16 %v138
  %v693 = vunpack.c.h.b16 %v138
  %v694 = vunpack.c.l.b16 %v139
  %v695 = vunpack.c.h.b16 %v139
  %v696 = vunpack.c.l.b16 %v140
  %v697 = vunpack.c.h.b16 %v140
  %v698 = vunpack.c.l.b16 %v141
  %v699 = vunpack.c.h.b16 %v141
  %v700 = vunpack.c.l.b16 %v142
  %v701 = vunpack.c.h.b16 %v142
  %v702 = vunpack.c.l.b16 %v143
  %v703 = vunpack.c.h.b16 %v143
  %v704 = vunpack.c.l.b16 %v144
  %v705 = vunpack.c.h.b16 %v144
  %v706 = vunpack.c.l.b16 %v145
  %v707 = vunpack.c.h.b16 %v145
  %v708 = vunpack.c.l.b16 %v146
  %v709 = vunpack.c.h.b16 %v146
  %v710 = vunpack.c.l.b16 %v147
  %v711 = vunpack.c.h.b16 %v147
  %v712 = vunpack.c.l.b16 %v148
  %v713 = vunpack.c.h.b16 %v148
  %v714 = vunpack.c.l.b16 %v149
  %v715 = vunpack.c.h.b16 %v149
  %v716 = vunpack.c.l.b16 %v150
  %v717 = vunpack.c.h.b16 %v150
  %v718 = vunpack.c.l.b16 %v151
  %v719 = vunpack.c.h.b16 %v151
  %v720 = vunpack.c.l.b16 %v152
  %v721 = vunpack.c.h.b16 %v152
  %v722 = vunpack.c.l.b16 %v153
  %v723 = vunpack.c.h.b16 %v153
  %v724 = vunpack.c.l.b16 %v154
  %v725 = vunpack.c.h.b16 %v154
  %v726 = vunpack.c.l.b16 %v155
  %v727 = vunpack.c.h.b16 %v155
  %v728 = vunpack.c.l.b16 %v156
  %v729 = vunpack.c.h.b16 %v156
  %v730 = vunpack.c.l.b16 %v157
  %v731 = vunpack.c.h.b16 %v157
  %v732 = vunpack.c.l.b16 %v158
  %v733 = vunpack.c.h.b16 %v158
  %v734 = vunpack.c.l.b16 %v159
  %v735 = vunpack.c.h.b16 %v159
  %v736 = vunpack.c.l.b16 %v160
  %v737 = vunpack.c.h.b16 %v160
  %v738 = vunpack.c.l.b16 %v161
  %v739 = vunpack.c.h.b16 %v161
  %v740 = vunpack.c.l.b16 %v162
  %v741 = vunpack.c.h.b16 %v162
  %v742 = vunpack.c.l.b16 %v163
  %v743 = vunpack.c.h.b16 %v163
  %v744 = vunpack.c.l.b16 %v164
  %v745 = vunpack.c.h.b16 %v164
  %v746 = vunpack.c.l.b16 %v165
  %v747 = vunpack.c.h.b16 %v165
  %v748 = vunpack.c.l.b16 %v166
  %v749 = vunpack.c.h.b16 %v166
  %v750 = vunpack.c.l.b16 %v167
  %v751 = vunpack.c.h.b16 %v167
  %v752 = vunpack.c.l.b16 %v168
  %v753 = vunpack.c.h.b16 %v168
  %v754 = vunpack.c.l.b16 %v169
  %v755 = vunpack.c.h.b16 %v169
  %v756 = vunpack.c.l.b16 %v170
  %v757 = vunpack.c.h.b16 %v170
  %v758 = vunpack.c.l.b16 %v171
  %v759 = vunpack.c.h.b16 %v171
  %v760 = vunpack.c.l.b16 %v172
  %v761 = vunpack.c.h.b16 %v172
  %v762 = vunpack.c.l.b16 %v173
  %v763 = vunpack.c.h.b16 %v173
  %v764 = vunpack.c.l.b16 %v174
  %v765 = vunpack.c.h.b16 %v174
  %v766 = vunpack.c.l.b16 %v175
  %v767 = vunpack.c.h.b16 %v175
  %v768 = vunpack.c.l.b16 %v176
  %v769 = vunpack.c.h.b16 %v176
  %v770 = vunpack.c.l.b16 %v177
  %v771 = vunpack.c.h.b16 %v177
  %v772 = vunpack.c.l.b16 %v178
  %v773 = vunpack.c.h.b16 %v178
  %v774 = vunpack.c.l.b16 %v179
  %v775 = vunpack.c.h.b16 %v179
  %v776 = vunpack.c.l.b16 %v180
  %v777 = vunpack.c.h.b16 %v180
  %v778 = vunpack.c.l.b16 %v181
  %v779 = vunpack.c.h.b16 %v181
  %v780 = vunpack.c.l.b16 %v182
  %v781 = vunpack.c.h.b16 %v182
  %v782 = vunpack.c.l.b16 %v183
  %v783 = vunpack.c.h.b16 %v183
  %v784 = vunpack.c.l.b16 %v184
  %v785 = vunpack.c.h.b16 %v184
  %v786 = vunpack.c.l.b16 %v185
  %v787 = vunpack.c.h.b16 %v185
  %v788 = vunpack.c.l.b16 %v186
  %v789 = vunpack.c.h.b16 %v186
  %v790 = vunpack.c.l.b16 %v187
  %v791 = vunpack.c.h.b16 %v187
  %v792 = vunpack.c.l.b16 %v188
  %v793 = vunpack.c.h.b16 %v188
  %v794 = vunpack.c.l.b16 %v189
  %v795 = vunpack.c.h.b16 %v189
  %v796 = vunpack.c.l.b16 %v190
  %v797 = vunpack.c.h.b16 %v190
  %v798 = vunpack.c.l.b16 %v191
  %v799 = vunpack.c.h.b16 %v191
  %v800 = vunpack.c.l.b16 %v192
  %v801 = vunpack.c.h.b16 %v192
  %v802 = vunpack.c.l.b16 %v193
  %v803 = vunpack.c.h.b16 %v193
  %v804 = vunpack.c.l.b16 %v194
  %v805 = vunpack.c.h.b16 %v194
  %v806 = vunpack.c.l.b16 %v195
  %v807 = vunpack.c.h.b16 %v195
  %v808 = vunpack.c.l.b16 %v196
  %v809 = vunpack.c.h.b16 %v196
  %v810 = vunpack.c.l.b16 %v197
  %v811 = vunpack.c.h.b16 %v197
  %v812 = vunpack.c.l.b16 %v198
  %v813 = vunpack.c.h.b16 %v198
  %v814 = vunpack.c.l.b16 %v199
  %v815 = vunpack.c.h.b16 %v199
  %v816 = vunpack.c.l.b16 %v200
  %v817 = vunpack.c.h.b16 %v200
  %v818 = vunpack.c.l.b16 %v201
  %v819 = vunpack.c.h.b16 %v201
  %v820 = vunpack.c.l.b16 %v202
  %v821 = vunpack.c.h.b16 %v202
  %v822 = vunpack.c.l.b16 %v203
  %v823 = vunpack.c.h.b16 %v203
  %v824 = vunpack.c.l.b16 %v204
  %v825 = vunpack.c.h.b16 %v204
  %v826 = vunpack.c.l.b16 %v205
  %v827 = vunpack.c.h.b16 %v205
  %v828 = vunpack.c.l.b16 %v206
  %v829 = vunpack.c.h.b16 %v206
  %v830 = vunpack.c.l.b16 %v207
  %v831 = vunpack.c.h.b16 %v207
  %v832 = vunpack.c.l.b16 %v208
  %v833 = vunpack.c.h.b16 %v208
  %v834 = vunpack.c.l.b16 %v209
  %v835 = vunpack.c.h.b16 %v209
  %v836 = vunpack.c.l.b16 %v210
  %v837 = vunpack.c.h.b16 %v210
  %v838 = vunpack.c.l.b16 %v211
  %v839 = vunpack.c.h.b16 %v211
  %v840 = vunpack.c.l.b16 %v212
  %v841 = vunpack.c.h.b16 %v212
  %v842 = vunpack.c.l.b16 %v213
  %v843 = vunpack.c.h.b16 %v213
  %v844 = vunpack.c.l.b16 %v214
  %v845 = vunpack.c.h.b16 %v214
  %v846 = vunpack.c.l.b16 %v215
  %v847 = vunpack.c.h.b16 %v215
  %v848 = vunpack.c.l.b16 %v216
  %v849 = vunpack.c.h.b16 %v216
  %v850 = vunpack.c.l.b16 %v217
  %v851 = vunpack.c.h.b16 %v217
  %v852 = vunpack.c.l.b16 %v218
  %v853 = vunpack.c.h.b16 %v218
  %v854 = vunpack.c.l.b16 %v219
  %v855 = vunpack.c.h.b16 %v219
  %v856 = vunpack.c.l.b16 %v220
  %v857 = vunpack.c.h.b16 %v220
  %v858 = vunpack.c.l.b16 %v221
  %v859 = vunpack.c.h.b16 %v221
  %v860 = vunpack.c.l.b16 %v222
  %v861 = vunpack.c.h.b16 %v222
  %v862 = vunpack.c.l.b16 %v223
  %v863 = vunpack.c.h.b16 %v223
  %v864 = vunpack.c.l.b16 %v224
  %v865 = vunpack.c.h.b16 %v224
  %v866 = vunpack.c.l.b16 %v225
  %v867 = vunpack.c.h.b16 %v225
  %v868 = vunpack.c.l.b16 %v226
  %v869 = vunpack.c.h.b16 %v226
  %v870 = vunpack.c.l.b16 %v227
  %v871 = vunpack.c.h.b16 %v227
  %v872 = vunpack.c.l.b16 %v228
  %v873 = vunpack.c.h.b16 %v228
  %v874 = vpack.c.b16 %v478, %v474
  %v875 = vpack.c.b16 %v479, %v475
  %v876 = vpack.c.b16 %v480, %v476
  %v877 = vpack.c.b16 %v481, %v477
  %v878 = vpack.c.b16 %v486, %v482
  %v879 = vpack.c.b16 %v487, %v483
  %v880 = vpack.c.b16 %v488, %v484
  %v881 = vpack.c.b16 %v489, %v485
  %v882 = vpack.c.b16 %v494, %v490
  %v883 = vpack.c.b16 %v495, %v491
  %v884 = vpack.c.b16 %v496, %v492
  %v885 = vpack.c.b16 %v497, %v493
  %v886 = vpack.c.b16 %v502, %v498
  %v887 = vpack.c.b16 %v503, %v499
  %v888 = vpack.c.b16 %v504, %v500
  %v889 = vpack.c.b16 %v505, %v501
  %v890 = vpack.c.b16 %v510, %v506
  %v891 = vpack.c.b16 %v511, %v507
  %v892 = vpack.c.b16 %v512, %v508
  %v893 = vpack.c.b16 %v513, %v509
  %v894 = vpack.c.b16 %v518, %v514
  %v895 = vpack.c.b16 %v519, %v515
  %v896 = vpack.c.b16 %v520, %v516
  %v897 = vpack.c.b16 %v521, %v517
  %v898 = vpack.c.b16 %v526, %v522
  %v899 = vpack.c.b16 %v527, %v523
  %v900 = vpack.c.b16 %v528, %v524
  %v901 = vpack.c.b16 %v529, %v525
  %v902 = vpack.c.b16 %v534, %v530
  %v903 = vpack.c.b16 %v535, %v531
  %v904 = vpack.c.b16 %v536, %v532
  %v905 = vpack.c.b16 %v537, %v533
  %v906 = vpack.c.b16 %v542, %v538
  %v907 = vpack.c.b16 %v543, %v539
  %v908 = vpack.c.b16 %v544, %v540
  %v909 = vpack.c.b16 %v545, %v541
  %v910 = vpack.c.b16 %v550, %v546
  %v911 = vpack.c.b16 %v551, %v547
  %v912 = vpack.c.b16 %v552, %v548
  %v913 = vpack.c.b16 %v553, %v549
  %v914 = vpack.c.b16 %v558, %v554
  %v915 = vpack.c.b16 %v559, %v555
  %v916 = vpack.c.b16 %v560, %v556
  %v917 = vpack.c.b16 %v561, %v557
  %v918 = vpack.c.b16 %v566, %v562
  %v919 = vpack.c.b16 %v567, %v563
  %v920 = vpack.c.b16 %v568, %v564
  %v921 = vpack.c.b16 %v569, %v565
  %v922 = vpack.c.b16 %v574, %v570
  %v923 = vpack.c.b16 %v575, %v571
  %v924 = vpack.c.b16 %v576, %v572
  %v925 = vpack.c.b16 %v577, %v573
  %v926 = vpack.c.b16 %v582, %v578
  %v927 = vpack.c.b16 %v583, %v579
  %v928 = vpack.c.b16 %v584, %v580
  %v929 = vpack.c.b16 %v585, %v581
  %v930 = vpack.c.b16 %v590, %v586
  %v931 = vpack.c.b16 %v591, %v587
  %v932 = vpack.c.b16 %v592, %v588
  %v933 = vpack.c.b16 %v593, %v589
  %v934 = vpack.c.b16 %v598, %v594
  %v935 = vpack.c.b16 %v599, %v595
  %v936 = vpack.c.b16 %v600, %v596
  %v937 = vpack.c.b16 %v601, %v597
  %v938 = vpack.c.b16 %v606, %v602
  %v939 = vpack.c.b16 %v607, %v603
  %v940 = vpack.c.b16 %v608, %v604
  %v941 = vpack.c.b16 %v609, %v605
  %v942 = vpack.c.b16 %v614, %v610
  %v943 = vpack.c.b16 %v615, %v611
  %v944 = vpack.c.b16 %v616, %v612
  %v945 = vpack.c.b16 %v617, %v613
  %v946 = vpack.c.b16 %v622, %v618
  %v947 = vpack.c.b16 %v623, %v619
  %v948 = vpack.c.b16 %v624, %v620
  %v949 = vpack.c.b16 %v625, %v621
  %v950 = vpack.c.b16 %v630, %v626
  %v951 = vpack.c.b16 %v631, %v627
  %v952 = vpack.c.b16 %v632, %v628
  %v953 = vpack.c.b16 %v633, %v629
  %v954 = vpack.c.b16 %v638, %v634
  %v955 = vpack.c.b16 %v639, %v635
  %v956 = vpack.c.b16 %v640, %v636
  %v957 = vpack.c.b16 %v641, %v637
  %v958 = vpack.c.b16 %v646, %v642
  %v959 = vpack.c.b16 %v647, %v643
  %v960 = vpack.c.b16 %v648, %v644
  %v961 = vpack.c.b16 %v649, %v645
  %v962 = vpack.c.b16 %v654, %v650
  %v963 = vpack.c.b16 %v655, %v651
  %v964 = vpack.c.b16 %v656, %v652
  %v965 = vpack.c.b16 %v657, %v653
  %v966 = vpack.c.b16 %v662, %v658
  %v967 = vpack.c.b16 %v663, %v659
  %v968 = vpack.c.b16 %v664, %v660
  %v969 = vpack.c.b16 %v665, %v661
  %v970 = vpack.c.b16 %v670, %v666
  %v971 = vpack.c.b16 %v671, %v667
  %v972 = vpack.c.b16 %v672, %v668
  %v973 = vpack.c.b16 %v673, %v669
  %v974 = vpack.c.b16 %v678, %v674
  %v975 = vpack.c.b16 %v679, %v675
  %v976 = vpack.c.b16 %v680, %v676
  %v977 = vpack.c.b16 %v681, %v677
  %v978 = vpack.c.b16 %v686, %v682
  %v979 = vpack.c.b16 %v687, %v683
  %v980 = vpack.c.b16 %v688, %v684
  %v981 = vpack.c.b16 %v689, %v685
  %v982 = vpack.c.b16 %v694, %v690
  %v983 = vpack.c.b16 %v695, %v691
  %v984 = vpack.c.b16 %v696, %v692
  %v985 = vpack.c.b16 %v697, %v693
  %v986 = vpack.c.b16 %v702, %v698
  %v987 = vpack.c.b16 %v703, %v699
  %v988 = vpack.c.b16 %v704, %v700
  %v989 = vpack.c.b16 %v705, %v701
  %v990 = vpack.c.b16 %v710, %v706
  %v991 = vpack.c.b16 %v711, %v707
  %v992 = vpack.c.b16 %v712, %v708
  %v993 = vpack.c.b16 %v713, %v709
  %v994 = vpack.c.b16 %v718, %v714
  %v995 = vpack.c.b16 %v719, %v715
  %v996 = vpack.c.b16 %v720, %v716
  %v997 = vpack.c.b16 %v721, %v717
  %v998 = vpack.c.b16 %v726, %v722
  %v999 = vpack.c.b16 %v727, %v723
  %v1000 = vpack.c.b16 %v728, %v724
  %v1001 = vpack.c.b16 %v729, %v725
  %v1002 = vpack.c.b16 %v734, %v730
  %v1003 = vpack.c.b16 %v735, %v731
  %v1004 = vpack.c.b16 %v736, %v732
  %v1005 = vpack.c.b16 %v737, %v733
  %v1006 = vpack.c.b16 %v742, %v738
  %v1007 = vpack.c.b16 %v743, %v739
  %v1008 = vpack.c.b16 %v744, %v740
  %v1009 = vpack.c.b16 %v745, %v741
  %v1010 = vpack.c.b16 %v750, %v746
  %v1011 = vpack.c.b16 %v751, %v747
  %v1012 = vpack.c.b16 %v752, %v748
  %v1013 = vpack.c.b16 %v753, %v749
  %v1014 = vpack.c.b16 %v758, %v754
  %v1015 = vpack.c.b16 %v759, %v755
  %v1016 = vpack.c.b16 %v760, %v756
  %v1017 = vpack.c.b16 %v761, %v757
  %v1018 = vpack.c.b16 %v766, %v762
  %v1019 = vpack.c.b16 %v767, %v763
  %v1020 = vpack.c.b16 %v768, %v764
  %v1021 = vpack.c.b16 %v769, %v765
  %v1022 = vpack.c.b16 %v774, %v770
  %v1023 = vpack.c.b16 %v775, %v771
  %v1024 = vpack.c.b16 %v776, %v772
  %v1025 = vpack.c.b16 %v777, %v773
  %v1026 = vpack.c.b16 %v782, %v778
  %v1027 = vpack.c.b16 %v783, %v779
  %v1028 = vpack.c.b16 %v784, %v780
  %v1029 = vpack.c.b16 %v785, %v781
  %v1030 = vpack.c.b16 %v790, %v786
  %v1031 = vpack.c.b16 %v791, %v787
  %v1032 = vpack.c.b16 %v792, %v788
  %v1033 = vpack.c.b16 %v793, %v789
  %v1034 = vpack.c.b16 %v798, %v794
  %v1035 = vpack.c.b16 %v799, %v795
  %v1036 = vpack.c.b16 %v800, %v796
  %v1037 = vpack.c.b16 %v801, %v797
  %v1038 = vpack.c.b16 %v806, %v802
  %v1039 = vpack.c.b16 %v807, %v803
  %v1040 = vpack.c.b16 %v808, %v804
  %v1041 = vpack.c.b16 %v809, %v805
  %v1042 = vpack.c.b16 %v814, %v810
  %v1043 = vpack.c.b16 %v815, %v811
  %v1044 = vpack.c.b16 %v816, %v812
  %v1045 = vpack.c.b16 %v817, %v813
  %v1046 = vpack.c.b16 %v822, %v818
  %v1047 = vpack.c.b16 %v823, %v819
  %v1048 = vpack.c.b16 %v824, %v820
  %v1049 = vpack.c.b16 %v825, %v821
  %v1050 = vpack.c.b16 %v830, %v826
  %v1051 = vpack.c.b16 %v831, %v827
  %v1052 = vpack.c.b16 %v832, %v828
  %v1053 = vpack.c.b16 %v833, %v829
  %v1054 = vpack.c.b16 %v838, %v834
  %v1055 = vpack.c.b16 %v839, %v835
  %v1056 = vpack.c.b16 %v840, %v836
  %v1057 = vpack.c.b16 %v841, %v837
  %v1058 = vpack.c.b16 %v846, %v842
  %v1059 = vpack.c.b16 %v847, %v843
  %v1060 = vpack.c.b16 %v848, %v844
  %v1061 = vpack.c.b16 %v849, %v845
  %v1062 = vpack.c.b16 %v854, %v850
  %v1063 = vpack.c.b16 %v855, %v851
  %v1064 = vpack.c.b16 %v856, %v852
  %v1065 = vpack.c.b16 %v857, %v853
  %v1066 = vpack.c.b16 %v862, %v858
  %v1067 = vpack.c.b16 %v863, %v859
  %v1068 = vpack.c.b16 %v864, %v860
  %v1069 = vpack.c.b16 %v865, %v861
  %v1070 = vpack.c.b16 %v870, %v866
  %v1071 = vpack.c.b16 %v871, %v867
  %v1072 = vpack.c.b16 %v872, %v868
  %v1073 = vpack.c.b16 %v873, %v869
  %vm1274 = vcmask 261120
  %v1276 = vsel %vm1274, %v267, 0
  %1278 = vmatpush.bf16.msra.mxu0 %v902
  %1279 = vmatpush.bf16.msra.mxu0 %v898
  %1280 = vmatpush.bf16.msra.mxu0 %v894
  %1281 = vmatpush.bf16.msra.mxu0 %v890
  %1282 = vmatpush.bf16.msra.mxu0 %v886
  %1283 = vmatpush.bf16.msra.mxu0 %v882
  %1284 = vmatpush.bf16.msra.mxu0 %v878
  %1285 = vmatpush.bf16.msra.mxu0 %v874
  %1286 = vmatmul.bf16.gmra.mxu0 %v261
  %v1287 = vpop.f32.mrf.mxu0
  %v1288 = vadd.f32 %v231, %v1287
  %v1289 = vpop.f32.mrf.mxu0
  %v1290 = vadd.f32 %v231, %v1289
  %1291 = vdwg.mxu0
  %1292 = vmatpush.bf16.msra.mxu0 %v934
  %1293 = vmatpush.bf16.msra.mxu0 %v930
  %1294 = vmatpush.bf16.msra.mxu0 %v926
  %1295 = vmatpush.bf16.msra.mxu0 %v922
  %1296 = vmatpush.bf16.msra.mxu0 %v918
  %1297 = vmatpush.bf16.msra.mxu0 %v914
  %1298 = vmatpush.bf16.msra.mxu0 %v910
  %1299 = vmatpush.bf16.msra.mxu0 %v906
  %1300 = vmatmul.bf16.gmra.mxu0 %v262
  %v1301 = vpop.f32.mrf.mxu0
  %v1302 = vadd.f32 %v1288, %v1301
  %v1303 = vpop.f32.mrf.mxu0
  %v1304 = vadd.f32 %v1290, %v1303
  %1305 = vdwg.mxu0
  %1306 = vmatpush.bf16.msra.mxu0 %v966
  %1307 = vmatpush.bf16.msra.mxu0 %v962
  %1308 = vmatpush.bf16.msra.mxu0 %v958
  %1309 = vmatpush.bf16.msra.mxu0 %v954
  %1310 = vmatpush.bf16.msra.mxu0 %v950
  %1311 = vmatpush.bf16.msra.mxu0 %v946
  %1312 = vmatpush.bf16.msra.mxu0 %v942
  %1313 = vmatpush.bf16.msra.mxu0 %v938
  %1314 = vmatmul.bf16.gmra.mxu0 %v263
  %v1315 = vpop.f32.mrf.mxu0
  %v1316 = vadd.f32 %v1302, %v1315
  %v1317 = vpop.f32.mrf.mxu0
  %v1318 = vadd.f32 %v1304, %v1317
  %1319 = vdwg.mxu0
  %1320 = vmatpush.bf16.msra.mxu0 %v998
  %1321 = vmatpush.bf16.msra.mxu0 %v994
  %1322 = vmatpush.bf16.msra.mxu0 %v990
  %1323 = vmatpush.bf16.msra.mxu0 %v986
  %1324 = vmatpush.bf16.msra.mxu0 %v982
  %1325 = vmatpush.bf16.msra.mxu0 %v978
  %1326 = vmatpush.bf16.msra.mxu0 %v974
  %1327 = vmatpush.bf16.msra.mxu0 %v970
  %1328 = vmatmul.bf16.gmra.mxu0 %v264
  %v1329 = vpop.f32.mrf.mxu0
  %v1330 = vadd.f32 %v1316, %v1329
  %v1331 = vpop.f32.mrf.mxu0
  %v1332 = vadd.f32 %v1318, %v1331
  %1333 = vdwg.mxu0
  %1334 = vmatpush.bf16.msra.mxu0 %v1030
  %1335 = vmatpush.bf16.msra.mxu0 %v1026
  %1336 = vmatpush.bf16.msra.mxu0 %v1022
  %1337 = vmatpush.bf16.msra.mxu0 %v1018
  %1338 = vmatpush.bf16.msra.mxu0 %v1014
  %1339 = vmatpush.bf16.msra.mxu0 %v1010
  %1340 = vmatpush.bf16.msra.mxu0 %v1006
  %1341 = vmatpush.bf16.msra.mxu0 %v1002
  %1342 = vmatmul.bf16.gmra.mxu0 %v265
  %v1343 = vpop.f32.mrf.mxu0
  %v1344 = vadd.f32 %v1330, %v1343
  %v1345 = vpop.f32.mrf.mxu0
  %v1346 = vadd.f32 %v1332, %v1345
  %1347 = vdwg.mxu0
  %1348 = vmatpush.bf16.msra.mxu0 %v1062
  %1349 = vmatpush.bf16.msra.mxu0 %v1058
  %1350 = vmatpush.bf16.msra.mxu0 %v1054
  %1351 = vmatpush.bf16.msra.mxu0 %v1050
  %1352 = vmatpush.bf16.msra.mxu0 %v1046
  %1353 = vmatpush.bf16.msra.mxu0 %v1042
  %1354 = vmatpush.bf16.msra.mxu0 %v1038
  %1355 = vmatpush.bf16.msra.mxu0 %v1034
  %1356 = vmatmul.bf16.gmra.mxu0 %v266
  %v1357 = vpop.f32.mrf.mxu0
  %v1358 = vadd.f32 %v1344, %v1357
  %v1359 = vpop.f32.mrf.mxu0
  %v1360 = vadd.f32 %v1346, %v1359
  %1361 = vdwg.mxu0
  %1362 = vmatpush.bf16.msra.mxu0 0
  %1363 = vmatpush.bf16.msra.mxu0 0
  %1364 = vmatpush.bf16.msra.mxu0 0
  %1365 = vmatpush.bf16.msra.mxu0 0
  %1366 = vmatpush.bf16.msra.mxu0 0
  %1367 = vmatpush.bf16.msra.mxu0 0
  %1368 = vmatpush.bf16.msra.mxu0 %v1070
  %1369 = vmatpush.bf16.msra.mxu0 %v1066
  %1370 = vmatmul.bf16.gmra.mxu0 %v1276
  %v1371 = vpop.f32.mrf.mxu0
  %v1372 = vadd.f32 %v1358, %v1371
  %v1373 = vpop.f32.mrf.mxu0
  %v1374 = vadd.f32 %v1360, %v1373
  %1375 = vdwg.mxu0
  %1376 = vmatpush.bf16.msra.mxu0 %v903
  %1377 = vmatpush.bf16.msra.mxu0 %v899
  %1378 = vmatpush.bf16.msra.mxu0 %v895
  %1379 = vmatpush.bf16.msra.mxu0 %v891
  %1380 = vmatpush.bf16.msra.mxu0 %v887
  %1381 = vmatpush.bf16.msra.mxu0 %v883
  %1382 = vmatpush.bf16.msra.mxu0 %v879
  %1383 = vmatpush.bf16.msra.mxu0 %v875
  %1384 = vmatmul.bf16.gmra.mxu0 %v261
  %v1385 = vpop.f32.mrf.mxu0
  %v1386 = vadd.f32 %v232, %v1385
  %v1387 = vpop.f32.mrf.mxu0
  %v1388 = vadd.f32 %v232, %v1387
  %1389 = vdwg.mxu0
  %1390 = vmatpush.bf16.msra.mxu0 %v935
  %1391 = vmatpush.bf16.msra.mxu0 %v931
  %1392 = vmatpush.bf16.msra.mxu0 %v927
  %1393 = vmatpush.bf16.msra.mxu0 %v923
  %1394 = vmatpush.bf16.msra.mxu0 %v919
  %1395 = vmatpush.bf16.msra.mxu0 %v915
  %1396 = vmatpush.bf16.msra.mxu0 %v911
  %1397 = vmatpush.bf16.msra.mxu0 %v907
  %1398 = vmatmul.bf16.gmra.mxu0 %v262
  %v1399 = vpop.f32.mrf.mxu0
  %v1400 = vadd.f32 %v1386, %v1399
  %v1401 = vpop.f32.mrf.mxu0
  %v1402 = vadd.f32 %v1388, %v1401
  %1403 = vdwg.mxu0
  %1404 = vmatpush.bf16.msra.mxu0 %v967
  %1405 = vmatpush.bf16.msra.mxu0 %v963
  %1406 = vmatpush.bf16.msra.mxu0 %v959
  %1407 = vmatpush.bf16.msra.mxu0 %v955
  %1408 = vmatpush.bf16.msra.mxu0 %v951
  %1409 = vmatpush.bf16.msra.mxu0 %v947
  %1410 = vmatpush.bf16.msra.mxu0 %v943
  %1411 = vmatpush.bf16.msra.mxu0 %v939
  %1412 = vmatmul.bf16.gmra.mxu0 %v263
  %v1413 = vpop.f32.mrf.mxu0
  %v1414 = vadd.f32 %v1400, %v1413
  %v1415 = vpop.f32.mrf.mxu0
  %v1416 = vadd.f32 %v1402, %v1415
  %1417 = vdwg.mxu0
  %1418 = vmatpush.bf16.msra.mxu0 %v999
  %1419 = vmatpush.bf16.msra.mxu0 %v995
  %1420 = vmatpush.bf16.msra.mxu0 %v991
  %1421 = vmatpush.bf16.msra.mxu0 %v987
  %1422 = vmatpush.bf16.msra.mxu0 %v983
  %1423 = vmatpush.bf16.msra.mxu0 %v979
  %1424 = vmatpush.bf16.msra.mxu0 %v975
  %1425 = vmatpush.bf16.msra.mxu0 %v971
  %1426 = vmatmul.bf16.gmra.mxu0 %v264
  %v1427 = vpop.f32.mrf.mxu0
  %v1428 = vadd.f32 %v1414, %v1427
  %v1429 = vpop.f32.mrf.mxu0
  %v1430 = vadd.f32 %v1416, %v1429
  %1431 = vdwg.mxu0
  %1432 = vmatpush.bf16.msra.mxu0 %v1031
  %1433 = vmatpush.bf16.msra.mxu0 %v1027
  %1434 = vmatpush.bf16.msra.mxu0 %v1023
  %1435 = vmatpush.bf16.msra.mxu0 %v1019
  %1436 = vmatpush.bf16.msra.mxu0 %v1015
  %1437 = vmatpush.bf16.msra.mxu0 %v1011
  %1438 = vmatpush.bf16.msra.mxu0 %v1007
  %1439 = vmatpush.bf16.msra.mxu0 %v1003
  %1440 = vmatmul.bf16.gmra.mxu0 %v265
  %v1441 = vpop.f32.mrf.mxu0
  %v1442 = vadd.f32 %v1428, %v1441
  %v1443 = vpop.f32.mrf.mxu0
  %v1444 = vadd.f32 %v1430, %v1443
  %1445 = vdwg.mxu0
  %1446 = vmatpush.bf16.msra.mxu0 %v1063
  %1447 = vmatpush.bf16.msra.mxu0 %v1059
  %1448 = vmatpush.bf16.msra.mxu0 %v1055
  %1449 = vmatpush.bf16.msra.mxu0 %v1051
  %1450 = vmatpush.bf16.msra.mxu0 %v1047
  %1451 = vmatpush.bf16.msra.mxu0 %v1043
  %1452 = vmatpush.bf16.msra.mxu0 %v1039
  %1453 = vmatpush.bf16.msra.mxu0 %v1035
  %1454 = vmatmul.bf16.gmra.mxu0 %v266
  %v1455 = vpop.f32.mrf.mxu0
  %v1456 = vadd.f32 %v1442, %v1455
  %v1457 = vpop.f32.mrf.mxu0
  %v1458 = vadd.f32 %v1444, %v1457
  %1459 = vdwg.mxu0
  %1460 = vmatpush.bf16.msra.mxu0 0
  %1461 = vmatpush.bf16.msra.mxu0 0
  %1462 = vmatpush.bf16.msra.mxu0 0
  %1463 = vmatpush.bf16.msra.mxu0 0
  %1464 = vmatpush.bf16.msra.mxu0 0
  %1465 = vmatpush.bf16.msra.mxu0 0
  %1466 = vmatpush.bf16.msra.mxu0 %v1071
  %1467 = vmatpush.bf16.msra.mxu0 %v1067
  %1468 = vmatmul.bf16.gmra.mxu0 %v1276
  %v1469 = vpop.f32.mrf.mxu0
  %v1470 = vadd.f32 %v1456, %v1469
  %v1471 = vpop.f32.mrf.mxu0
  %v1472 = vadd.f32 %v1458, %v1471
  %1473 = vdwg.mxu0
  %1474 = vmatpush.bf16.msra.mxu0 %v904
  %1475 = vmatpush.bf16.msra.mxu0 %v900
  %1476 = vmatpush.bf16.msra.mxu0 %v896
  %1477 = vmatpush.bf16.msra.mxu0 %v892
  %1478 = vmatpush.bf16.msra.mxu0 %v888
  %1479 = vmatpush.bf16.msra.mxu0 %v884
  %1480 = vmatpush.bf16.msra.mxu0 %v880
  %1481 = vmatpush.bf16.msra.mxu0 %v876
  %1482 = vmatmul.bf16.gmra.mxu0 %v261
  %v1483 = vpop.f32.mrf.mxu0
  %v1484 = vadd.f32 %v233, %v1483
  %v1485 = vpop.f32.mrf.mxu0
  %v1486 = vadd.f32 %v233, %v1485
  %1487 = vdwg.mxu0
  %1488 = vmatpush.bf16.msra.mxu0 %v936
  %1489 = vmatpush.bf16.msra.mxu0 %v932
  %1490 = vmatpush.bf16.msra.mxu0 %v928
  %1491 = vmatpush.bf16.msra.mxu0 %v924
  %1492 = vmatpush.bf16.msra.mxu0 %v920
  %1493 = vmatpush.bf16.msra.mxu0 %v916
  %1494 = vmatpush.bf16.msra.mxu0 %v912
  %1495 = vmatpush.bf16.msra.mxu0 %v908
  %1496 = vmatmul.bf16.gmra.mxu0 %v262
  %v1497 = vpop.f32.mrf.mxu0
  %v1498 = vadd.f32 %v1484, %v1497
  %v1499 = vpop.f32.mrf.mxu0
  %v1500 = vadd.f32 %v1486, %v1499
  %1501 = vdwg.mxu0
  %1502 = vmatpush.bf16.msra.mxu0 %v968
  %1503 = vmatpush.bf16.msra.mxu0 %v964
  %1504 = vmatpush.bf16.msra.mxu0 %v960
  %1505 = vmatpush.bf16.msra.mxu0 %v956
  %1506 = vmatpush.bf16.msra.mxu0 %v952
  %1507 = vmatpush.bf16.msra.mxu0 %v948
  %1508 = vmatpush.bf16.msra.mxu0 %v944
  %1509 = vmatpush.bf16.msra.mxu0 %v940
  %1510 = vmatmul.bf16.gmra.mxu0 %v263
  %v1511 = vpop.f32.mrf.mxu0
  %v1512 = vadd.f32 %v1498, %v1511
  %v1513 = vpop.f32.mrf.mxu0
  %v1514 = vadd.f32 %v1500, %v1513
  %1515 = vdwg.mxu0
  %1516 = vmatpush.bf16.msra.mxu0 %v1000
  %1517 = vmatpush.bf16.msra.mxu0 %v996
  %1518 = vmatpush.bf16.msra.mxu0 %v992
  %1519 = vmatpush.bf16.msra.mxu0 %v988
  %1520 = vmatpush.bf16.msra.mxu0 %v984
  %1521 = vmatpush.bf16.msra.mxu0 %v980
  %1522 = vmatpush.bf16.msra.mxu0 %v976
  %1523 = vmatpush.bf16.msra.mxu0 %v972
  %1524 = vmatmul.bf16.gmra.mxu0 %v264
  %v1525 = vpop.f32.mrf.mxu0
  %v1526 = vadd.f32 %v1512, %v1525
  %v1527 = vpop.f32.mrf.mxu0
  %v1528 = vadd.f32 %v1514, %v1527
  %1529 = vdwg.mxu0
  %1530 = vmatpush.bf16.msra.mxu0 %v1032
  %1531 = vmatpush.bf16.msra.mxu0 %v1028
  %1532 = vmatpush.bf16.msra.mxu0 %v1024
  %1533 = vmatpush.bf16.msra.mxu0 %v1020
  %1534 = vmatpush.bf16.msra.mxu0 %v1016
  %1535 = vmatpush.bf16.msra.mxu0 %v1012
  %1536 = vmatpush.bf16.msra.mxu0 %v1008
  %1537 = vmatpush.bf16.msra.mxu0 %v1004
  %1538 = vmatmul.bf16.gmra.mxu0 %v265
  %v1539 = vpop.f32.mrf.mxu0
  %v1540 = vadd.f32 %v1526, %v1539
  %v1541 = vpop.f32.mrf.mxu0
  %v1542 = vadd.f32 %v1528, %v1541
  %1543 = vdwg.mxu0
  %1544 = vmatpush.bf16.msra.mxu0 %v1064
  %1545 = vmatpush.bf16.msra.mxu0 %v1060
  %1546 = vmatpush.bf16.msra.mxu0 %v1056
  %1547 = vmatpush.bf16.msra.mxu0 %v1052
  %1548 = vmatpush.bf16.msra.mxu0 %v1048
  %1549 = vmatpush.bf16.msra.mxu0 %v1044
  %1550 = vmatpush.bf16.msra.mxu0 %v1040
  %1551 = vmatpush.bf16.msra.mxu0 %v1036
  %1552 = vmatmul.bf16.gmra.mxu0 %v266
  %v1553 = vpop.f32.mrf.mxu0
  %v1554 = vadd.f32 %v1540, %v1553
  %v1555 = vpop.f32.mrf.mxu0
  %v1556 = vadd.f32 %v1542, %v1555
  %1557 = vdwg.mxu0
  %1558 = vmatpush.bf16.msra.mxu0 0
  %1559 = vmatpush.bf16.msra.mxu0 0
  %1560 = vmatpush.bf16.msra.mxu0 0
  %1561 = vmatpush.bf16.msra.mxu0 0
  %1562 = vmatpush.bf16.msra.mxu0 0
  %1563 = vmatpush.bf16.msra.mxu0 0
  %1564 = vmatpush.bf16.msra.mxu0 %v1072
  %1565 = vmatpush.bf16.msra.mxu0 %v1068
  %1566 = vmatmul.bf16.gmra.mxu0 %v1276
  %v1567 = vpop.f32.mrf.mxu0
  %v1568 = vadd.f32 %v1554, %v1567
  %v1569 = vpop.f32.mrf.mxu0
  %v1570 = vadd.f32 %v1556, %v1569
  %1571 = vdwg.mxu0
  %1572 = vmatpush.bf16.msra.mxu0 %v905
  %1573 = vmatpush.bf16.msra.mxu0 %v901
  %1574 = vmatpush.bf16.msra.mxu0 %v897
  %1575 = vmatpush.bf16.msra.mxu0 %v893
  %1576 = vmatpush.bf16.msra.mxu0 %v889
  %1577 = vmatpush.bf16.msra.mxu0 %v885
  %1578 = vmatpush.bf16.msra.mxu0 %v881
  %1579 = vmatpush.bf16.msra.mxu0 %v877
  %1580 = vmatmul.bf16.gmra.mxu0 %v261
  %v1581 = vpop.f32.mrf.mxu0
  %v1582 = vadd.f32 %v234, %v1581
  %v1583 = vpop.f32.mrf.mxu0
  %v1584 = vadd.f32 %v234, %v1583
  %1585 = vdwg.mxu0
  %1586 = vmatpush.bf16.msra.mxu0 %v937
  %1587 = vmatpush.bf16.msra.mxu0 %v933
  %1588 = vmatpush.bf16.msra.mxu0 %v929
  %1589 = vmatpush.bf16.msra.mxu0 %v925
  %1590 = vmatpush.bf16.msra.mxu0 %v921
  %1591 = vmatpush.bf16.msra.mxu0 %v917
  %1592 = vmatpush.bf16.msra.mxu0 %v913
  %1593 = vmatpush.bf16.msra.mxu0 %v909
  %1594 = vmatmul.bf16.gmra.mxu0 %v262
  %v1595 = vpop.f32.mrf.mxu0
  %v1596 = vadd.f32 %v1582, %v1595
  %v1597 = vpop.f32.mrf.mxu0
  %v1598 = vadd.f32 %v1584, %v1597
  %1599 = vdwg.mxu0
  %1600 = vmatpush.bf16.msra.mxu0 %v969
  %1601 = vmatpush.bf16.msra.mxu0 %v965
  %1602 = vmatpush.bf16.msra.mxu0 %v961
  %1603 = vmatpush.bf16.msra.mxu0 %v957
  %1604 = vmatpush.bf16.msra.mxu0 %v953
  %1605 = vmatpush.bf16.msra.mxu0 %v949
  %1606 = vmatpush.bf16.msra.mxu0 %v945
  %1607 = vmatpush.bf16.msra.mxu0 %v941
  %1608 = vmatmul.bf16.gmra.mxu0 %v263
  %v1609 = vpop.f32.mrf.mxu0
  %v1610 = vadd.f32 %v1596, %v1609
  %v1611 = vpop.f32.mrf.mxu0
  %v1612 = vadd.f32 %v1598, %v1611
  %1613 = vdwg.mxu0
  %1614 = vmatpush.bf16.msra.mxu0 %v1001
  %1615 = vmatpush.bf16.msra.mxu0 %v997
  %1616 = vmatpush.bf16.msra.mxu0 %v993
  %1617 = vmatpush.bf16.msra.mxu0 %v989
  %1618 = vmatpush.bf16.msra.mxu0 %v985
  %1619 = vmatpush.bf16.msra.mxu0 %v981
  %1620 = vmatpush.bf16.msra.mxu0 %v977
  %1621 = vmatpush.bf16.msra.mxu0 %v973
  %1622 = vmatmul.bf16.gmra.mxu0 %v264
  %v1623 = vpop.f32.mrf.mxu0
  %v1624 = vadd.f32 %v1610, %v1623
  %v1625 = vpop.f32.mrf.mxu0
  %v1626 = vadd.f32 %v1612, %v1625
  %1627 = vdwg.mxu0
  %1628 = vmatpush.bf16.msra.mxu0 %v1033
  %1629 = vmatpush.bf16.msra.mxu0 %v1029
  %1630 = vmatpush.bf16.msra.mxu0 %v1025
  %1631 = vmatpush.bf16.msra.mxu0 %v1021
  %1632 = vmatpush.bf16.msra.mxu0 %v1017
  %1633 = vmatpush.bf16.msra.mxu0 %v1013
  %1634 = vmatpush.bf16.msra.mxu0 %v1009
  %1635 = vmatpush.bf16.msra.mxu0 %v1005
  %1636 = vmatmul.bf16.gmra.mxu0 %v265
  %v1637 = vpop.f32.mrf.mxu0
  %v1638 = vadd.f32 %v1624, %v1637
  %v1639 = vpop.f32.mrf.mxu0
  %v1640 = vadd.f32 %v1626, %v1639
  %1641 = vdwg.mxu0
  %1642 = vmatpush.bf16.msra.mxu0 %v1065
  %1643 = vmatpush.bf16.msra.mxu0 %v1061
  %1644 = vmatpush.bf16.msra.mxu0 %v1057
  %1645 = vmatpush.bf16.msra.mxu0 %v1053
  %1646 = vmatpush.bf16.msra.mxu0 %v1049
  %1647 = vmatpush.bf16.msra.mxu0 %v1045
  %1648 = vmatpush.bf16.msra.mxu0 %v1041
  %1649 = vmatpush.bf16.msra.mxu0 %v1037
  %1650 = vmatmul.bf16.gmra.mxu0 %v266
  %v1651 = vpop.f32.mrf.mxu0
  %v1652 = vadd.f32 %v1638, %v1651
  %v1653 = vpop.f32.mrf.mxu0
  %v1654 = vadd.f32 %v1640, %v1653
  %1655 = vdwg.mxu0
  %1656 = vmatpush.bf16.msra.mxu0 0
  %1657 = vmatpush.bf16.msra.mxu0 0
  %1658 = vmatpush.bf16.msra.mxu0 0
  %1659 = vmatpush.bf16.msra.mxu0 0
  %1660 = vmatpush.bf16.msra.mxu0 0
  %1661 = vmatpush.bf16.msra.mxu0 0
  %1662 = vmatpush.bf16.msra.mxu0 %v1073
  %1663 = vmatpush.bf16.msra.mxu0 %v1069
  %1664 = vmatmul.bf16.gmra.mxu0 %v1276
  %v1665 = vpop.f32.mrf.mxu0
  %v1666 = vadd.f32 %v1652, %v1665
  %v1667 = vpop.f32.mrf.mxu0
  %v1668 = vadd.f32 %v1654, %v1667
  %1669 = vdwg.mxu0
  %v1670 = vmax.f32 %v1372, 0.0
  %v1671 = vmax.f32 %v1470, 0.0
  %v1672 = vmax.f32 %v1568, 0.0
  %v1673 = vmax.f32 %v1666, 0.0
  %v1674 = vmax.f32 %v1374, 0.0
  %v1675 = vmax.f32 %v1472, 0.0
  %v1676 = vmax.f32 %v1570, 0.0
  %v1677 = vmax.f32 %v1668, 0.0
  %v1678 = vpack.c.bf16 %v1674, %v1670
  %v1679 = vpack.c.bf16 %v1675, %v1671
  %v1680 = vpack.c.bf16 %v1676, %v1672
  %v1681 = vpack.c.bf16 %v1677, %v1673
  %v1682 = vld [vmem:[%s3] sm:$0xf]
  %v1683 = vld [vmem:[%s3 + $0x4] sm:$0xf]
  %v1684 = vld [vmem:[%s3 + $0x8] sm:$0xf]
  %v1685 = vld [vmem:[%s3 + $0xc] sm:$0xf]
  %v1686 = vld [vmem:[%s3 + $0x10] sm:$0xf]
  %v1687 = vld [vmem:[%s3 + $0x14] sm:$0xf]
  %v1688 = vld [vmem:[%s3 + $0x18] sm:$0xf]
  %v1689 = vld [vmem:[%s3 + $0x1c] sm:$0xf]
  %v1690 = vld [vmem:[%s3 + $0x20] sm:$0xf]
  %v1691 = vld [vmem:[%s3 + $0x24] sm:$0xf]
  %v1692 = vld [vmem:[%s3 + $0x28] sm:$0xf]
  %v1693 = vld [vmem:[%s3 + $0x2c] sm:$0xf]
  %v1694 = vld [vmem:[%s3 + $0x30] sm:$0xf]
  %v1695 = vld [vmem:[%s3 + $0x34] sm:$0xf]
  %v1696 = vld [vmem:[%s3 + $0x38] sm:$0xf]
  %v1697 = vld [vmem:[%s3 + $0x3c] sm:$0xf]
  %v1698 = vld [vmem:[%s3 + $0x40] sm:$0xf]
  %v1699 = vld [vmem:[%s3 + $0x44] sm:$0xf]
  %v1700 = vld [vmem:[%s3 + $0x48] sm:$0xf]
  %v1701 = vld [vmem:[%s3 + $0x4c] sm:$0xf]
  %v1702 = vld [vmem:[%s3 + $0x50] sm:$0xf]
  %v1703 = vld [vmem:[%s3 + $0x54] sm:$0xf]
  %v1704 = vld [vmem:[%s3 + $0x58] sm:$0xf]
  %v1705 = vld [vmem:[%s3 + $0x5c] sm:$0xf]
  %v1706 = vld [vmem:[%s3 + $0x60] sm:$0xf]
  %v1707 = vld [vmem:[%s3 + $0x64] sm:$0xf]
  %v1708 = vld [vmem:[%s3 + $0x68] sm:$0xf]
  %v1709 = vld [vmem:[%s3 + $0x6c] sm:$0xf]
  %v1710 = vld [vmem:[%s3 + $0x70] sm:$0xf]
  %v1711 = vld [vmem:[%s3 + $0x74] sm:$0xf]
  %v1712 = vld [vmem:[%s3 + $0x78] sm:$0xf]
  %v1713 = vld [vmem:[%s3 + $0x7c] sm:$0xf]
  %v1714 = vld [vmem:[%s3 + $0x80] sm:$0xf]
  %v1715 = vld [vmem:[%s3 + $0x84] sm:$0xf]
  %v1716 = vld [vmem:[%s3 + $0x88] sm:$0xf]
  %v1717 = vld [vmem:[%s3 + $0x8c] sm:$0xf]
  %v1718 = vld [vmem:[%s3 + $0x90] sm:$0xf]
  %v1719 = vld [vmem:[%s3 + $0x94] sm:$0xf]
  %v1720 = vld [vmem:[%s3 + $0x98] sm:$0xf]
  %v1721 = vld [vmem:[%s3 + $0x9c] sm:$0xf]
  %v1722 = vld [vmem:[%s3 + $0xa0] sm:$0xf]
  %v1723 = vld [vmem:[%s3 + $0xa4] sm:$0xf]
  %v1724 = vld [vmem:[%s3 + $0xa8] sm:$0xf]
  %v1725 = vld [vmem:[%s3 + $0xac] sm:$0xf]
  %v1726 = vld [vmem:[%s3 + $0xb0] sm:$0xf]
  %v1727 = vld [vmem:[%s3 + $0xb4] sm:$0xf]
  %v1728 = vld [vmem:[%s3 + $0xb8] sm:$0xf]
  %v1729 = vld [vmem:[%s3 + $0xbc] sm:$0xf]
  %v1730 = vld [vmem:[%s3 + $0xc0] sm:$0xf]
  %v1731 = vld [vmem:[%s3 + $0xc4] sm:$0xf]
  %v1732 = vld [vmem:[%s3 + $0xc8] sm:$0xf]
  %v1733 = vld [vmem:[%s3 + $0xcc] sm:$0xf]
  %v1734 = vld [vmem:[%s3 + $0xd0] sm:$0xf]
  %v1735 = vld [vmem:[%s3 + $0xd4] sm:$0xf]
  %v1736 = vld [vmem:[%s3 + $0xd8] sm:$0xf]
  %v1737 = vld [vmem:[%s3 + $0xdc] sm:$0xf]
  %v1738 = vld [vmem:[%s3 + $0xe0] sm:$0xf]
  %v1739 = vld [vmem:[%s3 + $0xe4] sm:$0xf]
  %v1740 = vld [vmem:[%s3 + $0xe8] sm:$0xf]
  %v1741 = vld [vmem:[%s3 + $0xec] sm:$0xf]
  %v1742 = vld [vmem:[%s3 + $0xf0] sm:$0xf]
  %v1743 = vld [vmem:[%s3 + $0xf4] sm:$0xf]
  %v1744 = vld [vmem:[%s3 + $0xf8] sm:$0xf]
  %v1745 = vld [vmem:[%s3 + $0xfc] sm:$0xf]
  %v1746 = vld [vmem:[%s4] sm:$0x1]
  %v1748 = vperm.slane %v1746, 0
  %v1814 = vunpack.c.l.b16 %v1682
  %v1815 = vunpack.c.l.b16 %v1683
  %v1816 = vunpack.c.l.b16 %v1684
  %v1817 = vunpack.c.l.b16 %v1685
  %v1818 = vunpack.c.l.b16 %v1686
  %v1819 = vunpack.c.l.b16 %v1687
  %v1820 = vunpack.c.l.b16 %v1688
  %v1821 = vunpack.c.l.b16 %v1689
  %v1822 = vunpack.c.l.b16 %v1690
  %v1823 = vunpack.c.l.b16 %v1691
  %v1824 = vunpack.c.l.b16 %v1692
  %v1825 = vunpack.c.l.b16 %v1693
  %v1826 = vunpack.c.l.b16 %v1694
  %v1827 = vunpack.c.l.b16 %v1695
  %v1828 = vunpack.c.l.b16 %v1696
  %v1829 = vunpack.c.l.b16 %v1697
  %v1830 = vunpack.c.l.b16 %v1698
  %v1831 = vunpack.c.l.b16 %v1699
  %v1832 = vunpack.c.l.b16 %v1700
  %v1833 = vunpack.c.l.b16 %v1701
  %v1834 = vunpack.c.l.b16 %v1702
  %v1835 = vunpack.c.l.b16 %v1703
  %v1836 = vunpack.c.l.b16 %v1704
  %v1837 = vunpack.c.l.b16 %v1705
  %v1838 = vunpack.c.l.b16 %v1706
  %v1839 = vunpack.c.l.b16 %v1707
  %v1840 = vunpack.c.l.b16 %v1708
  %v1841 = vunpack.c.l.b16 %v1709
  %v1842 = vunpack.c.l.b16 %v1710
  %v1843 = vunpack.c.l.b16 %v1711
  %v1844 = vunpack.c.l.b16 %v1712
  %v1845 = vunpack.c.l.b16 %v1713
  %v1846 = vunpack.c.l.b16 %v1714
  %v1847 = vunpack.c.l.b16 %v1715
  %v1848 = vunpack.c.l.b16 %v1716
  %v1849 = vunpack.c.l.b16 %v1717
  %v1850 = vunpack.c.l.b16 %v1718
  %v1851 = vunpack.c.l.b16 %v1719
  %v1852 = vunpack.c.l.b16 %v1720
  %v1853 = vunpack.c.l.b16 %v1721
  %v1854 = vunpack.c.l.b16 %v1722
  %v1855 = vunpack.c.l.b16 %v1723
  %v1856 = vunpack.c.l.b16 %v1724
  %v1857 = vunpack.c.l.b16 %v1725
  %v1858 = vunpack.c.l.b16 %v1726
  %v1859 = vunpack.c.l.b16 %v1727
  %v1860 = vunpack.c.l.b16 %v1728
  %v1861 = vunpack.c.l.b16 %v1729
  %v1862 = vunpack.c.l.b16 %v1730
  %v1863 = vunpack.c.l.b16 %v1731
  %v1864 = vunpack.c.l.b16 %v1732
  %v1865 = vunpack.c.l.b16 %v1733
  %v1866 = vunpack.c.l.b16 %v1734
  %v1867 = vunpack.c.l.b16 %v1735
  %v1868 = vunpack.c.l.b16 %v1736
  %v1869 = vunpack.c.l.b16 %v1737
  %v1870 = vunpack.c.l.b16 %v1738
  %v1871 = vunpack.c.l.b16 %v1739
  %v1872 = vunpack.c.l.b16 %v1740
  %v1873 = vunpack.c.l.b16 %v1741
  %v1874 = vunpack.c.l.b16 %v1742
  %v1875 = vunpack.c.l.b16 %v1743
  %v1876 = vunpack.c.l.b16 %v1744
  %v1877 = vunpack.c.l.b16 %v1745
  %v1878 = vpack.c.b16 %v1815, %v1814
  %v1879 = vpack.c.b16 %v1817, %v1816
  %v1880 = vpack.c.b16 %v1819, %v1818
  %v1881 = vpack.c.b16 %v1821, %v1820
  %v1882 = vpack.c.b16 %v1823, %v1822
  %v1883 = vpack.c.b16 %v1825, %v1824
  %v1884 = vpack.c.b16 %v1827, %v1826
  %v1885 = vpack.c.b16 %v1829, %v1828
  %v1886 = vpack.c.b16 %v1831, %v1830
  %v1887 = vpack.c.b16 %v1833, %v1832
  %v1888 = vpack.c.b16 %v1835, %v1834
  %v1889 = vpack.c.b16 %v1837, %v1836
  %v1890 = vpack.c.b16 %v1839, %v1838
  %v1891 = vpack.c.b16 %v1841, %v1840
  %v1892 = vpack.c.b16 %v1843, %v1842
  %v1893 = vpack.c.b16 %v1845, %v1844
  %v1894 = vpack.c.b16 %v1847, %v1846
  %v1895 = vpack.c.b16 %v1849, %v1848
  %v1896 = vpack.c.b16 %v1851, %v1850
  %v1897 = vpack.c.b16 %v1853, %v1852
  %v1898 = vpack.c.b16 %v1855, %v1854
  %v1899 = vpack.c.b16 %v1857, %v1856
  %v1900 = vpack.c.b16 %v1859, %v1858
  %v1901 = vpack.c.b16 %v1861, %v1860
  %v1902 = vpack.c.b16 %v1863, %v1862
  %v1903 = vpack.c.b16 %v1865, %v1864
  %v1904 = vpack.c.b16 %v1867, %v1866
  %v1905 = vpack.c.b16 %v1869, %v1868
  %v1906 = vpack.c.b16 %v1871, %v1870
  %v1907 = vpack.c.b16 %v1873, %v1872
  %v1908 = vpack.c.b16 %v1875, %v1874
  %v1909 = vpack.c.b16 %v1877, %v1876
  %1942 = vmatpush.bf16.msra.mxu0 %v1885
  %1943 = vmatpush.bf16.msra.mxu0 %v1884
  %1944 = vmatpush.bf16.msra.mxu0 %v1883
  %1945 = vmatpush.bf16.msra.mxu0 %v1882
  %1946 = vmatpush.bf16.msra.mxu0 %v1881
  %1947 = vmatpush.bf16.msra.mxu0 %v1880
  %1948 = vmatpush.bf16.msra.mxu0 %v1879
  %1949 = vmatpush.bf16.msra.mxu0 %v1878
  %1950 = vmatmul.bf16.gmra.mxu0 %v1678
  %v1951 = vpop.f32.mrf.mxu0
  %v1952 = vadd.f32 %v1748, %v1951
  %v1953 = vpop.f32.mrf.mxu0
  %v1954 = vadd.f32 %v1748, %v1953
  %1955 = vdwg.mxu0
  %1956 = vmatpush.bf16.msra.mxu0 %v1893
  %1957 = vmatpush.bf16.msra.mxu0 %v1892
  %1958 = vmatpush.bf16.msra.mxu0 %v1891
  %1959 = vmatpush.bf16.msra.mxu0 %v1890
  %1960 = vmatpush.bf16.msra.mxu0 %v1889
  %1961 = vmatpush.bf16.msra.mxu0 %v1888
  %1962 = vmatpush.bf16.msra.mxu0 %v1887
  %1963 = vmatpush.bf16.msra.mxu0 %v1886
  %1964 = vmatmul.bf16.gmra.mxu0 %v1679
  %v1965 = vpop.f32.mrf.mxu0
  %v1966 = vadd.f32 %v1952, %v1965
  %v1967 = vpop.f32.mrf.mxu0
  %v1968 = vadd.f32 %v1954, %v1967
  %1969 = vdwg.mxu0
  %1970 = vmatpush.bf16.msra.mxu0 %v1901
  %1971 = vmatpush.bf16.msra.mxu0 %v1900
  %1972 = vmatpush.bf16.msra.mxu0 %v1899
  %1973 = vmatpush.bf16.msra.mxu0 %v1898
  %1974 = vmatpush.bf16.msra.mxu0 %v1897
  %1975 = vmatpush.bf16.msra.mxu0 %v1896
  %1976 = vmatpush.bf16.msra.mxu0 %v1895
  %1977 = vmatpush.bf16.msra.mxu0 %v1894
  %1978 = vmatmul.bf16.gmra.mxu0 %v1680
  %v1979 = vpop.f32.mrf.mxu0
  %v1980 = vadd.f32 %v1966, %v1979
  %v1981 = vpop.f32.mrf.mxu0
  %v1982 = vadd.f32 %v1968, %v1981
  %1983 = vdwg.mxu0
  %1984 = vmatpush.bf16.msra.mxu0 %v1909
  %1985 = vmatpush.bf16.msra.mxu0 %v1908
  %1986 = vmatpush.bf16.msra.mxu0 %v1907
  %1987 = vmatpush.bf16.msra.mxu0 %v1906
  %1988 = vmatpush.bf16.msra.mxu0 %v1905
  %1989 = vmatpush.bf16.msra.mxu0 %v1904
  %1990 = vmatpush.bf16.msra.mxu0 %v1903
  %1991 = vmatpush.bf16.msra.mxu0 %v1902
  %1992 = vmatmul.bf16.gmra.mxu0 %v1681
  %v1993 = vpop.f32.mrf.mxu0
  %v1994 = vadd.f32 %v1980, %v1993
  %v1995 = vpop.f32.mrf.mxu0
  %v1996 = vadd.f32 %v1982, %v1995
  %1997 = vdwg.mxu0
  %v1998 = vlaneseq
  %v1999 = vand.u32 %v1998, 127
  %vm2000 = vcmp.lt.s32.totalorder %v1999, 10
  %v2001 = vsel %vm2000, %v1994, -1e+30
  %v2002 = vsel %vm2000, %v1996, -1e+30
  %2003 = vmax.xlane.f32.xlu0 %v2001
  %v2004 = vpop.xlane.xlu0 %2003
  %2005 = vmax.xlane.f32.xlu0 %v2002
  %v2006 = vpop.xlane.xlu0 %2005
  %v2007 = vsub.f32 %v2001, %v2004
  %v2008 = vsub.f32 %v2002, %v2006
  %v2009 = vmul.f32 %v2007, 1.442695
  %v2010 = vpow.pop %v2009
  %v2011 = vmul.f32 %v2008, 1.442695
  %v2012 = vpow.pop %v2011
  %2013 = vadd.xlane.f32.xlu0 %v2010
  %v2014 = vpop.xlane.xlu0 %2013
  %2015 = vadd.xlane.f32.xlu0 %v2012
  %v2016 = vpop.xlane.xlu0 %2015
  %v2017 = vlog2.pop %v2014
  %v2018 = vmul.f32 %v2017, 0.6931472
  %v2019 = vlog2.pop %v2016
  %v2020 = vmul.f32 %v2019, 0.6931472
  %v2021 = vsub.f32 %v2007, %v2018
  %v2022 = vsub.f32 %v2008, %v2020
  %2023 = vst [vmem:[%s5] sm:$0xff] %v2021
  %2024 = vst [vmem:[%s5 + $0x8] sm:$0xff] %v2022
  // Predicated region
  $region22: #{net_forward.5} parent=0 // pred_check
    _
  $region23: #{net_forward.5} parent=0 // pred_check_branch
    %2026 = sbr.rel (0) target = $region25
  $region24: #{net_forward.5} parent=0 // pred_region
    _
  $region25: #{net_forward.5} parent=0 // pred_fallthru
    _
  // Predicated region
  $region26: #{net_forward.5} parent=0 // pred_check
    _
  $region27: #{net_forward.5} parent=0 // pred_check_branch
    %2028 = sbr.rel (0) target = $region29
  $region28: #{net_forward.5} parent=0 // pred_region
    _
  $region29: #{net_forward.5} parent=0 // pred_fallthru
    _

</llo_original>
